<compile_context>
chip_gen: v5e
topology: v5e:2x2
jax: 0.10.0
libtpu: 0.0.40
codegen_flags: <defaults>
</compile_context>

<pallas_src>
import numpy as np

import jax
import jax.numpy as jnp
from jax.experimental import pallas as pl
from jax.experimental.pallas import tpu as pltpu

EPS = 1e-5
CIN_PAD = 8                      # first conv: input channels padded 3 -> 8

_CONV3_ORDER = ('c1a', 'c1b', 'c3a', 'c3b', 'c3c', 'c5a', 'c5b', 'c5c')
_CONV1_ORDER = ('c2', 'res1', 'c4', 'res2', 'fc')
_BN_ORDER = ('bn1a', 'bn1b', 'bn3a', 'bn3b', 'bn4', 'bn5a', 'bn5b', 'bn6')


# ----------------------------- parameter packing -----------------------------
def _pack_params(params):
    """Pack all weights into 3 slabs: (208,288) 3x3, (106,32) 1x1, (32,19) vecs."""
    # 3x3 conv weights as (Cout, 9*Cin) row blocks (8-aligned row offsets).
    blocks3, offs3, r, k_max = [], {}, 0, 0
    for name in _CONV3_ORDER:
        w = params[name][0].astype(jnp.float32)          # (3, 3, Cin, Cout)
        cin, cout = w.shape[2], w.shape[3]
        if name == 'c1a':                                # pad Cin 3 -> 8
            w = jnp.pad(w, ((0, 0), (0, 0), (0, CIN_PAD - cin), (0, 0)))
            cin = CIN_PAD
        wp = jnp.transpose(w.reshape(9 * cin, cout))     # (Cout, 9*Cin)
        offs3[name] = (r, cout, 9 * cin)
        blocks3.append(wp)
        k_max = max(k_max, 9 * cin)
        r += cout
    w3 = jnp.concatenate(
        [jnp.pad(b, ((0, 0), (0, k_max - b.shape[1]))) for b in blocks3], axis=0)

    # 1x1 conv weights as (Cout, Cin) row blocks.
    blocks1, offs1, r = [], {}, 0
    cin_max = max(params[n][0].shape[2] for n in _CONV1_ORDER)
    for name in _CONV1_ORDER:
        w = params[name][0].astype(jnp.float32)          # (1, 1, Cin, Cout)
        cin, cout = w.shape[2], w.shape[3]
        wp = jnp.transpose(w[0, 0])                      # (Cout, Cin)
        offs1[name] = (r, cout, cin)
        blocks1.append(jnp.pad(wp, ((0, 0), (0, cin_max - cin))))
        r += cout
    w1 = jnp.concatenate(blocks1, axis=0)

    # Per-channel vectors (BN gamma/beta + surviving conv biases) as columns.
    cols, vcols = [], {}

    def add(key, v):
        vcols[key] = len(cols)
        cols.append(jnp.pad(v.astype(jnp.float32), (0, 32 - v.shape[0])))

    for name in _BN_ORDER:
        g, b = params[name]
        add(name + '_g', g)
        add(name + '_b', b)
    add('c2_b', params['c2'][1])
    add('c4_b', params['c4'][1])
    add('fc_b', params['fc'][1])
    vecs = jnp.stack(cols, axis=1)                       # (32, 19)
    return w3, w1, vecs, offs3, offs1, vcols


# ------------------------- hoisted static constants --------------------------
def _make_consts(n, h0, w0):
    """Boundary masks, pool-subsample and global-avg-pool matrices (numpy)."""
    def masks(h, w):
        r = np.arange(n * h * w)
        y, x = (r // w) % h, r % w
        rows = []
        for dy in (-1, 0, 1):
            for dx in (-1, 0, 1):
                ok = (y + dy >= 0) & (y + dy < h) & (x + dx >= 0) & (x + dx < w)
                rows.append(ok.astype(np.float32))
        return np.stack(rows, axis=0)                    # (9, n*h*w)

    def pick(h, w):
        ho, wo = h // 2, w // 2
        p = np.zeros((n * h * w, n * ho * wo), np.float32)
        mo = np.arange(n * ho * wo)
        src = (mo // (ho * wo)) * h * w + 2 * ((mo // wo) % ho) * w + 2 * (mo % wo)
        p[src, mo] = 1.0
        return p

    mask_pack = np.concatenate(
        [masks(h0, w0), masks(h0 // 2, w0 // 2), masks(h0 // 4, w0 // 4)], axis=1)
    hw2 = (h0 // 4) * (w0 // 4)
    avg = np.zeros((n * hw2, n), np.float32)
    m = np.arange(n * hw2)
    avg[m, m // hw2] = 1.0 / hw2
    return mask_pack, pick(h0, w0), pick(h0 // 2, w0 // 2), avg


# ----------------------------- fused forward kernel --------------------------
def _build_kernel(n, h0, w0, offs3, offs1, vcols):
    m0 = n * h0 * w0
    mask_col = {h0: 0, h0 // 2: m0, h0 // 4: m0 + m0 // 4}

    def kernel(x_ref, w3_ref, w1_ref, vec_ref, mask_ref, pick0_ref, pick1_ref,
               avg_ref, o_ref):

        def vec(key, c):
            j = vcols[key]
            return vec_ref[0:c, j:j + 1]                 # (C, 1) column

        def shift_lanes(x, off):
            # y[:, r] = x[:, (r + off) % M]; wrap-around removed by the masks.
            m = x.shape[1]
            p = off % m
            if p == 0:
                return x
            if m % 128 == 0:                             # XLU lane rotate
                return pltpu.roll(x, m - p, axis=1)
            return jnp.concatenate([x[:, p:], x[:, :p]], axis=1)

        def conv3(x, name, h, w):
            cin, m = x.shape
            r0, cout, k = offs3[name]
            mc = mask_col[h]
            taps = []
            for t in range(9):
                off = (t // 3 - 1) * w + (t % 3 - 1)
                xt = shift_lanes(x, off)
                if t != 4:                               # centre tap: no mask
                    xt = xt * mask_ref[t:t + 1, mc:mc + m]
                taps.append(xt)
            stacked = jnp.concatenate(taps, axis=0)      # (9*Cin, M)
            wk = w3_ref[r0:r0 + cout, 0:k]               # (Cout, 9*Cin)
            return jnp.dot(wk, stacked, preferred_element_type=jnp.float32)

        def conv1(x, name, bias_key=None):
            cin = x.shape[0]
            r0, cout, _ = offs1[name]
            y = jnp.dot(w1_ref[r0:r0 + cout, 0:cin], x,
                        preferred_element_type=jnp.float32)
            if bias_key is not None:
                y = y + vec(bias_key, cout)
            return y

        def bn_relu(x, name):
            c = x.shape[0]
            mean = jnp.mean(x, axis=1, keepdims=True)
            xc = x - mean
            var = jnp.mean(xc * xc, axis=1, keepdims=True)
            y = xc * (jax.lax.rsqrt(var + EPS) * vec(name + '_g', c)) + \
                vec(name + '_b', c)
            return jnp.maximum(y, 0.0)

        def maxpool(x, w, pick_ref):
            m = jnp.maximum(x, shift_lanes(x, 1))
            m = jnp.maximum(m, jnp.maximum(shift_lanes(x, w),
                                           shift_lanes(x, w + 1)))
            return jnp.dot(m, pick_ref[...], preferred_element_type=jnp.float32)

        h, w = h0, w0
        x = x_ref[...]                                   # (8, N*H*W), ch 3..7 = 0

        # Conv1: two 3x3 + BN + ReLU (conv biases cancel in batch-stat BN).
        x = bn_relu(conv3(x, 'c1a', h, w), 'bn1a')
        x = bn_relu(conv3(x, 'c1b', h, w), 'bn1b')
        # conv2: 1x1 (+bias) + maxpool 2x2.
        x = maxpool(conv1(x, 'c2', 'c2_b'), w, pick0_ref)
        h, w = h // 2, w // 2

        # Conv3 + res1 (1x1); both biases cancel in bn4.
        y = bn_relu(conv3(x, 'c3a', h, w), 'bn3a')
        y = bn_relu(conv3(y, 'c3b', h, w), 'bn3b')
        y = conv3(y, 'c3c', h, w)
        x = y + conv1(x, 'res1')
        # conv4: BN + ReLU + 1x1 (+bias) + maxpool.
        x = bn_relu(x, 'bn4')
        x = maxpool(conv1(x, 'c4', 'c4_b'), w, pick1_ref)
        h, w = h // 2, w // 2

        # Conv5 + res2; biases cancel in bn6.
        y = bn_relu(conv3(x, 'c5a', h, w), 'bn5a')
        y = bn_relu(conv3(y, 'c5b', h, w), 'bn5b')
        y = conv3(y, 'c5c', h, w)
        x = y + conv1(x, 'res2')

        # Head: BN + ReLU, global-avg-pool (matmul with hoisted matrix), FC,
        # log_softmax.  Result is produced as (10, N); the wrapper transposes.
        x = bn_relu(x, 'bn6')
        gap = jnp.dot(x, avg_ref[...], preferred_element_type=jnp.float32)  # (32, N)
        r0, cout, cin = offs1['fc']
        logits = jnp.dot(w1_ref[r0:r0 + cout, 0:cin], gap,
                         preferred_element_type=jnp.float32) + vec('fc_b', cout)
        mx = jnp.max(logits, axis=0, keepdims=True)
        lse = jnp.log(jnp.sum(jnp.exp(logits - mx), axis=0, keepdims=True)) + mx
        o_ref[...] = logits - lse                        # (10, N)

    return kernel


# -------------------------------- forward ------------------------------------
def net1_forward(params, x_nchw):
    n, cin, h, w = x_nchw.shape
    assert cin == 3 and h % 4 == 0 and w % 4 == 0
    # NCHW -> lane-dense (C, N*H*W): channels on sublanes, flat spatial on lanes.
    x = jnp.transpose(x_nchw.astype(jnp.float32), (1, 0, 2, 3)).reshape(cin, n * h * w)
    x = jnp.pad(x, ((0, CIN_PAD - cin), (0, 0)))

    w3, w1, vecs, offs3, offs1, vcols = _pack_params(params)
    masks, pick0, pick1, avg = _make_consts(n, h, w)     # trace-time numpy
    kernel = _build_kernel(n, h, w, offs3, offs1, vcols)

    out = pl.pallas_call(
        kernel,
        out_shape=jax.ShapeDtypeStruct((10, n), jnp.float32),
    )(x, w3, w1, vecs,
      jnp.asarray(masks), jnp.asarray(pick0), jnp.asarray(pick1), jnp.asarray(avg))
    return jnp.transpose(out)                            # (N, 10)


# ------------------------------ parameters -----------------------------------
def init_params(key):
    keys = iter(jax.random.split(key, 64))

    def conv_p(cin, cout, k):
        fan_in = cin * k * k
        w = jax.random.normal(next(keys), (k, k, cin, cout),
                              jnp.float32) / jnp.sqrt(float(fan_in))
        b = 0.01 * jax.random.normal(next(keys), (cout,), jnp.float32)
        return w, b

    def bn_p(c):
        g = 1.0 + 0.1 * jax.random.normal(next(keys), (c,), jnp.float32)
        b = 0.1 * jax.random.normal(next(keys), (c,), jnp.float32)
        return g, b

    p = {}
    p['c1a'] = conv_p(3, 16, 3);  p['bn1a'] = bn_p(16)
    p['c1b'] = conv_p(16, 32, 3); p['bn1b'] = bn_p(32)
    p['c2'] = conv_p(32, 16, 1)
    p['c3a'] = conv_p(16, 16, 3); p['bn3a'] = bn_p(16)
    p['c3b'] = conv_p(16, 32, 3); p['bn3b'] = bn_p(32)
    p['c3c'] = conv_p(32, 32, 3)
    p['res1'] = conv_p(16, 32, 1)
    p['bn4'] = bn_p(32)
    p['c4'] = conv_p(32, 16, 1)
    p['c5a'] = conv_p(16, 16, 3); p['bn5a'] = bn_p(16)
    p['c5b'] = conv_p(16, 32, 3); p['bn5b'] = bn_p(32)
    p['c5c'] = conv_p(32, 32, 3)
    p['res2'] = conv_p(16, 32, 1)
    p['bn6'] = bn_p(32)
    p['fc'] = conv_p(32, 10, 1)
    return p


# ---------------------- pure-JAX reference (for validation) ------------------
def _ref_forward(params, x_nchw):
    p = params
    x = jnp.transpose(x_nchw.astype(jnp.float32), (0, 2, 3, 1))

    def conv3(x, wb):
        w, b = wb
        N, H, W, Cin = x.shape
        xp = jnp.pad(x, ((0, 0), (1, 1), (1, 1), (0, 0)))
        out = jnp.zeros(x.shape[:3] + (w.shape[-1],), jnp.float32)
        for dy in range(3):
            for dx in range(3):
                out = out + jnp.einsum('nhwc,cd->nhwd',
                                       xp[:, dy:dy + H, dx:dx + W, :],
                                       w[dy, dx])
        return out + b

    def conv1(x, wb):
        w, b = wb
        return jnp.einsum('nhwc,cd->nhwd', x, w[0, 0]) + b

    def bn_relu(x, gb):
        g, b = gb
        mean = jnp.mean(x, axis=(0, 1, 2), keepdims=True)
        var = jnp.mean(jnp.square(x - mean), axis=(0, 1, 2), keepdims=True)
        return jnp.maximum((x - mean) * jax.lax.rsqrt(var + EPS) * g + b, 0.0)

    def maxpool(x):
        N, H, W, C = x.shape
        return jnp.max(x.reshape(N, H // 2, 2, W // 2, 2, C), axis=(2, 4))

    x = bn_relu(conv3(x, p['c1a']), p['bn1a'])
    x = bn_relu(conv3(x, p['c1b']), p['bn1b'])
    x = maxpool(conv1(x, p['c2']))
    y = bn_relu(conv3(x, p['c3a']), p['bn3a'])
    y = bn_relu(conv3(y, p['c3b']), p['bn3b'])
    y = conv3(y, p['c3c'])
    x = y + conv1(x, p['res1'])
    x = bn_relu(x, p['bn4'])
    x = maxpool(conv1(x, p['c4']))
    y = bn_relu(conv3(x, p['c5a']), p['bn5a'])
    y = bn_relu(conv3(y, p['c5b']), p['bn5b'])
    y = conv3(y, p['c5c'])
    x = y + conv1(x, p['res2'])
    x = bn_relu(x, p['bn6'])
    x = jnp.mean(x, axis=(1, 2))                         # (N, 32)
    x = x @ p['fc'][0][0, 0] + p['fc'][1]                # (N, 10)
    return jax.nn.log_softmax(x, axis=-1)


if __name__ == "__main__":
    key = jax.random.PRNGKey(0)
    pkey, xkey = jax.random.split(key)
    params = init_params(pkey)
    x = jax.random.normal(xkey, (2, 3, 16, 16), jnp.float32)

    out = jax.block_until_ready(jax.jit(net1_forward)(params, x))

    assert out.shape == (2, 10), out.shape
    assert bool(jnp.all(jnp.isfinite(out)))
    # rows of log_softmax exponentiate to ~1
    assert bool(jnp.allclose(jnp.sum(jnp.exp(out), axis=1), 1.0, atol=1e-4))

    # cross-check against a pure-JAX reference of the same forward pass
    ref = jax.block_until_ready(jax.jit(_ref_forward)(params, x))
    max_err = float(jnp.max(jnp.abs(out - ref)))
    assert bool(jnp.allclose(out, ref, atol=2e-3, rtol=2e-3)), max_err

    print("KERNEL_OK")
</pallas_src>

<mosaic_0001>
module attributes {stable_mosaic.version = 11 : i64} {
  func.func @kernel(%arg0: memref<8x512xf32, #tpu.memory_space<vmem>>, %arg1: memref<208x288xf32, #tpu.memory_space<vmem>>, %arg2: memref<106x32xf32, #tpu.memory_space<vmem>>, %arg3: memref<32x19xf32, #tpu.memory_space<vmem>>, %arg4: memref<9x672xf32, #tpu.memory_space<vmem>>, %arg5: memref<512x128xf32, #tpu.memory_space<vmem>>, %arg6: memref<128x32xf32, #tpu.memory_space<vmem>>, %arg7: memref<32x2xf32, #tpu.memory_space<vmem>>, %arg8: memref<10x2xf32, #tpu.memory_space<vmem>>) attributes {dimension_semantics = [], scalar_prefetch = 0 : i64, scratch_operands = 0 : i64, tpu.core_type = #tpu.core_type<tc>} {
    %c0 = arith.constant 0 : index
    %c0_0 = arith.constant 0 : index
    %0 = vector.load %arg0[%c0, %c0_0] : memref<8x512xf32, #tpu.memory_space<vmem>>, vector<8x512xf32>
    %c17_i32 = arith.constant 17 : i32
    %1 = tpu.dynamic_rotate %0 by %c17_i32 dim 1 : vector<8x512xf32>, i32 -> vector<8x512xf32>
    %c0_1 = arith.constant 0 : index
    %c0_2 = arith.constant 0 : index
    %2 = vector.load %arg4[%c0_1, %c0_2] : memref<9x672xf32, #tpu.memory_space<vmem>>, vector<1x512xf32>
    %3 = vector.broadcast %2 : vector<1x512xf32> to vector<8x512xf32>
    %4 = arith.mulf %1, %3 : vector<8x512xf32>
    %c16_i32 = arith.constant 16 : i32
    %5 = tpu.dynamic_rotate %0 by %c16_i32 dim 1 : vector<8x512xf32>, i32 -> vector<8x512xf32>
    %c1 = arith.constant 1 : index
    %c0_3 = arith.constant 0 : index
    %6 = vector.load %arg4[%c1, %c0_3] : memref<9x672xf32, #tpu.memory_space<vmem>>, vector<1x512xf32>
    %7 = vector.broadcast %6 : vector<1x512xf32> to vector<8x512xf32>
    %8 = arith.mulf %5, %7 : vector<8x512xf32>
    %c15_i32 = arith.constant 15 : i32
    %9 = tpu.dynamic_rotate %0 by %c15_i32 dim 1 : vector<8x512xf32>, i32 -> vector<8x512xf32>
    %c2 = arith.constant 2 : index
    %c0_4 = arith.constant 0 : index
    %10 = vector.load %arg4[%c2, %c0_4] : memref<9x672xf32, #tpu.memory_space<vmem>>, vector<1x512xf32>
    %11 = vector.broadcast %10 : vector<1x512xf32> to vector<8x512xf32>
    %12 = arith.mulf %9, %11 : vector<8x512xf32>
    %c1_i32 = arith.constant 1 : i32
    %13 = tpu.dynamic_rotate %0 by %c1_i32 dim 1 : vector<8x512xf32>, i32 -> vector<8x512xf32>
    %c3 = arith.constant 3 : index
    %c0_5 = arith.constant 0 : index
    %14 = vector.load %arg4[%c3, %c0_5] : memref<9x672xf32, #tpu.memory_space<vmem>>, vector<1x512xf32>
    %15 = vector.broadcast %14 : vector<1x512xf32> to vector<8x512xf32>
    %16 = arith.mulf %13, %15 : vector<8x512xf32>
    %c511_i32 = arith.constant 511 : i32
    %17 = tpu.dynamic_rotate %0 by %c511_i32 dim 1 : vector<8x512xf32>, i32 -> vector<8x512xf32>
    %c5 = arith.constant 5 : index
    %c0_6 = arith.constant 0 : index
    %18 = vector.load %arg4[%c5, %c0_6] : memref<9x672xf32, #tpu.memory_space<vmem>>, vector<1x512xf32>
    %19 = vector.broadcast %18 : vector<1x512xf32> to vector<8x512xf32>
    %20 = arith.mulf %17, %19 : vector<8x512xf32>
    %c497_i32 = arith.constant 497 : i32
    %21 = tpu.dynamic_rotate %0 by %c497_i32 dim 1 : vector<8x512xf32>, i32 -> vector<8x512xf32>
    %c6 = arith.constant 6 : index
    %c0_7 = arith.constant 0 : index
    %22 = vector.load %arg4[%c6, %c0_7] : memref<9x672xf32, #tpu.memory_space<vmem>>, vector<1x512xf32>
    %23 = vector.broadcast %22 : vector<1x512xf32> to vector<8x512xf32>
    %24 = arith.mulf %21, %23 : vector<8x512xf32>
    %c496_i32 = arith.constant 496 : i32
    %25 = tpu.dynamic_rotate %0 by %c496_i32 dim 1 : vector<8x512xf32>, i32 -> vector<8x512xf32>
    %c7 = arith.constant 7 : index
    %c0_8 = arith.constant 0 : index
    %26 = vector.load %arg4[%c7, %c0_8] : memref<9x672xf32, #tpu.memory_space<vmem>>, vector<1x512xf32>
    %27 = vector.broadcast %26 : vector<1x512xf32> to vector<8x512xf32>
    %28 = arith.mulf %25, %27 : vector<8x512xf32>
    %c495_i32 = arith.constant 495 : i32
    %29 = tpu.dynamic_rotate %0 by %c495_i32 dim 1 : vector<8x512xf32>, i32 -> vector<8x512xf32>
    %c8 = arith.constant 8 : index
    %c0_9 = arith.constant 0 : index
    %30 = vector.load %arg4[%c8, %c0_9] : memref<9x672xf32, #tpu.memory_space<vmem>>, vector<1x512xf32>
    %31 = vector.broadcast %30 : vector<1x512xf32> to vector<8x512xf32>
    %32 = arith.mulf %29, %31 : vector<8x512xf32>
    %33 = tpu.concatenate %4, %8, %12, %16, %0, %20, %24, %28, %32 in 0 : vector<8x512xf32>, vector<8x512xf32>, vector<8x512xf32>, vector<8x512xf32>, vector<8x512xf32>, vector<8x512xf32>, vector<8x512xf32>, vector<8x512xf32>, vector<8x512xf32> -> vector<72x512xf32>
    %c0_10 = arith.constant 0 : index
    %c0_11 = arith.constant 0 : index
    %34 = vector.load %arg1[%c0_10, %c0_11] : memref<208x288xf32, #tpu.memory_space<vmem>>, vector<16x72xf32>
    %cst = arith.constant dense<0.000000e+00> : vector<16x512xf32>
    %35 = tpu.matmul %34, %33, %cst {dimension_numbers = #tpu.dot_dimension_numbers<[1], [0], [0], [1], [0, 0, 1, 1], [], []>} : vector<16x72xf32>, vector<72x512xf32>, vector<16x512xf32> -> vector<16x512xf32>
    %cst_12 = arith.constant dense<0.000000e+00> : vector<16xf32>
    %36 = vector.multi_reduction <add>, %35, %cst_12 [1] : vector<16x512xf32> to vector<16xf32>
    %37 = vector.shape_cast %36 : vector<16xf32> to vector<16x1xf32>
    %cst_13 = arith.constant 5.120000e+02 : f32
    %38 = vector.broadcast %cst_13 : f32 to vector<16x1xf32>
    %39 = arith.divf %37, %38 : vector<16x1xf32>
    %40 = vector.broadcast %39 : vector<16x1xf32> to vector<16x512xf32>
    %41 = arith.subf %35, %40 : vector<16x512xf32>
    %42 = arith.mulf %41, %41 : vector<16x512xf32>
    %cst_14 = arith.constant dense<0.000000e+00> : vector<16xf32>
    %43 = vector.multi_reduction <add>, %42, %cst_14 [1] : vector<16x512xf32> to vector<16xf32>
    %44 = vector.shape_cast %43 : vector<16xf32> to vector<16x1xf32>
    %cst_15 = arith.constant 5.120000e+02 : f32
    %45 = vector.broadcast %cst_15 : f32 to vector<16x1xf32>
    %46 = arith.divf %44, %45 : vector<16x1xf32>
    %cst_16 = arith.constant 9.99999974E-6 : f32
    %47 = vector.broadcast %cst_16 : f32 to vector<16x1xf32>
    %48 = arith.addf %46, %47 : vector<16x1xf32>
    %49 = math.rsqrt %48 : vector<16x1xf32>
    %c0_17 = arith.constant 0 : index
    %c0_18 = arith.constant 0 : index
    %50 = vector.load %arg3[%c0_17, %c0_18] : memref<32x19xf32, #tpu.memory_space<vmem>>, vector<16x1xf32>
    %51 = arith.mulf %49, %50 : vector<16x1xf32>
    %52 = vector.broadcast %51 : vector<16x1xf32> to vector<16x512xf32>
    %53 = arith.mulf %41, %52 : vector<16x512xf32>
    %c0_19 = arith.constant 0 : index
    %c1_20 = arith.constant 1 : index
    %54 = vector.load %arg3[%c0_19, %c1_20] : memref<32x19xf32, #tpu.memory_space<vmem>>, vector<16x1xf32>
    %55 = vector.broadcast %54 : vector<16x1xf32> to vector<16x512xf32>
    %56 = arith.addf %53, %55 : vector<16x512xf32>
    %cst_21 = arith.constant 0.000000e+00 : f32
    %57 = vector.broadcast %cst_21 : f32 to vector<16x512xf32>
    %58 = arith.maximumf %56, %57 : vector<16x512xf32>
    %c17_i32_22 = arith.constant 17 : i32
    %59 = tpu.dynamic_rotate %58 by %c17_i32_22 dim 1 : vector<16x512xf32>, i32 -> vector<16x512xf32>
    %c0_23 = arith.constant 0 : index
    %c0_24 = arith.constant 0 : index
    %60 = vector.load %arg4[%c0_23, %c0_24] : memref<9x672xf32, #tpu.memory_space<vmem>>, vector<1x512xf32>
    %61 = vector.broadcast %60 : vector<1x512xf32> to vector<16x512xf32>
    %62 = arith.mulf %59, %61 : vector<16x512xf32>
    %c16_i32_25 = arith.constant 16 : i32
    %63 = tpu.dynamic_rotate %58 by %c16_i32_25 dim 1 : vector<16x512xf32>, i32 -> vector<16x512xf32>
    %c1_26 = arith.constant 1 : index
    %c0_27 = arith.constant 0 : index
    %64 = vector.load %arg4[%c1_26, %c0_27] : memref<9x672xf32, #tpu.memory_space<vmem>>, vector<1x512xf32>
    %65 = vector.broadcast %64 : vector<1x512xf32> to vector<16x512xf32>
    %66 = arith.mulf %63, %65 : vector<16x512xf32>
    %c15_i32_28 = arith.constant 15 : i32
    %67 = tpu.dynamic_rotate %58 by %c15_i32_28 dim 1 : vector<16x512xf32>, i32 -> vector<16x512xf32>
    %c2_29 = arith.constant 2 : index
    %c0_30 = arith.constant 0 : index
    %68 = vector.load %arg4[%c2_29, %c0_30] : memref<9x672xf32, #tpu.memory_space<vmem>>, vector<1x512xf32>
    %69 = vector.broadcast %68 : vector<1x512xf32> to vector<16x512xf32>
    %70 = arith.mulf %67, %69 : vector<16x512xf32>
    %c1_i32_31 = arith.constant 1 : i32
    %71 = tpu.dynamic_rotate %58 by %c1_i32_31 dim 1 : vector<16x512xf32>, i32 -> vector<16x512xf32>
    %c3_32 = arith.constant 3 : index
    %c0_33 = arith.constant 0 : index
    %72 = vector.load %arg4[%c3_32, %c0_33] : memref<9x672xf32, #tpu.memory_space<vmem>>, vector<1x512xf32>
    %73 = vector.broadcast %72 : vector<1x512xf32> to vector<16x512xf32>
    %74 = arith.mulf %71, %73 : vector<16x512xf32>
    %c511_i32_34 = arith.constant 511 : i32
    %75 = tpu.dynamic_rotate %58 by %c511_i32_34 dim 1 : vector<16x512xf32>, i32 -> vector<16x512xf32>
    %c5_35 = arith.constant 5 : index
    %c0_36 = arith.constant 0 : index
    %76 = vector.load %arg4[%c5_35, %c0_36] : memref<9x672xf32, #tpu.memory_space<vmem>>, vector<1x512xf32>
    %77 = vector.broadcast %76 : vector<1x512xf32> to vector<16x512xf32>
    %78 = arith.mulf %75, %77 : vector<16x512xf32>
    %c497_i32_37 = arith.constant 497 : i32
    %79 = tpu.dynamic_rotate %58 by %c497_i32_37 dim 1 : vector<16x512xf32>, i32 -> vector<16x512xf32>
    %c6_38 = arith.constant 6 : index
    %c0_39 = arith.constant 0 : index
    %80 = vector.load %arg4[%c6_38, %c0_39] : memref<9x672xf32, #tpu.memory_space<vmem>>, vector<1x512xf32>
    %81 = vector.broadcast %80 : vector<1x512xf32> to vector<16x512xf32>
    %82 = arith.mulf %79, %81 : vector<16x512xf32>
    %c496_i32_40 = arith.constant 496 : i32
    %83 = tpu.dynamic_rotate %58 by %c496_i32_40 dim 1 : vector<16x512xf32>, i32 -> vector<16x512xf32>
    %c7_41 = arith.constant 7 : index
    %c0_42 = arith.constant 0 : index
    %84 = vector.load %arg4[%c7_41, %c0_42] : memref<9x672xf32, #tpu.memory_space<vmem>>, vector<1x512xf32>
    %85 = vector.broadcast %84 : vector<1x512xf32> to vector<16x512xf32>
    %86 = arith.mulf %83, %85 : vector<16x512xf32>
    %c495_i32_43 = arith.constant 495 : i32
    %87 = tpu.dynamic_rotate %58 by %c495_i32_43 dim 1 : vector<16x512xf32>, i32 -> vector<16x512xf32>
    %c8_44 = arith.constant 8 : index
    %c0_45 = arith.constant 0 : index
    %88 = vector.load %arg4[%c8_44, %c0_45] : memref<9x672xf32, #tpu.memory_space<vmem>>, vector<1x512xf32>
    %89 = vector.broadcast %88 : vector<1x512xf32> to vector<16x512xf32>
    %90 = arith.mulf %87, %89 : vector<16x512xf32>
    %91 = tpu.concatenate %62, %66, %70, %74, %58, %78, %82, %86, %90 in 0 : vector<16x512xf32>, vector<16x512xf32>, vector<16x512xf32>, vector<16x512xf32>, vector<16x512xf32>, vector<16x512xf32>, vector<16x512xf32>, vector<16x512xf32>, vector<16x512xf32> -> vector<144x512xf32>
    %c16 = arith.constant 16 : index
    %c0_46 = arith.constant 0 : index
    %92 = vector.load %arg1[%c16, %c0_46] : memref<208x288xf32, #tpu.memory_space<vmem>>, vector<32x144xf32>
    %cst_47 = arith.constant dense<0.000000e+00> : vector<32x512xf32>
    %93 = tpu.matmul %92, %91, %cst_47 {dimension_numbers = #tpu.dot_dimension_numbers<[1], [0], [0], [1], [0, 0, 1, 1], [], []>} : vector<32x144xf32>, vector<144x512xf32>, vector<32x512xf32> -> vector<32x512xf32>
    %cst_48 = arith.constant dense<0.000000e+00> : vector<32xf32>
    %94 = vector.multi_reduction <add>, %93, %cst_48 [1] : vector<32x512xf32> to vector<32xf32>
    %95 = vector.shape_cast %94 : vector<32xf32> to vector<32x1xf32>
    %cst_49 = arith.constant 5.120000e+02 : f32
    %96 = vector.broadcast %cst_49 : f32 to vector<32x1xf32>
    %97 = arith.divf %95, %96 : vector<32x1xf32>
    %98 = vector.broadcast %97 : vector<32x1xf32> to vector<32x512xf32>
    %99 = arith.subf %93, %98 : vector<32x512xf32>
    %100 = arith.mulf %99, %99 : vector<32x512xf32>
    %cst_50 = arith.constant dense<0.000000e+00> : vector<32xf32>
    %101 = vector.multi_reduction <add>, %100, %cst_50 [1] : vector<32x512xf32> to vector<32xf32>
    %102 = vector.shape_cast %101 : vector<32xf32> to vector<32x1xf32>
    %cst_51 = arith.constant 5.120000e+02 : f32
    %103 = vector.broadcast %cst_51 : f32 to vector<32x1xf32>
    %104 = arith.divf %102, %103 : vector<32x1xf32>
    %cst_52 = arith.constant 9.99999974E-6 : f32
    %105 = vector.broadcast %cst_52 : f32 to vector<32x1xf32>
    %106 = arith.addf %104, %105 : vector<32x1xf32>
    %107 = math.rsqrt %106 : vector<32x1xf32>
    %c0_53 = arith.constant 0 : index
    %c2_54 = arith.constant 2 : index
    %108 = vector.load %arg3[%c0_53, %c2_54] : memref<32x19xf32, #tpu.memory_space<vmem>>, vector<32x1xf32>
    %109 = arith.mulf %107, %108 : vector<32x1xf32>
    %110 = vector.broadcast %109 : vector<32x1xf32> to vector<32x512xf32>
    %111 = arith.mulf %99, %110 : vector<32x512xf32>
    %c0_55 = arith.constant 0 : index
    %c3_56 = arith.constant 3 : index
    %112 = vector.load %arg3[%c0_55, %c3_56] : memref<32x19xf32, #tpu.memory_space<vmem>>, vector<32x1xf32>
    %113 = vector.broadcast %112 : vector<32x1xf32> to vector<32x512xf32>
    %114 = arith.addf %111, %113 : vector<32x512xf32>
    %cst_57 = arith.constant 0.000000e+00 : f32
    %115 = vector.broadcast %cst_57 : f32 to vector<32x512xf32>
    %116 = arith.maximumf %114, %115 : vector<32x512xf32>
    %c0_58 = arith.constant 0 : index
    %c0_59 = arith.constant 0 : index
    %117 = vector.load %arg2[%c0_58, %c0_59] : memref<106x32xf32, #tpu.memory_space<vmem>>, vector<16x32xf32>
    %cst_60 = arith.constant dense<0.000000e+00> : vector<16x512xf32>
    %118 = tpu.matmul %117, %116, %cst_60 {dimension_numbers = #tpu.dot_dimension_numbers<[1], [0], [0], [1], [0, 0, 1, 1], [], []>} : vector<16x32xf32>, vector<32x512xf32>, vector<16x512xf32> -> vector<16x512xf32>
    %c0_61 = arith.constant 0 : index
    %c16_62 = arith.constant 16 : index
    %119 = vector.load %arg3[%c0_61, %c16_62] : memref<32x19xf32, #tpu.memory_space<vmem>>, vector<16x1xf32>
    %120 = vector.broadcast %119 : vector<16x1xf32> to vector<16x512xf32>
    %121 = arith.addf %118, %120 : vector<16x512xf32>
    %c511_i32_63 = arith.constant 511 : i32
    %122 = tpu.dynamic_rotate %121 by %c511_i32_63 dim 1 : vector<16x512xf32>, i32 -> vector<16x512xf32>
    %123 = arith.maximumf %121, %122 : vector<16x512xf32>
    %c496_i32_64 = arith.constant 496 : i32
    %124 = tpu.dynamic_rotate %121 by %c496_i32_64 dim 1 : vector<16x512xf32>, i32 -> vector<16x512xf32>
    %c495_i32_65 = arith.constant 495 : i32
    %125 = tpu.dynamic_rotate %121 by %c495_i32_65 dim 1 : vector<16x512xf32>, i32 -> vector<16x512xf32>
    %126 = arith.maximumf %124, %125 : vector<16x512xf32>
    %127 = arith.maximumf %123, %126 : vector<16x512xf32>
    %c0_66 = arith.constant 0 : index
    %c0_67 = arith.constant 0 : index
    %128 = vector.load %arg5[%c0_66, %c0_67] : memref<512x128xf32, #tpu.memory_space<vmem>>, vector<512x128xf32>
    %cst_68 = arith.constant dense<0.000000e+00> : vector<16x128xf32>
    %129 = tpu.matmul %127, %128, %cst_68 {dimension_numbers = #tpu.dot_dimension_numbers<[1], [0], [0], [1], [0, 0, 1, 1], [], []>} : vector<16x512xf32>, vector<512x128xf32>, vector<16x128xf32> -> vector<16x128xf32>
    %c9_i32 = arith.constant 9 : i32
    %130 = tpu.dynamic_rotate %129 by %c9_i32 dim 1 : vector<16x128xf32>, i32 -> vector<16x128xf32>
    %c0_69 = arith.constant 0 : index
    %c512 = arith.constant 512 : index
    %131 = vector.load %arg4[%c0_69, %c512] : memref<9x672xf32, #tpu.memory_space<vmem>>, vector<1x128xf32>
    %132 = vector.broadcast %131 : vector<1x128xf32> to vector<16x128xf32>
    %133 = arith.mulf %130, %132 : vector<16x128xf32>
    %c8_i32 = arith.constant 8 : i32
    %134 = tpu.dynamic_rotate %129 by %c8_i32 dim 1 : vector<16x128xf32>, i32 -> vector<16x128xf32>
    %c1_70 = arith.constant 1 : index
    %c512_71 = arith.constant 512 : index
    %135 = vector.load %arg4[%c1_70, %c512_71] : memref<9x672xf32, #tpu.memory_space<vmem>>, vector<1x128xf32>
    %136 = vector.broadcast %135 : vector<1x128xf32> to vector<16x128xf32>
    %137 = arith.mulf %134, %136 : vector<16x128xf32>
    %c7_i32 = arith.constant 7 : i32
    %138 = tpu.dynamic_rotate %129 by %c7_i32 dim 1 : vector<16x128xf32>, i32 -> vector<16x128xf32>
    %c2_72 = arith.constant 2 : index
    %c512_73 = arith.constant 512 : index
    %139 = vector.load %arg4[%c2_72, %c512_73] : memref<9x672xf32, #tpu.memory_space<vmem>>, vector<1x128xf32>
    %140 = vector.broadcast %139 : vector<1x128xf32> to vector<16x128xf32>
    %141 = arith.mulf %138, %140 : vector<16x128xf32>
    %c1_i32_74 = arith.constant 1 : i32
    %142 = tpu.dynamic_rotate %129 by %c1_i32_74 dim 1 : vector<16x128xf32>, i32 -> vector<16x128xf32>
    %c3_75 = arith.constant 3 : index
    %c512_76 = arith.constant 512 : index
    %143 = vector.load %arg4[%c3_75, %c512_76] : memref<9x672xf32, #tpu.memory_space<vmem>>, vector<1x128xf32>
    %144 = vector.broadcast %143 : vector<1x128xf32> to vector<16x128xf32>
    %145 = arith.mulf %142, %144 : vector<16x128xf32>
    %c127_i32 = arith.constant 127 : i32
    %146 = tpu.dynamic_rotate %129 by %c127_i32 dim 1 : vector<16x128xf32>, i32 -> vector<16x128xf32>
    %c5_77 = arith.constant 5 : index
    %c512_78 = arith.constant 512 : index
    %147 = vector.load %arg4[%c5_77, %c512_78] : memref<9x672xf32, #tpu.memory_space<vmem>>, vector<1x128xf32>
    %148 = vector.broadcast %147 : vector<1x128xf32> to vector<16x128xf32>
    %149 = arith.mulf %146, %148 : vector<16x128xf32>
    %c121_i32 = arith.constant 121 : i32
    %150 = tpu.dynamic_rotate %129 by %c121_i32 dim 1 : vector<16x128xf32>, i32 -> vector<16x128xf32>
    %c6_79 = arith.constant 6 : index
    %c512_80 = arith.constant 512 : index
    %151 = vector.load %arg4[%c6_79, %c512_80] : memref<9x672xf32, #tpu.memory_space<vmem>>, vector<1x128xf32>
    %152 = vector.broadcast %151 : vector<1x128xf32> to vector<16x128xf32>
    %153 = arith.mulf %150, %152 : vector<16x128xf32>
    %c120_i32 = arith.constant 120 : i32
    %154 = tpu.dynamic_rotate %129 by %c120_i32 dim 1 : vector<16x128xf32>, i32 -> vector<16x128xf32>
    %c7_81 = arith.constant 7 : index
    %c512_82 = arith.constant 512 : index
    %155 = vector.load %arg4[%c7_81, %c512_82] : memref<9x672xf32, #tpu.memory_space<vmem>>, vector<1x128xf32>
    %156 = vector.broadcast %155 : vector<1x128xf32> to vector<16x128xf32>
    %157 = arith.mulf %154, %156 : vector<16x128xf32>
    %c119_i32 = arith.constant 119 : i32
    %158 = tpu.dynamic_rotate %129 by %c119_i32 dim 1 : vector<16x128xf32>, i32 -> vector<16x128xf32>
    %c8_83 = arith.constant 8 : index
    %c512_84 = arith.constant 512 : index
    %159 = vector.load %arg4[%c8_83, %c512_84] : memref<9x672xf32, #tpu.memory_space<vmem>>, vector<1x128xf32>
    %160 = vector.broadcast %159 : vector<1x128xf32> to vector<16x128xf32>
    %161 = arith.mulf %158, %160 : vector<16x128xf32>
    %162 = tpu.concatenate %133, %137, %141, %145, %129, %149, %153, %157, %161 in 0 : vector<16x128xf32>, vector<16x128xf32>, vector<16x128xf32>, vector<16x128xf32>, vector<16x128xf32>, vector<16x128xf32>, vector<16x128xf32>, vector<16x128xf32>, vector<16x128xf32> -> vector<144x128xf32>
    %c48 = arith.constant 48 : index
    %c0_85 = arith.constant 0 : index
    %163 = vector.load %arg1[%c48, %c0_85] : memref<208x288xf32, #tpu.memory_space<vmem>>, vector<16x144xf32>
    %cst_86 = arith.constant dense<0.000000e+00> : vector<16x128xf32>
    %164 = tpu.matmul %163, %162, %cst_86 {dimension_numbers = #tpu.dot_dimension_numbers<[1], [0], [0], [1], [0, 0, 1, 1], [], []>} : vector<16x144xf32>, vector<144x128xf32>, vector<16x128xf32> -> vector<16x128xf32>
    %cst_87 = arith.constant dense<0.000000e+00> : vector<16xf32>
    %165 = vector.multi_reduction <add>, %164, %cst_87 [1] : vector<16x128xf32> to vector<16xf32>
    %166 = vector.shape_cast %165 : vector<16xf32> to vector<16x1xf32>
    %cst_88 = arith.constant 1.280000e+02 : f32
    %167 = vector.broadcast %cst_88 : f32 to vector<16x1xf32>
    %168 = arith.divf %166, %167 : vector<16x1xf32>
    %169 = vector.broadcast %168 : vector<16x1xf32> to vector<16x128xf32>
    %170 = arith.subf %164, %169 : vector<16x128xf32>
    %171 = arith.mulf %170, %170 : vector<16x128xf32>
    %cst_89 = arith.constant dense<0.000000e+00> : vector<16xf32>
    %172 = vector.multi_reduction <add>, %171, %cst_89 [1] : vector<16x128xf32> to vector<16xf32>
    %173 = vector.shape_cast %172 : vector<16xf32> to vector<16x1xf32>
    %cst_90 = arith.constant 1.280000e+02 : f32
    %174 = vector.broadcast %cst_90 : f32 to vector<16x1xf32>
    %175 = arith.divf %173, %174 : vector<16x1xf32>
    %cst_91 = arith.constant 9.99999974E-6 : f32
    %176 = vector.broadcast %cst_91 : f32 to vector<16x1xf32>
    %177 = arith.addf %175, %176 : vector<16x1xf32>
    %178 = math.rsqrt %177 : vector<16x1xf32>
    %c0_92 = arith.constant 0 : index
    %c4 = arith.constant 4 : index
    %179 = vector.load %arg3[%c0_92, %c4] : memref<32x19xf32, #tpu.memory_space<vmem>>, vector<16x1xf32>
    %180 = arith.mulf %178, %179 : vector<16x1xf32>
    %181 = vector.broadcast %180 : vector<16x1xf32> to vector<16x128xf32>
    %182 = arith.mulf %170, %181 : vector<16x128xf32>
    %c0_93 = arith.constant 0 : index
    %c5_94 = arith.constant 5 : index
    %183 = vector.load %arg3[%c0_93, %c5_94] : memref<32x19xf32, #tpu.memory_space<vmem>>, vector<16x1xf32>
    %184 = vector.broadcast %183 : vector<16x1xf32> to vector<16x128xf32>
    %185 = arith.addf %182, %184 : vector<16x128xf32>
    %cst_95 = arith.constant 0.000000e+00 : f32
    %186 = vector.broadcast %cst_95 : f32 to vector<16x128xf32>
    %187 = arith.maximumf %185, %186 : vector<16x128xf32>
    %c9_i32_96 = arith.constant 9 : i32
    %188 = tpu.dynamic_rotate %187 by %c9_i32_96 dim 1 : vector<16x128xf32>, i32 -> vector<16x128xf32>
    %c0_97 = arith.constant 0 : index
    %c512_98 = arith.constant 512 : index
    %189 = vector.load %arg4[%c0_97, %c512_98] : memref<9x672xf32, #tpu.memory_space<vmem>>, vector<1x128xf32>
    %190 = vector.broadcast %189 : vector<1x128xf32> to vector<16x128xf32>
    %191 = arith.mulf %188, %190 : vector<16x128xf32>
    %c8_i32_99 = arith.constant 8 : i32
    %192 = tpu.dynamic_rotate %187 by %c8_i32_99 dim 1 : vector<16x128xf32>, i32 -> vector<16x128xf32>
    %c1_100 = arith.constant 1 : index
    %c512_101 = arith.constant 512 : index
    %193 = vector.load %arg4[%c1_100, %c512_101] : memref<9x672xf32, #tpu.memory_space<vmem>>, vector<1x128xf32>
    %194 = vector.broadcast %193 : vector<1x128xf32> to vector<16x128xf32>
    %195 = arith.mulf %192, %194 : vector<16x128xf32>
    %c7_i32_102 = arith.constant 7 : i32
    %196 = tpu.dynamic_rotate %187 by %c7_i32_102 dim 1 : vector<16x128xf32>, i32 -> vector<16x128xf32>
    %c2_103 = arith.constant 2 : index
    %c512_104 = arith.constant 512 : index
    %197 = vector.load %arg4[%c2_103, %c512_104] : memref<9x672xf32, #tpu.memory_space<vmem>>, vector<1x128xf32>
    %198 = vector.broadcast %197 : vector<1x128xf32> to vector<16x128xf32>
    %199 = arith.mulf %196, %198 : vector<16x128xf32>
    %c1_i32_105 = arith.constant 1 : i32
    %200 = tpu.dynamic_rotate %187 by %c1_i32_105 dim 1 : vector<16x128xf32>, i32 -> vector<16x128xf32>
    %c3_106 = arith.constant 3 : index
    %c512_107 = arith.constant 512 : index
    %201 = vector.load %arg4[%c3_106, %c512_107] : memref<9x672xf32, #tpu.memory_space<vmem>>, vector<1x128xf32>
    %202 = vector.broadcast %201 : vector<1x128xf32> to vector<16x128xf32>
    %203 = arith.mulf %200, %202 : vector<16x128xf32>
    %c127_i32_108 = arith.constant 127 : i32
    %204 = tpu.dynamic_rotate %187 by %c127_i32_108 dim 1 : vector<16x128xf32>, i32 -> vector<16x128xf32>
    %c5_109 = arith.constant 5 : index
    %c512_110 = arith.constant 512 : index
    %205 = vector.load %arg4[%c5_109, %c512_110] : memref<9x672xf32, #tpu.memory_space<vmem>>, vector<1x128xf32>
    %206 = vector.broadcast %205 : vector<1x128xf32> to vector<16x128xf32>
    %207 = arith.mulf %204, %206 : vector<16x128xf32>
    %c121_i32_111 = arith.constant 121 : i32
    %208 = tpu.dynamic_rotate %187 by %c121_i32_111 dim 1 : vector<16x128xf32>, i32 -> vector<16x128xf32>
    %c6_112 = arith.constant 6 : index
    %c512_113 = arith.constant 512 : index
    %209 = vector.load %arg4[%c6_112, %c512_113] : memref<9x672xf32, #tpu.memory_space<vmem>>, vector<1x128xf32>
    %210 = vector.broadcast %209 : vector<1x128xf32> to vector<16x128xf32>
    %211 = arith.mulf %208, %210 : vector<16x128xf32>
    %c120_i32_114 = arith.constant 120 : i32
    %212 = tpu.dynamic_rotate %187 by %c120_i32_114 dim 1 : vector<16x128xf32>, i32 -> vector<16x128xf32>
    %c7_115 = arith.constant 7 : index
    %c512_116 = arith.constant 512 : index
    %213 = vector.load %arg4[%c7_115, %c512_116] : memref<9x672xf32, #tpu.memory_space<vmem>>, vector<1x128xf32>
    %214 = vector.broadcast %213 : vector<1x128xf32> to vector<16x128xf32>
    %215 = arith.mulf %212, %214 : vector<16x128xf32>
    %c119_i32_117 = arith.constant 119 : i32
    %216 = tpu.dynamic_rotate %187 by %c119_i32_117 dim 1 : vector<16x128xf32>, i32 -> vector<16x128xf32>
    %c8_118 = arith.constant 8 : index
    %c512_119 = arith.constant 512 : index
    %217 = vector.load %arg4[%c8_118, %c512_119] : memref<9x672xf32, #tpu.memory_space<vmem>>, vector<1x128xf32>
    %218 = vector.broadcast %217 : vector<1x128xf32> to vector<16x128xf32>
    %219 = arith.mulf %216, %218 : vector<16x128xf32>
    %220 = tpu.concatenate %191, %195, %199, %203, %187, %207, %211, %215, %219 in 0 : vector<16x128xf32>, vector<16x128xf32>, vector<16x128xf32>, vector<16x128xf32>, vector<16x128xf32>, vector<16x128xf32>, vector<16x128xf32>, vector<16x128xf32>, vector<16x128xf32> -> vector<144x128xf32>
    %c64 = arith.constant 64 : index
    %c0_120 = arith.constant 0 : index
    %221 = vector.load %arg1[%c64, %c0_120] : memref<208x288xf32, #tpu.memory_space<vmem>>, vector<32x144xf32>
    %cst_121 = arith.constant dense<0.000000e+00> : vector<32x128xf32>
    %222 = tpu.matmul %221, %220, %cst_121 {dimension_numbers = #tpu.dot_dimension_numbers<[1], [0], [0], [1], [0, 0, 1, 1], [], []>} : vector<32x144xf32>, vector<144x128xf32>, vector<32x128xf32> -> vector<32x128xf32>
    %cst_122 = arith.constant dense<0.000000e+00> : vector<32xf32>
    %223 = vector.multi_reduction <add>, %222, %cst_122 [1] : vector<32x128xf32> to vector<32xf32>
    %224 = vector.shape_cast %223 : vector<32xf32> to vector<32x1xf32>
    %cst_123 = arith.constant 1.280000e+02 : f32
    %225 = vector.broadcast %cst_123 : f32 to vector<32x1xf32>
    %226 = arith.divf %224, %225 : vector<32x1xf32>
    %227 = vector.broadcast %226 : vector<32x1xf32> to vector<32x128xf32>
    %228 = arith.subf %222, %227 : vector<32x128xf32>
    %229 = arith.mulf %228, %228 : vector<32x128xf32>
    %cst_124 = arith.constant dense<0.000000e+00> : vector<32xf32>
    %230 = vector.multi_reduction <add>, %229, %cst_124 [1] : vector<32x128xf32> to vector<32xf32>
    %231 = vector.shape_cast %230 : vector<32xf32> to vector<32x1xf32>
    %cst_125 = arith.constant 1.280000e+02 : f32
    %232 = vector.broadcast %cst_125 : f32 to vector<32x1xf32>
    %233 = arith.divf %231, %232 : vector<32x1xf32>
    %cst_126 = arith.constant 9.99999974E-6 : f32
    %234 = vector.broadcast %cst_126 : f32 to vector<32x1xf32>
    %235 = arith.addf %233, %234 : vector<32x1xf32>
    %236 = math.rsqrt %235 : vector<32x1xf32>
    %c0_127 = arith.constant 0 : index
    %c6_128 = arith.constant 6 : index
    %237 = vector.load %arg3[%c0_127, %c6_128] : memref<32x19xf32, #tpu.memory_space<vmem>>, vector<32x1xf32>
    %238 = arith.mulf %236, %237 : vector<32x1xf32>
    %239 = vector.broadcast %238 : vector<32x1xf32> to vector<32x128xf32>
    %240 = arith.mulf %228, %239 : vector<32x128xf32>
    %c0_129 = arith.constant 0 : index
    %c7_130 = arith.constant 7 : index
    %241 = vector.load %arg3[%c0_129, %c7_130] : memref<32x19xf32, #tpu.memory_space<vmem>>, vector<32x1xf32>
    %242 = vector.broadcast %241 : vector<32x1xf32> to vector<32x128xf32>
    %243 = arith.addf %240, %242 : vector<32x128xf32>
    %cst_131 = arith.constant 0.000000e+00 : f32
    %244 = vector.broadcast %cst_131 : f32 to vector<32x128xf32>
    %245 = arith.maximumf %243, %244 : vector<32x128xf32>
    %c9_i32_132 = arith.constant 9 : i32
    %246 = tpu.dynamic_rotate %245 by %c9_i32_132 dim 1 : vector<32x128xf32>, i32 -> vector<32x128xf32>
    %c0_133 = arith.constant 0 : index
    %c512_134 = arith.constant 512 : index
    %247 = vector.load %arg4[%c0_133, %c512_134] : memref<9x672xf32, #tpu.memory_space<vmem>>, vector<1x128xf32>
    %248 = vector.broadcast %247 : vector<1x128xf32> to vector<32x128xf32>
    %249 = arith.mulf %246, %248 : vector<32x128xf32>
    %c8_i32_135 = arith.constant 8 : i32
    %250 = tpu.dynamic_rotate %245 by %c8_i32_135 dim 1 : vector<32x128xf32>, i32 -> vector<32x128xf32>
    %c1_136 = arith.constant 1 : index
    %c512_137 = arith.constant 512 : index
    %251 = vector.load %arg4[%c1_136, %c512_137] : memref<9x672xf32, #tpu.memory_space<vmem>>, vector<1x128xf32>
    %252 = vector.broadcast %251 : vector<1x128xf32> to vector<32x128xf32>
    %253 = arith.mulf %250, %252 : vector<32x128xf32>
    %c7_i32_138 = arith.constant 7 : i32
    %254 = tpu.dynamic_rotate %245 by %c7_i32_138 dim 1 : vector<32x128xf32>, i32 -> vector<32x128xf32>
    %c2_139 = arith.constant 2 : index
    %c512_140 = arith.constant 512 : index
    %255 = vector.load %arg4[%c2_139, %c512_140] : memref<9x672xf32, #tpu.memory_space<vmem>>, vector<1x128xf32>
    %256 = vector.broadcast %255 : vector<1x128xf32> to vector<32x128xf32>
    %257 = arith.mulf %254, %256 : vector<32x128xf32>
    %c1_i32_141 = arith.constant 1 : i32
    %258 = tpu.dynamic_rotate %245 by %c1_i32_141 dim 1 : vector<32x128xf32>, i32 -> vector<32x128xf32>
    %c3_142 = arith.constant 3 : index
    %c512_143 = arith.constant 512 : index
    %259 = vector.load %arg4[%c3_142, %c512_143] : memref<9x672xf32, #tpu.memory_space<vmem>>, vector<1x128xf32>
    %260 = vector.broadcast %259 : vector<1x128xf32> to vector<32x128xf32>
    %261 = arith.mulf %258, %260 : vector<32x128xf32>
    %c127_i32_144 = arith.constant 127 : i32
    %262 = tpu.dynamic_rotate %245 by %c127_i32_144 dim 1 : vector<32x128xf32>, i32 -> vector<32x128xf32>
    %c5_145 = arith.constant 5 : index
    %c512_146 = arith.constant 512 : index
    %263 = vector.load %arg4[%c5_145, %c512_146] : memref<9x672xf32, #tpu.memory_space<vmem>>, vector<1x128xf32>
    %264 = vector.broadcast %263 : vector<1x128xf32> to vector<32x128xf32>
    %265 = arith.mulf %262, %264 : vector<32x128xf32>
    %c121_i32_147 = arith.constant 121 : i32
    %266 = tpu.dynamic_rotate %245 by %c121_i32_147 dim 1 : vector<32x128xf32>, i32 -> vector<32x128xf32>
    %c6_148 = arith.constant 6 : index
    %c512_149 = arith.constant 512 : index
    %267 = vector.load %arg4[%c6_148, %c512_149] : memref<9x672xf32, #tpu.memory_space<vmem>>, vector<1x128xf32>
    %268 = vector.broadcast %267 : vector<1x128xf32> to vector<32x128xf32>
    %269 = arith.mulf %266, %268 : vector<32x128xf32>
    %c120_i32_150 = arith.constant 120 : i32
    %270 = tpu.dynamic_rotate %245 by %c120_i32_150 dim 1 : vector<32x128xf32>, i32 -> vector<32x128xf32>
    %c7_151 = arith.constant 7 : index
    %c512_152 = arith.constant 512 : index
    %271 = vector.load %arg4[%c7_151, %c512_152] : memref<9x672xf32, #tpu.memory_space<vmem>>, vector<1x128xf32>
    %272 = vector.broadcast %271 : vector<1x128xf32> to vector<32x128xf32>
    %273 = arith.mulf %270, %272 : vector<32x128xf32>
    %c119_i32_153 = arith.constant 119 : i32
    %274 = tpu.dynamic_rotate %245 by %c119_i32_153 dim 1 : vector<32x128xf32>, i32 -> vector<32x128xf32>
    %c8_154 = arith.constant 8 : index
    %c512_155 = arith.constant 512 : index
    %275 = vector.load %arg4[%c8_154, %c512_155] : memref<9x672xf32, #tpu.memory_space<vmem>>, vector<1x128xf32>
    %276 = vector.broadcast %275 : vector<1x128xf32> to vector<32x128xf32>
    %277 = arith.mulf %274, %276 : vector<32x128xf32>
    %278 = tpu.concatenate %249, %253, %257, %261, %245, %265, %269, %273, %277 in 0 : vector<32x128xf32>, vector<32x128xf32>, vector<32x128xf32>, vector<32x128xf32>, vector<32x128xf32>, vector<32x128xf32>, vector<32x128xf32>, vector<32x128xf32>, vector<32x128xf32> -> vector<288x128xf32>
    %c96 = arith.constant 96 : index
    %c0_156 = arith.constant 0 : index
    %279 = vector.load %arg1[%c96, %c0_156] : memref<208x288xf32, #tpu.memory_space<vmem>>, vector<32x288xf32>
    %cst_157 = arith.constant dense<0.000000e+00> : vector<32x128xf32>
    %280 = tpu.matmul %279, %278, %cst_157 {dimension_numbers = #tpu.dot_dimension_numbers<[1], [0], [0], [1], [0, 0, 1, 1], [], []>} : vector<32x288xf32>, vector<288x128xf32>, vector<32x128xf32> -> vector<32x128xf32>
    %c16_158 = arith.constant 16 : index
    %c0_159 = arith.constant 0 : index
    %281 = vector.load %arg2[%c16_158, %c0_159] : memref<106x32xf32, #tpu.memory_space<vmem>>, vector<32x16xf32>
    %cst_160 = arith.constant dense<0.000000e+00> : vector<32x128xf32>
    %282 = tpu.matmul %281, %129, %cst_160 {dimension_numbers = #tpu.dot_dimension_numbers<[1], [0], [0], [1], [0, 0, 1, 1], [], []>} : vector<32x16xf32>, vector<16x128xf32>, vector<32x128xf32> -> vector<32x128xf32>
    %283 = arith.addf %280, %282 : vector<32x128xf32>
    %cst_161 = arith.constant dense<0.000000e+00> : vector<32xf32>
    %284 = vector.multi_reduction <add>, %283, %cst_161 [1] : vector<32x128xf32> to vector<32xf32>
    %285 = vector.shape_cast %284 : vector<32xf32> to vector<32x1xf32>
    %cst_162 = arith.constant 1.280000e+02 : f32
    %286 = vector.broadcast %cst_162 : f32 to vector<32x1xf32>
    %287 = arith.divf %285, %286 : vector<32x1xf32>
    %288 = vector.broadcast %287 : vector<32x1xf32> to vector<32x128xf32>
    %289 = arith.subf %283, %288 : vector<32x128xf32>
    %290 = arith.mulf %289, %289 : vector<32x128xf32>
    %cst_163 = arith.constant dense<0.000000e+00> : vector<32xf32>
    %291 = vector.multi_reduction <add>, %290, %cst_163 [1] : vector<32x128xf32> to vector<32xf32>
    %292 = vector.shape_cast %291 : vector<32xf32> to vector<32x1xf32>
    %cst_164 = arith.constant 1.280000e+02 : f32
    %293 = vector.broadcast %cst_164 : f32 to vector<32x1xf32>
    %294 = arith.divf %292, %293 : vector<32x1xf32>
    %cst_165 = arith.constant 9.99999974E-6 : f32
    %295 = vector.broadcast %cst_165 : f32 to vector<32x1xf32>
    %296 = arith.addf %294, %295 : vector<32x1xf32>
    %297 = math.rsqrt %296 : vector<32x1xf32>
    %c0_166 = arith.constant 0 : index
    %c8_167 = arith.constant 8 : index
    %298 = vector.load %arg3[%c0_166, %c8_167] : memref<32x19xf32, #tpu.memory_space<vmem>>, vector<32x1xf32>
    %299 = arith.mulf %297, %298 : vector<32x1xf32>
    %300 = vector.broadcast %299 : vector<32x1xf32> to vector<32x128xf32>
    %301 = arith.mulf %289, %300 : vector<32x128xf32>
    %c0_168 = arith.constant 0 : index
    %c9 = arith.constant 9 : index
    %302 = vector.load %arg3[%c0_168, %c9] : memref<32x19xf32, #tpu.memory_space<vmem>>, vector<32x1xf32>
    %303 = vector.broadcast %302 : vector<32x1xf32> to vector<32x128xf32>
    %304 = arith.addf %301, %303 : vector<32x128xf32>
    %cst_169 = arith.constant 0.000000e+00 : f32
    %305 = vector.broadcast %cst_169 : f32 to vector<32x128xf32>
    %306 = arith.maximumf %304, %305 : vector<32x128xf32>
    %c48_170 = arith.constant 48 : index
    %c0_171 = arith.constant 0 : index
    %307 = vector.load %arg2[%c48_170, %c0_171] : memref<106x32xf32, #tpu.memory_space<vmem>>, vector<16x32xf32>
    %cst_172 = arith.constant dense<0.000000e+00> : vector<16x128xf32>
    %308 = tpu.matmul %307, %306, %cst_172 {dimension_numbers = #tpu.dot_dimension_numbers<[1], [0], [0], [1], [0, 0, 1, 1], [], []>} : vector<16x32xf32>, vector<32x128xf32>, vector<16x128xf32> -> vector<16x128xf32>
    %c0_173 = arith.constant 0 : index
    %c17 = arith.constant 17 : index
    %309 = vector.load %arg3[%c0_173, %c17] : memref<32x19xf32, #tpu.memory_space<vmem>>, vector<16x1xf32>
    %310 = vector.broadcast %309 : vector<16x1xf32> to vector<16x128xf32>
    %311 = arith.addf %308, %310 : vector<16x128xf32>
    %c127_i32_174 = arith.constant 127 : i32
    %312 = tpu.dynamic_rotate %311 by %c127_i32_174 dim 1 : vector<16x128xf32>, i32 -> vector<16x128xf32>
    %313 = arith.maximumf %311, %312 : vector<16x128xf32>
    %c120_i32_175 = arith.constant 120 : i32
    %314 = tpu.dynamic_rotate %311 by %c120_i32_175 dim 1 : vector<16x128xf32>, i32 -> vector<16x128xf32>
    %c119_i32_176 = arith.constant 119 : i32
    %315 = tpu.dynamic_rotate %311 by %c119_i32_176 dim 1 : vector<16x128xf32>, i32 -> vector<16x128xf32>
    %316 = arith.maximumf %314, %315 : vector<16x128xf32>
    %317 = arith.maximumf %313, %316 : vector<16x128xf32>
    %c0_177 = arith.constant 0 : index
    %c0_178 = arith.constant 0 : index
    %318 = vector.load %arg6[%c0_177, %c0_178] : memref<128x32xf32, #tpu.memory_space<vmem>>, vector<128x32xf32>
    %cst_179 = arith.constant dense<0.000000e+00> : vector<16x32xf32>
    %319 = tpu.matmul %317, %318, %cst_179 {dimension_numbers = #tpu.dot_dimension_numbers<[1], [0], [0], [1], [0, 0, 1, 1], [], []>} : vector<16x128xf32>, vector<128x32xf32>, vector<16x32xf32> -> vector<16x32xf32>
    %320 = vector.extract_strided_slice %319 {offsets = [0, 27], sizes = [16, 5], strides = [1, 1]} : vector<16x32xf32> to vector<16x5xf32>
    %321 = vector.extract_strided_slice %319 {offsets = [0, 0], sizes = [16, 27], strides = [1, 1]} : vector<16x32xf32> to vector<16x27xf32>
    %322 = tpu.concatenate %320, %321 in 1 : vector<16x5xf32>, vector<16x27xf32> -> vector<16x32xf32>
    %c0_180 = arith.constant 0 : index
    %c640 = arith.constant 640 : index
    %323 = vector.load %arg4[%c0_180, %c640] : memref<9x672xf32, #tpu.memory_space<vmem>>, vector<1x32xf32>
    %324 = vector.broadcast %323 : vector<1x32xf32> to vector<16x32xf32>
    %325 = arith.mulf %322, %324 : vector<16x32xf32>
    %326 = vector.extract_strided_slice %319 {offsets = [0, 28], sizes = [16, 4], strides = [1, 1]} : vector<16x32xf32> to vector<16x4xf32>
    %327 = vector.extract_strided_slice %319 {offsets = [0, 0], sizes = [16, 28], strides = [1, 1]} : vector<16x32xf32> to vector<16x28xf32>
    %328 = tpu.concatenate %326, %327 in 1 : vector<16x4xf32>, vector<16x28xf32> -> vector<16x32xf32>
    %c1_181 = arith.constant 1 : index
    %c640_182 = arith.constant 640 : index
    %329 = vector.load %arg4[%c1_181, %c640_182] : memref<9x672xf32, #tpu.memory_space<vmem>>, vector<1x32xf32>
    %330 = vector.broadcast %329 : vector<1x32xf32> to vector<16x32xf32>
    %331 = arith.mulf %328, %330 : vector<16x32xf32>
    %332 = vector.extract_strided_slice %319 {offsets = [0, 29], sizes = [16, 3], strides = [1, 1]} : vector<16x32xf32> to vector<16x3xf32>
    %333 = vector.extract_strided_slice %319 {offsets = [0, 0], sizes = [16, 29], strides = [1, 1]} : vector<16x32xf32> to vector<16x29xf32>
    %334 = tpu.concatenate %332, %333 in 1 : vector<16x3xf32>, vector<16x29xf32> -> vector<16x32xf32>
    %c2_183 = arith.constant 2 : index
    %c640_184 = arith.constant 640 : index
    %335 = vector.load %arg4[%c2_183, %c640_184] : memref<9x672xf32, #tpu.memory_space<vmem>>, vector<1x32xf32>
    %336 = vector.broadcast %335 : vector<1x32xf32> to vector<16x32xf32>
    %337 = arith.mulf %334, %336 : vector<16x32xf32>
    %338 = vector.extract_strided_slice %319 {offsets = [0, 31], sizes = [16, 1], strides = [1, 1]} : vector<16x32xf32> to vector<16x1xf32>
    %339 = vector.extract_strided_slice %319 {offsets = [0, 0], sizes = [16, 31], strides = [1, 1]} : vector<16x32xf32> to vector<16x31xf32>
    %340 = tpu.concatenate %338, %339 in 1 : vector<16x1xf32>, vector<16x31xf32> -> vector<16x32xf32>
    %c3_185 = arith.constant 3 : index
    %c640_186 = arith.constant 640 : index
    %341 = vector.load %arg4[%c3_185, %c640_186] : memref<9x672xf32, #tpu.memory_space<vmem>>, vector<1x32xf32>
    %342 = vector.broadcast %341 : vector<1x32xf32> to vector<16x32xf32>
    %343 = arith.mulf %340, %342 : vector<16x32xf32>
    %344 = vector.extract_strided_slice %319 {offsets = [0, 1], sizes = [16, 31], strides = [1, 1]} : vector<16x32xf32> to vector<16x31xf32>
    %345 = vector.extract_strided_slice %319 {offsets = [0, 0], sizes = [16, 1], strides = [1, 1]} : vector<16x32xf32> to vector<16x1xf32>
    %346 = tpu.concatenate %344, %345 in 1 : vector<16x31xf32>, vector<16x1xf32> -> vector<16x32xf32>
    %c5_187 = arith.constant 5 : index
    %c640_188 = arith.constant 640 : index
    %347 = vector.load %arg4[%c5_187, %c640_188] : memref<9x672xf32, #tpu.memory_space<vmem>>, vector<1x32xf32>
    %348 = vector.broadcast %347 : vector<1x32xf32> to vector<16x32xf32>
    %349 = arith.mulf %346, %348 : vector<16x32xf32>
    %350 = vector.extract_strided_slice %319 {offsets = [0, 3], sizes = [16, 29], strides = [1, 1]} : vector<16x32xf32> to vector<16x29xf32>
    %351 = vector.extract_strided_slice %319 {offsets = [0, 0], sizes = [16, 3], strides = [1, 1]} : vector<16x32xf32> to vector<16x3xf32>
    %352 = tpu.concatenate %350, %351 in 1 : vector<16x29xf32>, vector<16x3xf32> -> vector<16x32xf32>
    %c6_189 = arith.constant 6 : index
    %c640_190 = arith.constant 640 : index
    %353 = vector.load %arg4[%c6_189, %c640_190] : memref<9x672xf32, #tpu.memory_space<vmem>>, vector<1x32xf32>
    %354 = vector.broadcast %353 : vector<1x32xf32> to vector<16x32xf32>
    %355 = arith.mulf %352, %354 : vector<16x32xf32>
    %356 = vector.extract_strided_slice %319 {offsets = [0, 4], sizes = [16, 28], strides = [1, 1]} : vector<16x32xf32> to vector<16x28xf32>
    %357 = vector.extract_strided_slice %319 {offsets = [0, 0], sizes = [16, 4], strides = [1, 1]} : vector<16x32xf32> to vector<16x4xf32>
    %358 = tpu.concatenate %356, %357 in 1 : vector<16x28xf32>, vector<16x4xf32> -> vector<16x32xf32>
    %c7_191 = arith.constant 7 : index
    %c640_192 = arith.constant 640 : index
    %359 = vector.load %arg4[%c7_191, %c640_192] : memref<9x672xf32, #tpu.memory_space<vmem>>, vector<1x32xf32>
    %360 = vector.broadcast %359 : vector<1x32xf32> to vector<16x32xf32>
    %361 = arith.mulf %358, %360 : vector<16x32xf32>
    %362 = vector.extract_strided_slice %319 {offsets = [0, 5], sizes = [16, 27], strides = [1, 1]} : vector<16x32xf32> to vector<16x27xf32>
    %363 = vector.extract_strided_slice %319 {offsets = [0, 0], sizes = [16, 5], strides = [1, 1]} : vector<16x32xf32> to vector<16x5xf32>
    %364 = tpu.concatenate %362, %363 in 1 : vector<16x27xf32>, vector<16x5xf32> -> vector<16x32xf32>
    %c8_193 = arith.constant 8 : index
    %c640_194 = arith.constant 640 : index
    %365 = vector.load %arg4[%c8_193, %c640_194] : memref<9x672xf32, #tpu.memory_space<vmem>>, vector<1x32xf32>
    %366 = vector.broadcast %365 : vector<1x32xf32> to vector<16x32xf32>
    %367 = arith.mulf %364, %366 : vector<16x32xf32>
    %368 = tpu.concatenate %325, %331, %337, %343, %319, %349, %355, %361, %367 in 0 : vector<16x32xf32>, vector<16x32xf32>, vector<16x32xf32>, vector<16x32xf32>, vector<16x32xf32>, vector<16x32xf32>, vector<16x32xf32>, vector<16x32xf32>, vector<16x32xf32> -> vector<144x32xf32>
    %c128 = arith.constant 128 : index
    %c0_195 = arith.constant 0 : index
    %369 = vector.load %arg1[%c128, %c0_195] : memref<208x288xf32, #tpu.memory_space<vmem>>, vector<16x144xf32>
    %cst_196 = arith.constant dense<0.000000e+00> : vector<16x32xf32>
    %370 = tpu.matmul %369, %368, %cst_196 {dimension_numbers = #tpu.dot_dimension_numbers<[1], [0], [0], [1], [0, 0, 1, 1], [], []>} : vector<16x144xf32>, vector<144x32xf32>, vector<16x32xf32> -> vector<16x32xf32>
    %cst_197 = arith.constant dense<0.000000e+00> : vector<16xf32>
    %371 = vector.multi_reduction <add>, %370, %cst_197 [1] : vector<16x32xf32> to vector<16xf32>
    %372 = vector.shape_cast %371 : vector<16xf32> to vector<16x1xf32>
    %cst_198 = arith.constant 3.200000e+01 : f32
    %373 = vector.broadcast %cst_198 : f32 to vector<16x1xf32>
    %374 = arith.divf %372, %373 : vector<16x1xf32>
    %375 = vector.broadcast %374 : vector<16x1xf32> to vector<16x32xf32>
    %376 = arith.subf %370, %375 : vector<16x32xf32>
    %377 = arith.mulf %376, %376 : vector<16x32xf32>
    %cst_199 = arith.constant dense<0.000000e+00> : vector<16xf32>
    %378 = vector.multi_reduction <add>, %377, %cst_199 [1] : vector<16x32xf32> to vector<16xf32>
    %379 = vector.shape_cast %378 : vector<16xf32> to vector<16x1xf32>
    %cst_200 = arith.constant 3.200000e+01 : f32
    %380 = vector.broadcast %cst_200 : f32 to vector<16x1xf32>
    %381 = arith.divf %379, %380 : vector<16x1xf32>
    %cst_201 = arith.constant 9.99999974E-6 : f32
    %382 = vector.broadcast %cst_201 : f32 to vector<16x1xf32>
    %383 = arith.addf %381, %382 : vector<16x1xf32>
    %384 = math.rsqrt %383 : vector<16x1xf32>
    %c0_202 = arith.constant 0 : index
    %c10 = arith.constant 10 : index
    %385 = vector.load %arg3[%c0_202, %c10] : memref<32x19xf32, #tpu.memory_space<vmem>>, vector<16x1xf32>
    %386 = arith.mulf %384, %385 : vector<16x1xf32>
    %387 = vector.broadcast %386 : vector<16x1xf32> to vector<16x32xf32>
    %388 = arith.mulf %376, %387 : vector<16x32xf32>
    %c0_203 = arith.constant 0 : index
    %c11 = arith.constant 11 : index
    %389 = vector.load %arg3[%c0_203, %c11] : memref<32x19xf32, #tpu.memory_space<vmem>>, vector<16x1xf32>
    %390 = vector.broadcast %389 : vector<16x1xf32> to vector<16x32xf32>
    %391 = arith.addf %388, %390 : vector<16x32xf32>
    %cst_204 = arith.constant 0.000000e+00 : f32
    %392 = vector.broadcast %cst_204 : f32 to vector<16x32xf32>
    %393 = arith.maximumf %391, %392 : vector<16x32xf32>
    %394 = vector.extract_strided_slice %393 {offsets = [0, 27], sizes = [16, 5], strides = [1, 1]} : vector<16x32xf32> to vector<16x5xf32>
    %395 = vector.extract_strided_slice %393 {offsets = [0, 0], sizes = [16, 27], strides = [1, 1]} : vector<16x32xf32> to vector<16x27xf32>
    %396 = tpu.concatenate %394, %395 in 1 : vector<16x5xf32>, vector<16x27xf32> -> vector<16x32xf32>
    %c0_205 = arith.constant 0 : index
    %c640_206 = arith.constant 640 : index
    %397 = vector.load %arg4[%c0_205, %c640_206] : memref<9x672xf32, #tpu.memory_space<vmem>>, vector<1x32xf32>
    %398 = vector.broadcast %397 : vector<1x32xf32> to vector<16x32xf32>
    %399 = arith.mulf %396, %398 : vector<16x32xf32>
    %400 = vector.extract_strided_slice %393 {offsets = [0, 28], sizes = [16, 4], strides = [1, 1]} : vector<16x32xf32> to vector<16x4xf32>
    %401 = vector.extract_strided_slice %393 {offsets = [0, 0], sizes = [16, 28], strides = [1, 1]} : vector<16x32xf32> to vector<16x28xf32>
    %402 = tpu.concatenate %400, %401 in 1 : vector<16x4xf32>, vector<16x28xf32> -> vector<16x32xf32>
    %c1_207 = arith.constant 1 : index
    %c640_208 = arith.constant 640 : index
    %403 = vector.load %arg4[%c1_207, %c640_208] : memref<9x672xf32, #tpu.memory_space<vmem>>, vector<1x32xf32>
    %404 = vector.broadcast %403 : vector<1x32xf32> to vector<16x32xf32>
    %405 = arith.mulf %402, %404 : vector<16x32xf32>
    %406 = vector.extract_strided_slice %393 {offsets = [0, 29], sizes = [16, 3], strides = [1, 1]} : vector<16x32xf32> to vector<16x3xf32>
    %407 = vector.extract_strided_slice %393 {offsets = [0, 0], sizes = [16, 29], strides = [1, 1]} : vector<16x32xf32> to vector<16x29xf32>
    %408 = tpu.concatenate %406, %407 in 1 : vector<16x3xf32>, vector<16x29xf32> -> vector<16x32xf32>
    %c2_209 = arith.constant 2 : index
    %c640_210 = arith.constant 640 : index
    %409 = vector.load %arg4[%c2_209, %c640_210] : memref<9x672xf32, #tpu.memory_space<vmem>>, vector<1x32xf32>
    %410 = vector.broadcast %409 : vector<1x32xf32> to vector<16x32xf32>
    %411 = arith.mulf %408, %410 : vector<16x32xf32>
    %412 = vector.extract_strided_slice %393 {offsets = [0, 31], sizes = [16, 1], strides = [1, 1]} : vector<16x32xf32> to vector<16x1xf32>
    %413 = vector.extract_strided_slice %393 {offsets = [0, 0], sizes = [16, 31], strides = [1, 1]} : vector<16x32xf32> to vector<16x31xf32>
    %414 = tpu.concatenate %412, %413 in 1 : vector<16x1xf32>, vector<16x31xf32> -> vector<16x32xf32>
    %c3_211 = arith.constant 3 : index
    %c640_212 = arith.constant 640 : index
    %415 = vector.load %arg4[%c3_211, %c640_212] : memref<9x672xf32, #tpu.memory_space<vmem>>, vector<1x32xf32>
    %416 = vector.broadcast %415 : vector<1x32xf32> to vector<16x32xf32>
    %417 = arith.mulf %414, %416 : vector<16x32xf32>
    %418 = vector.extract_strided_slice %393 {offsets = [0, 1], sizes = [16, 31], strides = [1, 1]} : vector<16x32xf32> to vector<16x31xf32>
    %419 = vector.extract_strided_slice %393 {offsets = [0, 0], sizes = [16, 1], strides = [1, 1]} : vector<16x32xf32> to vector<16x1xf32>
    %420 = tpu.concatenate %418, %419 in 1 : vector<16x31xf32>, vector<16x1xf32> -> vector<16x32xf32>
    %c5_213 = arith.constant 5 : index
    %c640_214 = arith.constant 640 : index
    %421 = vector.load %arg4[%c5_213, %c640_214] : memref<9x672xf32, #tpu.memory_space<vmem>>, vector<1x32xf32>
    %422 = vector.broadcast %421 : vector<1x32xf32> to vector<16x32xf32>
    %423 = arith.mulf %420, %422 : vector<16x32xf32>
    %424 = vector.extract_strided_slice %393 {offsets = [0, 3], sizes = [16, 29], strides = [1, 1]} : vector<16x32xf32> to vector<16x29xf32>
    %425 = vector.extract_strided_slice %393 {offsets = [0, 0], sizes = [16, 3], strides = [1, 1]} : vector<16x32xf32> to vector<16x3xf32>
    %426 = tpu.concatenate %424, %425 in 1 : vector<16x29xf32>, vector<16x3xf32> -> vector<16x32xf32>
    %c6_215 = arith.constant 6 : index
    %c640_216 = arith.constant 640 : index
    %427 = vector.load %arg4[%c6_215, %c640_216] : memref<9x672xf32, #tpu.memory_space<vmem>>, vector<1x32xf32>
    %428 = vector.broadcast %427 : vector<1x32xf32> to vector<16x32xf32>
    %429 = arith.mulf %426, %428 : vector<16x32xf32>
    %430 = vector.extract_strided_slice %393 {offsets = [0, 4], sizes = [16, 28], strides = [1, 1]} : vector<16x32xf32> to vector<16x28xf32>
    %431 = vector.extract_strided_slice %393 {offsets = [0, 0], sizes = [16, 4], strides = [1, 1]} : vector<16x32xf32> to vector<16x4xf32>
    %432 = tpu.concatenate %430, %431 in 1 : vector<16x28xf32>, vector<16x4xf32> -> vector<16x32xf32>
    %c7_217 = arith.constant 7 : index
    %c640_218 = arith.constant 640 : index
    %433 = vector.load %arg4[%c7_217, %c640_218] : memref<9x672xf32, #tpu.memory_space<vmem>>, vector<1x32xf32>
    %434 = vector.broadcast %433 : vector<1x32xf32> to vector<16x32xf32>
    %435 = arith.mulf %432, %434 : vector<16x32xf32>
    %436 = vector.extract_strided_slice %393 {offsets = [0, 5], sizes = [16, 27], strides = [1, 1]} : vector<16x32xf32> to vector<16x27xf32>
    %437 = vector.extract_strided_slice %393 {offsets = [0, 0], sizes = [16, 5], strides = [1, 1]} : vector<16x32xf32> to vector<16x5xf32>
    %438 = tpu.concatenate %436, %437 in 1 : vector<16x27xf32>, vector<16x5xf32> -> vector<16x32xf32>
    %c8_219 = arith.constant 8 : index
    %c640_220 = arith.constant 640 : index
    %439 = vector.load %arg4[%c8_219, %c640_220] : memref<9x672xf32, #tpu.memory_space<vmem>>, vector<1x32xf32>
    %440 = vector.broadcast %439 : vector<1x32xf32> to vector<16x32xf32>
    %441 = arith.mulf %438, %440 : vector<16x32xf32>
    %442 = tpu.concatenate %399, %405, %411, %417, %393, %423, %429, %435, %441 in 0 : vector<16x32xf32>, vector<16x32xf32>, vector<16x32xf32>, vector<16x32xf32>, vector<16x32xf32>, vector<16x32xf32>, vector<16x32xf32>, vector<16x32xf32>, vector<16x32xf32> -> vector<144x32xf32>
    %c144 = arith.constant 144 : index
    %c0_221 = arith.constant 0 : index
    %443 = vector.load %arg1[%c144, %c0_221] : memref<208x288xf32, #tpu.memory_space<vmem>>, vector<32x144xf32>
    %cst_222 = arith.constant dense<0.000000e+00> : vector<32x32xf32>
    %444 = tpu.matmul %443, %442, %cst_222 {dimension_numbers = #tpu.dot_dimension_numbers<[1], [0], [0], [1], [0, 0, 1, 1], [], []>} : vector<32x144xf32>, vector<144x32xf32>, vector<32x32xf32> -> vector<32x32xf32>
    %cst_223 = arith.constant dense<0.000000e+00> : vector<32xf32>
    %445 = vector.multi_reduction <add>, %444, %cst_223 [1] : vector<32x32xf32> to vector<32xf32>
    %446 = vector.shape_cast %445 : vector<32xf32> to vector<32x1xf32>
    %cst_224 = arith.constant 3.200000e+01 : f32
    %447 = vector.broadcast %cst_224 : f32 to vector<32x1xf32>
    %448 = arith.divf %446, %447 : vector<32x1xf32>
    %449 = vector.broadcast %448 : vector<32x1xf32> to vector<32x32xf32>
    %450 = arith.subf %444, %449 : vector<32x32xf32>
    %451 = arith.mulf %450, %450 : vector<32x32xf32>
    %cst_225 = arith.constant dense<0.000000e+00> : vector<32xf32>
    %452 = vector.multi_reduction <add>, %451, %cst_225 [1] : vector<32x32xf32> to vector<32xf32>
    %453 = vector.shape_cast %452 : vector<32xf32> to vector<32x1xf32>
    %cst_226 = arith.constant 3.200000e+01 : f32
    %454 = vector.broadcast %cst_226 : f32 to vector<32x1xf32>
    %455 = arith.divf %453, %454 : vector<32x1xf32>
    %cst_227 = arith.constant 9.99999974E-6 : f32
    %456 = vector.broadcast %cst_227 : f32 to vector<32x1xf32>
    %457 = arith.addf %455, %456 : vector<32x1xf32>
    %458 = math.rsqrt %457 : vector<32x1xf32>
    %c0_228 = arith.constant 0 : index
    %c12 = arith.constant 12 : index
    %459 = vector.load %arg3[%c0_228, %c12] : memref<32x19xf32, #tpu.memory_space<vmem>>, vector<32x1xf32>
    %460 = arith.mulf %458, %459 : vector<32x1xf32>
    %461 = vector.broadcast %460 : vector<32x1xf32> to vector<32x32xf32>
    %462 = arith.mulf %450, %461 : vector<32x32xf32>
    %c0_229 = arith.constant 0 : index
    %c13 = arith.constant 13 : index
    %463 = vector.load %arg3[%c0_229, %c13] : memref<32x19xf32, #tpu.memory_space<vmem>>, vector<32x1xf32>
    %464 = vector.broadcast %463 : vector<32x1xf32> to vector<32x32xf32>
    %465 = arith.addf %462, %464 : vector<32x32xf32>
    %cst_230 = arith.constant 0.000000e+00 : f32
    %466 = vector.broadcast %cst_230 : f32 to vector<32x32xf32>
    %467 = arith.maximumf %465, %466 : vector<32x32xf32>
    %468 = vector.extract_strided_slice %467 {offsets = [0, 27], sizes = [32, 5], strides = [1, 1]} : vector<32x32xf32> to vector<32x5xf32>
    %469 = vector.extract_strided_slice %467 {offsets = [0, 0], sizes = [32, 27], strides = [1, 1]} : vector<32x32xf32> to vector<32x27xf32>
    %470 = tpu.concatenate %468, %469 in 1 : vector<32x5xf32>, vector<32x27xf32> -> vector<32x32xf32>
    %c0_231 = arith.constant 0 : index
    %c640_232 = arith.constant 640 : index
    %471 = vector.load %arg4[%c0_231, %c640_232] : memref<9x672xf32, #tpu.memory_space<vmem>>, vector<1x32xf32>
    %472 = vector.broadcast %471 : vector<1x32xf32> to vector<32x32xf32>
    %473 = arith.mulf %470, %472 : vector<32x32xf32>
    %474 = vector.extract_strided_slice %467 {offsets = [0, 28], sizes = [32, 4], strides = [1, 1]} : vector<32x32xf32> to vector<32x4xf32>
    %475 = vector.extract_strided_slice %467 {offsets = [0, 0], sizes = [32, 28], strides = [1, 1]} : vector<32x32xf32> to vector<32x28xf32>
    %476 = tpu.concatenate %474, %475 in 1 : vector<32x4xf32>, vector<32x28xf32> -> vector<32x32xf32>
    %c1_233 = arith.constant 1 : index
    %c640_234 = arith.constant 640 : index
    %477 = vector.load %arg4[%c1_233, %c640_234] : memref<9x672xf32, #tpu.memory_space<vmem>>, vector<1x32xf32>
    %478 = vector.broadcast %477 : vector<1x32xf32> to vector<32x32xf32>
    %479 = arith.mulf %476, %478 : vector<32x32xf32>
    %480 = vector.extract_strided_slice %467 {offsets = [0, 29], sizes = [32, 3], strides = [1, 1]} : vector<32x32xf32> to vector<32x3xf32>
    %481 = vector.extract_strided_slice %467 {offsets = [0, 0], sizes = [32, 29], strides = [1, 1]} : vector<32x32xf32> to vector<32x29xf32>
    %482 = tpu.concatenate %480, %481 in 1 : vector<32x3xf32>, vector<32x29xf32> -> vector<32x32xf32>
    %c2_235 = arith.constant 2 : index
    %c640_236 = arith.constant 640 : index
    %483 = vector.load %arg4[%c2_235, %c640_236] : memref<9x672xf32, #tpu.memory_space<vmem>>, vector<1x32xf32>
    %484 = vector.broadcast %483 : vector<1x32xf32> to vector<32x32xf32>
    %485 = arith.mulf %482, %484 : vector<32x32xf32>
    %486 = vector.extract_strided_slice %467 {offsets = [0, 31], sizes = [32, 1], strides = [1, 1]} : vector<32x32xf32> to vector<32x1xf32>
    %487 = vector.extract_strided_slice %467 {offsets = [0, 0], sizes = [32, 31], strides = [1, 1]} : vector<32x32xf32> to vector<32x31xf32>
    %488 = tpu.concatenate %486, %487 in 1 : vector<32x1xf32>, vector<32x31xf32> -> vector<32x32xf32>
    %c3_237 = arith.constant 3 : index
    %c640_238 = arith.constant 640 : index
    %489 = vector.load %arg4[%c3_237, %c640_238] : memref<9x672xf32, #tpu.memory_space<vmem>>, vector<1x32xf32>
    %490 = vector.broadcast %489 : vector<1x32xf32> to vector<32x32xf32>
    %491 = arith.mulf %488, %490 : vector<32x32xf32>
    %492 = vector.extract_strided_slice %467 {offsets = [0, 1], sizes = [32, 31], strides = [1, 1]} : vector<32x32xf32> to vector<32x31xf32>
    %493 = vector.extract_strided_slice %467 {offsets = [0, 0], sizes = [32, 1], strides = [1, 1]} : vector<32x32xf32> to vector<32x1xf32>
    %494 = tpu.concatenate %492, %493 in 1 : vector<32x31xf32>, vector<32x1xf32> -> vector<32x32xf32>
    %c5_239 = arith.constant 5 : index
    %c640_240 = arith.constant 640 : index
    %495 = vector.load %arg4[%c5_239, %c640_240] : memref<9x672xf32, #tpu.memory_space<vmem>>, vector<1x32xf32>
    %496 = vector.broadcast %495 : vector<1x32xf32> to vector<32x32xf32>
    %497 = arith.mulf %494, %496 : vector<32x32xf32>
    %498 = vector.extract_strided_slice %467 {offsets = [0, 3], sizes = [32, 29], strides = [1, 1]} : vector<32x32xf32> to vector<32x29xf32>
    %499 = vector.extract_strided_slice %467 {offsets = [0, 0], sizes = [32, 3], strides = [1, 1]} : vector<32x32xf32> to vector<32x3xf32>
    %500 = tpu.concatenate %498, %499 in 1 : vector<32x29xf32>, vector<32x3xf32> -> vector<32x32xf32>
    %c6_241 = arith.constant 6 : index
    %c640_242 = arith.constant 640 : index
    %501 = vector.load %arg4[%c6_241, %c640_242] : memref<9x672xf32, #tpu.memory_space<vmem>>, vector<1x32xf32>
    %502 = vector.broadcast %501 : vector<1x32xf32> to vector<32x32xf32>
    %503 = arith.mulf %500, %502 : vector<32x32xf32>
    %504 = vector.extract_strided_slice %467 {offsets = [0, 4], sizes = [32, 28], strides = [1, 1]} : vector<32x32xf32> to vector<32x28xf32>
    %505 = vector.extract_strided_slice %467 {offsets = [0, 0], sizes = [32, 4], strides = [1, 1]} : vector<32x32xf32> to vector<32x4xf32>
    %506 = tpu.concatenate %504, %505 in 1 : vector<32x28xf32>, vector<32x4xf32> -> vector<32x32xf32>
    %c7_243 = arith.constant 7 : index
    %c640_244 = arith.constant 640 : index
    %507 = vector.load %arg4[%c7_243, %c640_244] : memref<9x672xf32, #tpu.memory_space<vmem>>, vector<1x32xf32>
    %508 = vector.broadcast %507 : vector<1x32xf32> to vector<32x32xf32>
    %509 = arith.mulf %506, %508 : vector<32x32xf32>
    %510 = vector.extract_strided_slice %467 {offsets = [0, 5], sizes = [32, 27], strides = [1, 1]} : vector<32x32xf32> to vector<32x27xf32>
    %511 = vector.extract_strided_slice %467 {offsets = [0, 0], sizes = [32, 5], strides = [1, 1]} : vector<32x32xf32> to vector<32x5xf32>
    %512 = tpu.concatenate %510, %511 in 1 : vector<32x27xf32>, vector<32x5xf32> -> vector<32x32xf32>
    %c8_245 = arith.constant 8 : index
    %c640_246 = arith.constant 640 : index
    %513 = vector.load %arg4[%c8_245, %c640_246] : memref<9x672xf32, #tpu.memory_space<vmem>>, vector<1x32xf32>
    %514 = vector.broadcast %513 : vector<1x32xf32> to vector<32x32xf32>
    %515 = arith.mulf %512, %514 : vector<32x32xf32>
    %516 = tpu.concatenate %473, %479, %485, %491, %467, %497, %503, %509, %515 in 0 : vector<32x32xf32>, vector<32x32xf32>, vector<32x32xf32>, vector<32x32xf32>, vector<32x32xf32>, vector<32x32xf32>, vector<32x32xf32>, vector<32x32xf32>, vector<32x32xf32> -> vector<288x32xf32>
    %c176 = arith.constant 176 : index
    %c0_247 = arith.constant 0 : index
    %517 = vector.load %arg1[%c176, %c0_247] : memref<208x288xf32, #tpu.memory_space<vmem>>, vector<32x288xf32>
    %cst_248 = arith.constant dense<0.000000e+00> : vector<32x32xf32>
    %518 = tpu.matmul %517, %516, %cst_248 {dimension_numbers = #tpu.dot_dimension_numbers<[1], [0], [0], [1], [0, 0, 1, 1], [], []>} : vector<32x288xf32>, vector<288x32xf32>, vector<32x32xf32> -> vector<32x32xf32>
    %c64_249 = arith.constant 64 : index
    %c0_250 = arith.constant 0 : index
    %519 = vector.load %arg2[%c64_249, %c0_250] : memref<106x32xf32, #tpu.memory_space<vmem>>, vector<32x16xf32>
    %cst_251 = arith.constant dense<0.000000e+00> : vector<32x32xf32>
    %520 = tpu.matmul %519, %319, %cst_251 {dimension_numbers = #tpu.dot_dimension_numbers<[1], [0], [0], [1], [0, 0, 1, 1], [], []>} : vector<32x16xf32>, vector<16x32xf32>, vector<32x32xf32> -> vector<32x32xf32>
    %521 = arith.addf %518, %520 : vector<32x32xf32>
    %cst_252 = arith.constant dense<0.000000e+00> : vector<32xf32>
    %522 = vector.multi_reduction <add>, %521, %cst_252 [1] : vector<32x32xf32> to vector<32xf32>
    %523 = vector.shape_cast %522 : vector<32xf32> to vector<32x1xf32>
    %cst_253 = arith.constant 3.200000e+01 : f32
    %524 = vector.broadcast %cst_253 : f32 to vector<32x1xf32>
    %525 = arith.divf %523, %524 : vector<32x1xf32>
    %526 = vector.broadcast %525 : vector<32x1xf32> to vector<32x32xf32>
    %527 = arith.subf %521, %526 : vector<32x32xf32>
    %528 = arith.mulf %527, %527 : vector<32x32xf32>
    %cst_254 = arith.constant dense<0.000000e+00> : vector<32xf32>
    %529 = vector.multi_reduction <add>, %528, %cst_254 [1] : vector<32x32xf32> to vector<32xf32>
    %530 = vector.shape_cast %529 : vector<32xf32> to vector<32x1xf32>
    %cst_255 = arith.constant 3.200000e+01 : f32
    %531 = vector.broadcast %cst_255 : f32 to vector<32x1xf32>
    %532 = arith.divf %530, %531 : vector<32x1xf32>
    %cst_256 = arith.constant 9.99999974E-6 : f32
    %533 = vector.broadcast %cst_256 : f32 to vector<32x1xf32>
    %534 = arith.addf %532, %533 : vector<32x1xf32>
    %535 = math.rsqrt %534 : vector<32x1xf32>
    %c0_257 = arith.constant 0 : index
    %c14 = arith.constant 14 : index
    %536 = vector.load %arg3[%c0_257, %c14] : memref<32x19xf32, #tpu.memory_space<vmem>>, vector<32x1xf32>
    %537 = arith.mulf %535, %536 : vector<32x1xf32>
    %538 = vector.broadcast %537 : vector<32x1xf32> to vector<32x32xf32>
    %539 = arith.mulf %527, %538 : vector<32x32xf32>
    %c0_258 = arith.constant 0 : index
    %c15 = arith.constant 15 : index
    %540 = vector.load %arg3[%c0_258, %c15] : memref<32x19xf32, #tpu.memory_space<vmem>>, vector<32x1xf32>
    %541 = vector.broadcast %540 : vector<32x1xf32> to vector<32x32xf32>
    %542 = arith.addf %539, %541 : vector<32x32xf32>
    %cst_259 = arith.constant 0.000000e+00 : f32
    %543 = vector.broadcast %cst_259 : f32 to vector<32x32xf32>
    %544 = arith.maximumf %542, %543 : vector<32x32xf32>
    %c0_260 = arith.constant 0 : index
    %c0_261 = arith.constant 0 : index
    %545 = vector.load %arg7[%c0_260, %c0_261] : memref<32x2xf32, #tpu.memory_space<vmem>>, vector<32x2xf32>
    %cst_262 = arith.constant dense<0.000000e+00> : vector<32x2xf32>
    %546 = tpu.matmul %544, %545, %cst_262 {dimension_numbers = #tpu.dot_dimension_numbers<[1], [0], [0], [1], [0, 0, 1, 1], [], []>} : vector<32x32xf32>, vector<32x2xf32>, vector<32x2xf32> -> vector<32x2xf32>
    %c96_263 = arith.constant 96 : index
    %c0_264 = arith.constant 0 : index
    %547 = vector.load %arg2[%c96_263, %c0_264] : memref<106x32xf32, #tpu.memory_space<vmem>>, vector<10x32xf32>
    %cst_265 = arith.constant dense<0.000000e+00> : vector<10x2xf32>
    %548 = tpu.matmul %547, %546, %cst_265 {dimension_numbers = #tpu.dot_dimension_numbers<[1], [0], [0], [1], [0, 0, 1, 1], [], []>} : vector<10x32xf32>, vector<32x2xf32>, vector<10x2xf32> -> vector<10x2xf32>
    %c0_266 = arith.constant 0 : index
    %c18 = arith.constant 18 : index
    %549 = vector.load %arg3[%c0_266, %c18] : memref<32x19xf32, #tpu.memory_space<vmem>>, vector<10x1xf32>
    %550 = vector.broadcast %549 : vector<10x1xf32> to vector<10x2xf32>
    %551 = arith.addf %548, %550 : vector<10x2xf32>
    %cst_267 = arith.constant dense<0xFF800000> : vector<2xf32>
    %552 = vector.multi_reduction <maximumf>, %551, %cst_267 [0] : vector<10x2xf32> to vector<2xf32>
    %553 = vector.shape_cast %552 : vector<2xf32> to vector<1x2xf32>
    %554 = vector.broadcast %553 : vector<1x2xf32> to vector<10x2xf32>
    %555 = arith.subf %551, %554 : vector<10x2xf32>
    %556 = math.exp %555 : vector<10x2xf32>
    %cst_268 = arith.constant dense<0.000000e+00> : vector<2xf32>
    %557 = vector.multi_reduction <add>, %556, %cst_268 [0] : vector<10x2xf32> to vector<2xf32>
    %558 = vector.shape_cast %557 : vector<2xf32> to vector<1x2xf32>
    %559 = math.log %558 : vector<1x2xf32>
    %560 = arith.addf %559, %553 : vector<1x2xf32>
    %561 = vector.broadcast %560 : vector<1x2xf32> to vector<10x2xf32>
    %562 = arith.subf %551, %561 : vector<10x2xf32>
    %c0_269 = arith.constant 0 : index
    %c0_270 = arith.constant 0 : index
    %563 = vector.load %arg8[%c0_269, %c0_270] : memref<10x2xf32, #tpu.memory_space<vmem>>, vector<10x2xf32>
    tpu.vector_store %arg8[%c0_269, %c0_270], %562 {strides = array<i32>} : memref<10x2xf32, #tpu.memory_space<vmem>>, vector<10x2xf32>,
    return
  }
}

</mosaic_0001>

<llo_original>
// kernel: net1_forward.1
$region0: #{net1_forward.1}
  #allocation0 [shape = 'u32[]', space=smem, size = 0x4, offset = 0x4, fixed_abs, tag = 'smem constant byte address 0x4 - core index']
  #allocation1 [shape = 'u32[72,128]{1,0:T(1,128)}', space=vmem, size = 0x9000, scoped, tag = 'internal scratch']
  %s0 = inlined_call_operand.vmem [shape: f32[8,512], index: 0, kind: input, shape index: {}]
  %s1 = inlined_call_operand.vmem [shape: f32[208,288], index: 1, kind: input, shape index: {}]
  %s2 = inlined_call_operand.vmem [shape: f32[106,32], index: 2, kind: input, shape index: {}]
  %s3 = inlined_call_operand.vmem [shape: f32[32,19], index: 3, kind: input, shape index: {}]
  %s4 = inlined_call_operand.vmem [shape: f32[9,672], index: 4, kind: input, shape index: {}]
  %s5 = inlined_call_operand.vmem [shape: f32[512,128], index: 5, kind: input, shape index: {}]
  %s6 = inlined_call_operand.vmem [shape: f32[128,32], index: 6, kind: input, shape index: {}]
  %s7 = inlined_call_operand.vmem [shape: f32[32,2], index: 7, kind: input, shape index: {}]
  %s8 = inlined_call_operand.vmem [shape: f32[10,2], index: 8, kind: output, shape index: {}]
  %s9 = sld [smem:[#allocation0]]
  $region42: #{net1_forward.1} parent=0
    _
  %s11 = ssub.s32 1, %s9
  %s12 = scalar_select 0, %s11, %s9
  // Predicated region
  $region2: #{net1_forward.1} parent=0 // pred_check
    _
  $region3: #{net1_forward.1} parent=0 // pred_check_branch
    %14 = sbr.rel (0) target = $region5
  $region4: #{net1_forward.1} parent=0 // pred_region
    _
  $region5: #{net1_forward.1} parent=0 // pred_fallthru
    _
  // Predicated region
  $region6: #{net1_forward.1} parent=0 // pred_check
    _
  $region7: #{net1_forward.1} parent=0 // pred_check_branch
    %16 = sbr.rel (0) target = $region9
  $region8: #{net1_forward.1} parent=0 // pred_region
    _
  $region9: #{net1_forward.1} parent=0 // pred_fallthru
    _
  // Predicated region
  $region10: #{net1_forward.1} parent=0 // pred_check
    _
  $region11: #{net1_forward.1} parent=0 // pred_check_branch
    %18 = sbr.rel (0) target = $region13
  $region12: #{net1_forward.1} parent=0 // pred_region
    _
  $region13: #{net1_forward.1} parent=0 // pred_fallthru
    _
  // Predicated region
  $region14: #{net1_forward.1} parent=0 // pred_check
    _
  $region15: #{net1_forward.1} parent=0 // pred_check_branch
    %20 = sbr.rel (0) target = $region17
  $region16: #{net1_forward.1} parent=0 // pred_region
    _
  $region17: #{net1_forward.1} parent=0 // pred_fallthru
    _
  // Predicated region
  $region18: #{net1_forward.1} parent=0 // pred_check
    _
  $region19: #{net1_forward.1} parent=0 // pred_check_branch
    %22 = sbr.rel (0) target = $region21
  $region20: #{net1_forward.1} parent=0 // pred_region
    _
  $region21: #{net1_forward.1} parent=0 // pred_fallthru
    _
  // Predicated region
  $region22: #{net1_forward.1} parent=0 // pred_check
    _
  $region23: #{net1_forward.1} parent=0 // pred_check_branch
    %24 = sbr.rel (0) target = $region25
  $region24: #{net1_forward.1} parent=0 // pred_region
    _
  $region25: #{net1_forward.1} parent=0 // pred_fallthru
    _
  // Predicated region
  $region26: #{net1_forward.1} parent=0 // pred_check
    _
  $region27: #{net1_forward.1} parent=0 // pred_check_branch
    %26 = sbr.rel (0) target = $region29
  $region28: #{net1_forward.1} parent=0 // pred_region
    _
  $region29: #{net1_forward.1} parent=0 // pred_fallthru
    _
  // Predicated region
  $region30: #{net1_forward.1} parent=0 // pred_check
    _
  $region31: #{net1_forward.1} parent=0 // pred_check_branch
    %28 = sbr.rel (0) target = $region33
  $region32: #{net1_forward.1} parent=0 // pred_region
    _
  $region33: #{net1_forward.1} parent=0 // pred_fallthru
    _
  %v29 = vld [vmem:[%s0] sm:$0xff]
  %v30 = vld [vmem:[%s0 + $0x8] sm:$0xff]
  %v31 = vld [vmem:[%s0 + $0x10] sm:$0xff]
  %v32 = vld [vmem:[%s0 + $0x18] sm:$0xff]
  %33 = vrot.lane.b32.xlu0 %v29, 17
  %v34 = vpop.permute.xlu0 %33
  %35 = vrot.lane.b32.xlu0 %v30, 17
  %v36 = vpop.permute.xlu0 %35
  %37 = vrot.lane.b32.xlu0 %v31, 17
  %v38 = vpop.permute.xlu0 %37
  %39 = vrot.lane.b32.xlu0 %v32, 17
  %v40 = vpop.permute.xlu0 %39
  %v41 = vlaneseq
  %v42 = vand.u32 %v41, 127
  %vm43 = vcmp.lt.s32.totalorder %v42, 17
  %v44 = vsel %vm43, %v38, %v40
  %v45 = vsel %vm43, %v36, %v38
  %v46 = vsel %vm43, %v34, %v36
  %v47 = vsel %vm43, %v40, %v34
  %v48 = vld [vmem:[%s4] ss:$8 sm:$0xf]
  %v50 = vperm.slane %v48, 0
  %v51 = vperm.slane %v48, 1
  %v52 = vperm.slane %v48, 2
  %v53 = vperm.slane %v48, 3
  %v58 = vmul.f32 %v47, %v50
  %v59 = vmul.f32 %v46, %v51
  %v60 = vmul.f32 %v45, %v52
  %v61 = vmul.f32 %v44, %v53
  %62 = vrot.lane.b32.xlu0 %v29, 16
  %v63 = vpop.permute.xlu0 %62
  %64 = vrot.lane.b32.xlu0 %v30, 16
  %v65 = vpop.permute.xlu0 %64
  %66 = vrot.lane.b32.xlu0 %v31, 16
  %v67 = vpop.permute.xlu0 %66
  %68 = vrot.lane.b32.xlu0 %v32, 16
  %v69 = vpop.permute.xlu0 %68
  %vm70 = vcmp.lt.s32.totalorder %v42, 16
  %v71 = vsel %vm70, %v67, %v69
  %v72 = vsel %vm70, %v65, %v67
  %v73 = vsel %vm70, %v63, %v65
  %v74 = vsel %vm70, %v69, %v63
  %s75 = scalar_lea.vmem %s4, 1
  %v76 = vld [vmem:[%s75] ss:$8 sm:$0xf]
  %v78 = vperm.slane %v76, 0
  %v79 = vperm.slane %v76, 1
  %v80 = vperm.slane %v76, 2
  %v81 = vperm.slane %v76, 3
  %v86 = vmul.f32 %v74, %v78
  %v87 = vmul.f32 %v73, %v79
  %v88 = vmul.f32 %v72, %v80
  %v89 = vmul.f32 %v71, %v81
  %90 = vrot.lane.b32.xlu0 %v29, 15
  %v91 = vpop.permute.xlu0 %90
  %92 = vrot.lane.b32.xlu0 %v30, 15
  %v93 = vpop.permute.xlu0 %92
  %94 = vrot.lane.b32.xlu0 %v31, 15
  %v95 = vpop.permute.xlu0 %94
  %96 = vrot.lane.b32.xlu0 %v32, 15
  %v97 = vpop.permute.xlu0 %96
  %vm98 = vcmp.lt.s32.totalorder %v42, 15
  %v99 = vsel %vm98, %v95, %v97
  %v100 = vsel %vm98, %v93, %v95
  %v101 = vsel %vm98, %v91, %v93
  %v102 = vsel %vm98, %v97, %v91
  %s103 = scalar_lea.vmem %s4, 2
  %v104 = vld [vmem:[%s103] ss:$8 sm:$0xf]
  %v106 = vperm.slane %v104, 0
  %v107 = vperm.slane %v104, 1
  %v108 = vperm.slane %v104, 2
  %v109 = vperm.slane %v104, 3
  %v114 = vmul.f32 %v102, %v106
  %v115 = vmul.f32 %v101, %v107
  %v116 = vmul.f32 %v100, %v108
  %v117 = vmul.f32 %v99, %v109
  %118 = vrot.lane.b32.xlu0 %v29, 1
  %v119 = vpop.permute.xlu0 %118
  %120 = vrot.lane.b32.xlu0 %v30, 1
  %v121 = vpop.permute.xlu0 %120
  %122 = vrot.lane.b32.xlu0 %v31, 1
  %v123 = vpop.permute.xlu0 %122
  %124 = vrot.lane.b32.xlu0 %v32, 1
  %v125 = vpop.permute.xlu0 %124
  %vm126 = vcmp.lt.s32.totalorder %v42, 1
  %v127 = vsel %vm126, %v123, %v125
  %v128 = vsel %vm126, %v121, %v123
  %v129 = vsel %vm126, %v119, %v121
  %v130 = vsel %vm126, %v125, %v119
  %s131 = scalar_lea.vmem %s4, 3
  %v132 = vld [vmem:[%s131] ss:$8 sm:$0xf]
  %v134 = vperm.slane %v132, 0
  %v135 = vperm.slane %v132, 1
  %v136 = vperm.slane %v132, 2
  %v137 = vperm.slane %v132, 3
  %v142 = vmul.f32 %v130, %v134
  %v143 = vmul.f32 %v129, %v135
  %v144 = vmul.f32 %v128, %v136
  %v145 = vmul.f32 %v127, %v137
  %146 = vrot.lane.b32.xlu0 %v29, 127
  %v147 = vpop.permute.xlu0 %146
  %148 = vrot.lane.b32.xlu0 %v30, 127
  %v149 = vpop.permute.xlu0 %148
  %150 = vrot.lane.b32.xlu0 %v31, 127
  %v151 = vpop.permute.xlu0 %150
  %152 = vrot.lane.b32.xlu0 %v32, 127
  %v153 = vpop.permute.xlu0 %152
  %vm154 = vcmp.lt.s32.totalorder %v42, 127
  %v155 = vsel %vm154, %v151, %v153
  %v156 = vsel %vm154, %v149, %v151
  %v157 = vsel %vm154, %v147, %v149
  %v158 = vsel %vm154, %v153, %v147
  %s159 = scalar_lea.vmem %s4, 5
  %v160 = vld [vmem:[%s159] ss:$8 sm:$0xf]
  %v162 = vperm.slane %v160, 0
  %v163 = vperm.slane %v160, 1
  %v164 = vperm.slane %v160, 2
  %v165 = vperm.slane %v160, 3
  %v170 = vmul.f32 %v157, %v162
  %v171 = vmul.f32 %v156, %v163
  %v172 = vmul.f32 %v155, %v164
  %v173 = vmul.f32 %v158, %v165
  %174 = vrot.lane.b32.xlu0 %v29, 113
  %v175 = vpop.permute.xlu0 %174
  %176 = vrot.lane.b32.xlu0 %v30, 113
  %v177 = vpop.permute.xlu0 %176
  %178 = vrot.lane.b32.xlu0 %v31, 113
  %v179 = vpop.permute.xlu0 %178
  %180 = vrot.lane.b32.xlu0 %v32, 113
  %v181 = vpop.permute.xlu0 %180
  %vm182 = vcmp.lt.s32.totalorder %v42, 113
  %v183 = vsel %vm182, %v179, %v181
  %v184 = vsel %vm182, %v177, %v179
  %v185 = vsel %vm182, %v175, %v177
  %v186 = vsel %vm182, %v181, %v175
  %s187 = scalar_lea.vmem %s4, 6
  %v188 = vld [vmem:[%s187] ss:$8 sm:$0xf]
  %v190 = vperm.slane %v188, 0
  %v191 = vperm.slane %v188, 1
  %v192 = vperm.slane %v188, 2
  %v193 = vperm.slane %v188, 3
  %v198 = vmul.f32 %v185, %v190
  %v199 = vmul.f32 %v184, %v191
  %v200 = vmul.f32 %v183, %v192
  %v201 = vmul.f32 %v186, %v193
  %202 = vrot.lane.b32.xlu0 %v29, 112
  %v203 = vpop.permute.xlu0 %202
  %204 = vrot.lane.b32.xlu0 %v30, 112
  %v205 = vpop.permute.xlu0 %204
  %206 = vrot.lane.b32.xlu0 %v31, 112
  %v207 = vpop.permute.xlu0 %206
  %208 = vrot.lane.b32.xlu0 %v32, 112
  %v209 = vpop.permute.xlu0 %208
  %vm210 = vcmp.lt.s32.totalorder %v42, 112
  %v211 = vsel %vm210, %v207, %v209
  %v212 = vsel %vm210, %v205, %v207
  %v213 = vsel %vm210, %v203, %v205
  %v214 = vsel %vm210, %v209, %v203
  %s215 = scalar_lea.vmem %s4, 7
  %v216 = vld [vmem:[%s215] ss:$8 sm:$0xf]
  %v218 = vperm.slane %v216, 0
  %v219 = vperm.slane %v216, 1
  %v220 = vperm.slane %v216, 2
  %v221 = vperm.slane %v216, 3
  %v226 = vmul.f32 %v213, %v218
  %v227 = vmul.f32 %v212, %v219
  %v228 = vmul.f32 %v211, %v220
  %v229 = vmul.f32 %v214, %v221
  %230 = vrot.lane.b32.xlu0 %v29, 111
  %v231 = vpop.permute.xlu0 %230
  %232 = vrot.lane.b32.xlu0 %v30, 111
  %v233 = vpop.permute.xlu0 %232
  %234 = vrot.lane.b32.xlu0 %v31, 111
  %v235 = vpop.permute.xlu0 %234
  %236 = vrot.lane.b32.xlu0 %v32, 111
  %v237 = vpop.permute.xlu0 %236
  %vm238 = vcmp.lt.s32.totalorder %v42, 111
  %v239 = vsel %vm238, %v235, %v237
  %v240 = vsel %vm238, %v233, %v235
  %v241 = vsel %vm238, %v231, %v233
  %v242 = vsel %vm238, %v237, %v231
  %s243 = scalar_lea.vmem %s4, 48
  %v244 = vld [vmem:[%s243] ss:$8 sm:$0xf]
  %v246 = vperm.slane %v244, 0
  %v247 = vperm.slane %v244, 1
  %v248 = vperm.slane %v244, 2
  %v249 = vperm.slane %v244, 3
  %v254 = vmul.f32 %v241, %v246
  %v255 = vmul.f32 %v240, %v247
  %v256 = vmul.f32 %v239, %v248
  %v257 = vmul.f32 %v242, %v249
  %v258 = vld [vmem:[%s1] sm:$0xff]
  %v259 = vld [vmem:[%s1 + $0x18] sm:$0xff]
  %vm260 = vcmask 588800
  %v262 = vsel %vm260, %v258, 0
  %v265 = vsel %vm260, %v259, 0
  %267 = vmatpush.msra.mxu0 0.0
  %268 = vmatpush.msra.mxu0 0.0
  %269 = vmatpush.msra.mxu0 0.0
  %270 = vmatpush.msra.mxu0 0.0
  %271 = vmatpush.msra.mxu0 0.0
  %272 = vmatpush.msra.mxu0 0.0
  %273 = vmatpush.msra.mxu0 0.0
  %274 = vmatpush.msra.mxu0 %v254
  %275 = vmatpush.msra.mxu0 %v226
  %276 = vmatpush.msra.mxu0 %v198
  %277 = vmatpush.msra.mxu0 %v170
  %278 = vmatpush.msra.mxu0 %v29
  %279 = vmatpush.msra.mxu0 %v142
  %280 = vmatpush.msra.mxu0 %v114
  %281 = vmatpush.msra.mxu0 %v86
  %282 = vmatpush.msra.mxu0 %v58
  %283 = vmatmul.f32.gmra.mxu0 %v262
  %v284 = vpop.f32.mrf.mxu0
  %v285 = vadd.f32 0.0, %v284
  %286 = vmatmul.f32.gmra.mxu0 %v265
  %v287 = vpop.f32.mrf.mxu0
  %v288 = vadd.f32 0.0, %v287
  %289 = vdwg.mxu0
  %290 = vmatpush.msra.mxu0 0.0
  %291 = vmatpush.msra.mxu0 0.0
  %292 = vmatpush.msra.mxu0 0.0
  %293 = vmatpush.msra.mxu0 0.0
  %294 = vmatpush.msra.mxu0 0.0
  %295 = vmatpush.msra.mxu0 0.0
  %296 = vmatpush.msra.mxu0 0.0
  %297 = vmatpush.msra.mxu0 %v255
  %298 = vmatpush.msra.mxu0 %v227
  %299 = vmatpush.msra.mxu0 %v199
  %300 = vmatpush.msra.mxu0 %v171
  %301 = vmatpush.msra.mxu0 %v30
  %302 = vmatpush.msra.mxu0 %v143
  %303 = vmatpush.msra.mxu0 %v115
  %304 = vmatpush.msra.mxu0 %v87
  %305 = vmatpush.msra.mxu0 %v59
  %306 = vmatmul.f32.gmra.mxu0 %v262
  %v307 = vpop.f32.mrf.mxu0
  %v308 = vadd.f32 0.0, %v307
  %309 = vmatmul.f32.gmra.mxu0 %v265
  %v310 = vpop.f32.mrf.mxu0
  %v311 = vadd.f32 0.0, %v310
  %312 = vdwg.mxu0
  %313 = vmatpush.msra.mxu0 0.0
  %314 = vmatpush.msra.mxu0 0.0
  %315 = vmatpush.msra.mxu0 0.0
  %316 = vmatpush.msra.mxu0 0.0
  %317 = vmatpush.msra.mxu0 0.0
  %318 = vmatpush.msra.mxu0 0.0
  %319 = vmatpush.msra.mxu0 0.0
  %320 = vmatpush.msra.mxu0 %v256
  %321 = vmatpush.msra.mxu0 %v228
  %322 = vmatpush.msra.mxu0 %v200
  %323 = vmatpush.msra.mxu0 %v172
  %324 = vmatpush.msra.mxu0 %v31
  %325 = vmatpush.msra.mxu0 %v144
  %326 = vmatpush.msra.mxu0 %v116
  %327 = vmatpush.msra.mxu0 %v88
  %328 = vmatpush.msra.mxu0 %v60
  %329 = vmatmul.f32.gmra.mxu0 %v262
  %v330 = vpop.f32.mrf.mxu0
  %v331 = vadd.f32 0.0, %v330
  %332 = vmatmul.f32.gmra.mxu0 %v265
  %v333 = vpop.f32.mrf.mxu0
  %v334 = vadd.f32 0.0, %v333
  %335 = vdwg.mxu0
  %336 = vmatpush.msra.mxu0 0.0
  %337 = vmatpush.msra.mxu0 0.0
  %338 = vmatpush.msra.mxu0 0.0
  %339 = vmatpush.msra.mxu0 0.0
  %340 = vmatpush.msra.mxu0 0.0
  %341 = vmatpush.msra.mxu0 0.0
  %342 = vmatpush.msra.mxu0 0.0
  %343 = vmatpush.msra.mxu0 %v257
  %344 = vmatpush.msra.mxu0 %v229
  %345 = vmatpush.msra.mxu0 %v201
  %346 = vmatpush.msra.mxu0 %v173
  %347 = vmatpush.msra.mxu0 %v32
  %348 = vmatpush.msra.mxu0 %v145
  %349 = vmatpush.msra.mxu0 %v117
  %350 = vmatpush.msra.mxu0 %v89
  %351 = vmatpush.msra.mxu0 %v61
  %352 = vmatmul.f32.gmra.mxu0 %v262
  %v353 = vpop.f32.mrf.mxu0
  %v354 = vadd.f32 0.0, %v353
  %355 = vmatmul.f32.gmra.mxu0 %v265
  %v356 = vpop.f32.mrf.mxu0
  %v357 = vadd.f32 0.0, %v356
  %358 = vdwg.mxu0
  %v359 = vadd.f32 %v285, %v308
  %v360 = vadd.f32 %v359, %v331
  %v361 = vadd.f32 %v360, %v354
  %362 = vadd.xlane.f32.xlu0 %v361
  %v363 = vpop.xlane.xlu0 %362
  %v364 = vadd.f32 %v288, %v311
  %v365 = vadd.f32 %v364, %v334
  %v366 = vadd.f32 %v365, %v357
  %367 = vadd.xlane.f32.xlu0 %v366
  %v368 = vpop.xlane.xlu0 %367
  %v369 = vrcp.pop 512.0
  %v370 = vmul.f32 512.0, %v369
  %v371 = vsub.f32 1.0, %v370
  %v372 = vmul.f32 %v369, %v371
  %v373 = vadd.f32 %v369, %v372
  %vm374 = vweird.f32 %v369
  %v375 = vsel %vm374, %v369, %v373
  %v376 = vmul.f32 %v363, %v375
  %v377 = vmul.f32 %v368, %v375
  %v378 = vsub.f32 %v285, %v376
  %v379 = vsub.f32 %v308, %v376
  %v380 = vsub.f32 %v331, %v376
  %v381 = vsub.f32 %v354, %v376
  %v382 = vsub.f32 %v288, %v377
  %v383 = vsub.f32 %v311, %v377
  %v384 = vsub.f32 %v334, %v377
  %v385 = vsub.f32 %v357, %v377
  %v386 = vmul.f32 %v378, %v378
  %v387 = vmul.f32 %v379, %v379
  %v388 = vmul.f32 %v380, %v380
  %v389 = vmul.f32 %v381, %v381
  %v390 = vmul.f32 %v382, %v382
  %v391 = vmul.f32 %v383, %v383
  %v392 = vmul.f32 %v384, %v384
  %v393 = vmul.f32 %v385, %v385
  %v394 = vadd.f32 %v386, %v387
  %v395 = vadd.f32 %v394, %v388
  %v396 = vadd.f32 %v395, %v389
  %397 = vadd.xlane.f32.xlu0 %v396
  %v398 = vpop.xlane.xlu0 %397
  %v399 = vadd.f32 %v390, %v391
  %v400 = vadd.f32 %v399, %v392
  %v401 = vadd.f32 %v400, %v393
  %402 = vadd.xlane.f32.xlu0 %v401
  %v403 = vpop.xlane.xlu0 %402
  %v404 = vmul.f32 %v398, %v375
  %v405 = vmul.f32 %v403, %v375
  %v406 = vadd.f32 %v404, 1e-05
  %v407 = vadd.f32 %v405, 1e-05
  %v408 = vrsqrt.pop %v406
  %v409 = vmul.f32 %v408, %v406
  %v410 = vmul.f32 %v409, %v408
  %v411 = vmul.f32 0.5, %v410
  %v412 = vsub.f32 1.5, %v411
  %v413 = vmul.f32 %v408, %v412
  %vm414 = vweird.f32 %v406
  %vm415 = vweird.f32 %v408
  %vm416 = vmor %vm414, %vm415
  %v417 = vsel %vm416, %v408, %v413
  %v418 = vrsqrt.pop %v407
  %v419 = vmul.f32 %v418, %v407
  %v420 = vmul.f32 %v419, %v418
  %v421 = vmul.f32 0.5, %v420
  %v422 = vsub.f32 1.5, %v421
  %v423 = vmul.f32 %v418, %v422
  %vm424 = vweird.f32 %v407
  %vm425 = vweird.f32 %v418
  %vm426 = vmor %vm424, %vm425
  %v427 = vsel %vm426, %v418, %v423
  %v428 = vld [vmem:[%s3] sm:$0xff]
  %v429 = vld [vmem:[%s3 + $0x8] sm:$0xff]
  %v430 = vmul.f32 %v417, %v428
  %v431 = vmul.f32 %v427, %v429
  %433 = vset.pattern.permute.xlu0 0
  %434 = vperm.xlu0 %433, %v430
  %v435 = vpop.permute.xlu0 %434
  %438 = vset.pattern.permute.xlu0 0
  %439 = vperm.xlu0 %438, %v431
  %v440 = vpop.permute.xlu0 %439
  %v442 = vmul.f32 %v378, %v435
  %v443 = vmul.f32 %v379, %v435
  %v444 = vmul.f32 %v380, %v435
  %v445 = vmul.f32 %v381, %v435
  %v446 = vmul.f32 %v382, %v440
  %v447 = vmul.f32 %v383, %v440
  %v448 = vmul.f32 %v384, %v440
  %v449 = vmul.f32 %v385, %v440
  %451 = vset.pattern.permute.xlu0 1
  %452 = vperm.xlu0 %451, %v428
  %v453 = vpop.permute.xlu0 %452
  %456 = vset.pattern.permute.xlu0 1
  %457 = vperm.xlu0 %456, %v429
  %v458 = vpop.permute.xlu0 %457
  %v460 = vadd.f32 %v442, %v453
  %v461 = vadd.f32 %v443, %v453
  %v462 = vadd.f32 %v444, %v453
  %v463 = vadd.f32 %v445, %v453
  %v464 = vadd.f32 %v446, %v458
  %v465 = vadd.f32 %v447, %v458
  %v466 = vadd.f32 %v448, %v458
  %v467 = vadd.f32 %v449, %v458
  %v468 = vmax.f32 %v460, 0.0
  %v469 = vmax.f32 %v461, 0.0
  %v470 = vmax.f32 %v462, 0.0
  %v471 = vmax.f32 %v463, 0.0
  %v472 = vmax.f32 %v464, 0.0
  %v473 = vmax.f32 %v465, 0.0
  %v474 = vmax.f32 %v466, 0.0
  %v475 = vmax.f32 %v467, 0.0
  %476 = vrot.lane.b32.xlu0 %v468, 17
  %v477 = vpop.permute.xlu0 %476
  %478 = vrot.lane.b32.xlu0 %v472, 17
  %v479 = vpop.permute.xlu0 %478
  %480 = vrot.lane.b32.xlu0 %v469, 17
  %v481 = vpop.permute.xlu0 %480
  %482 = vrot.lane.b32.xlu0 %v473, 17
  %v483 = vpop.permute.xlu0 %482
  %484 = vrot.lane.b32.xlu0 %v470, 17
  %v485 = vpop.permute.xlu0 %484
  %486 = vrot.lane.b32.xlu0 %v474, 17
  %v487 = vpop.permute.xlu0 %486
  %488 = vrot.lane.b32.xlu0 %v471, 17
  %v489 = vpop.permute.xlu0 %488
  %490 = vrot.lane.b32.xlu0 %v475, 17
  %v491 = vpop.permute.xlu0 %490
  %v492 = vsel %vm43, %v485, %v489
  %v493 = vsel %vm43, %v487, %v491
  %v494 = vsel %vm43, %v481, %v485
  %v495 = vsel %vm43, %v483, %v487
  %v496 = vsel %vm43, %v477, %v481
  %v497 = vsel %vm43, %v479, %v483
  %v498 = vsel %vm43, %v489, %v477
  %v499 = vsel %vm43, %v491, %v479
  %v500 = vmul.f32 %v498, %v50
  %v501 = vmul.f32 %v496, %v51
  %v502 = vmul.f32 %v494, %v52
  %v503 = vmul.f32 %v492, %v53
  %v504 = vmul.f32 %v499, %v50
  %v505 = vmul.f32 %v497, %v51
  %v506 = vmul.f32 %v495, %v52
  %v507 = vmul.f32 %v493, %v53
  %508 = vrot.lane.b32.xlu0 %v468, 16
  %v509 = vpop.permute.xlu0 %508
  %510 = vrot.lane.b32.xlu0 %v472, 16
  %v511 = vpop.permute.xlu0 %510
  %512 = vrot.lane.b32.xlu0 %v469, 16
  %v513 = vpop.permute.xlu0 %512
  %514 = vrot.lane.b32.xlu0 %v473, 16
  %v515 = vpop.permute.xlu0 %514
  %516 = vrot.lane.b32.xlu0 %v470, 16
  %v517 = vpop.permute.xlu0 %516
  %518 = vrot.lane.b32.xlu0 %v474, 16
  %v519 = vpop.permute.xlu0 %518
  %520 = vrot.lane.b32.xlu0 %v471, 16
  %v521 = vpop.permute.xlu0 %520
  %522 = vrot.lane.b32.xlu0 %v475, 16
  %v523 = vpop.permute.xlu0 %522
  %v524 = vsel %vm70, %v517, %v521
  %v525 = vsel %vm70, %v519, %v523
  %v526 = vsel %vm70, %v513, %v517
  %v527 = vsel %vm70, %v515, %v519
  %v528 = vsel %vm70, %v509, %v513
  %v529 = vsel %vm70, %v511, %v515
  %v530 = vsel %vm70, %v521, %v509
  %v531 = vsel %vm70, %v523, %v511
  %v532 = vmul.f32 %v530, %v78
  %v533 = vmul.f32 %v528, %v79
  %v534 = vmul.f32 %v526, %v80
  %v535 = vmul.f32 %v524, %v81
  %v536 = vmul.f32 %v531, %v78
  %v537 = vmul.f32 %v529, %v79
  %v538 = vmul.f32 %v527, %v80
  %v539 = vmul.f32 %v525, %v81
  %540 = vrot.lane.b32.xlu0 %v468, 15
  %v541 = vpop.permute.xlu0 %540
  %542 = vrot.lane.b32.xlu0 %v472, 15
  %v543 = vpop.permute.xlu0 %542
  %544 = vrot.lane.b32.xlu0 %v469, 15
  %v545 = vpop.permute.xlu0 %544
  %546 = vrot.lane.b32.xlu0 %v473, 15
  %v547 = vpop.permute.xlu0 %546
  %548 = vrot.lane.b32.xlu0 %v470, 15
  %v549 = vpop.permute.xlu0 %548
  %550 = vrot.lane.b32.xlu0 %v474, 15
  %v551 = vpop.permute.xlu0 %550
  %552 = vrot.lane.b32.xlu0 %v471, 15
  %v553 = vpop.permute.xlu0 %552
  %554 = vrot.lane.b32.xlu0 %v475, 15
  %v555 = vpop.permute.xlu0 %554
  %v556 = vsel %vm98, %v549, %v553
  %v557 = vsel %vm98, %v551, %v555
  %v558 = vsel %vm98, %v545, %v549
  %v559 = vsel %vm98, %v547, %v551
  %v560 = vsel %vm98, %v541, %v545
  %v561 = vsel %vm98, %v543, %v547
  %v562 = vsel %vm98, %v553, %v541
  %v563 = vsel %vm98, %v555, %v543
  %v564 = vmul.f32 %v562, %v106
  %v565 = vmul.f32 %v560, %v107
  %v566 = vmul.f32 %v558, %v108
  %v567 = vmul.f32 %v556, %v109
  %v568 = vmul.f32 %v563, %v106
  %v569 = vmul.f32 %v561, %v107
  %v570 = vmul.f32 %v559, %v108
  %v571 = vmul.f32 %v557, %v109
  %572 = vrot.lane.b32.xlu0 %v468, 1
  %v573 = vpop.permute.xlu0 %572
  %574 = vrot.lane.b32.xlu0 %v472, 1
  %v575 = vpop.permute.xlu0 %574
  %576 = vrot.lane.b32.xlu0 %v469, 1
  %v577 = vpop.permute.xlu0 %576
  %578 = vrot.lane.b32.xlu0 %v473, 1
  %v579 = vpop.permute.xlu0 %578
  %580 = vrot.lane.b32.xlu0 %v470, 1
  %v581 = vpop.permute.xlu0 %580
  %582 = vrot.lane.b32.xlu0 %v474, 1
  %v583 = vpop.permute.xlu0 %582
  %584 = vrot.lane.b32.xlu0 %v471, 1
  %v585 = vpop.permute.xlu0 %584
  %586 = vrot.lane.b32.xlu0 %v475, 1
  %v587 = vpop.permute.xlu0 %586
  %v588 = vsel %vm126, %v581, %v585
  %v589 = vsel %vm126, %v583, %v587
  %v590 = vsel %vm126, %v577, %v581
  %v591 = vsel %vm126, %v579, %v583
  %v592 = vsel %vm126, %v573, %v577
  %v593 = vsel %vm126, %v575, %v579
  %v594 = vsel %vm126, %v585, %v573
  %v595 = vsel %vm126, %v587, %v575
  %v596 = vmul.f32 %v594, %v134
  %v597 = vmul.f32 %v592, %v135
  %v598 = vmul.f32 %v590, %v136
  %v599 = vmul.f32 %v588, %v137
  %v600 = vmul.f32 %v595, %v134
  %v601 = vmul.f32 %v593, %v135
  %v602 = vmul.f32 %v591, %v136
  %v603 = vmul.f32 %v589, %v137
  %604 = vrot.lane.b32.xlu0 %v468, 127
  %v605 = vpop.permute.xlu0 %604
  %606 = vrot.lane.b32.xlu0 %v472, 127
  %v607 = vpop.permute.xlu0 %606
  %608 = vrot.lane.b32.xlu0 %v469, 127
  %v609 = vpop.permute.xlu0 %608
  %610 = vrot.lane.b32.xlu0 %v473, 127
  %v611 = vpop.permute.xlu0 %610
  %612 = vrot.lane.b32.xlu0 %v470, 127
  %v613 = vpop.permute.xlu0 %612
  %614 = vrot.lane.b32.xlu0 %v474, 127
  %v615 = vpop.permute.xlu0 %614
  %616 = vrot.lane.b32.xlu0 %v471, 127
  %v617 = vpop.permute.xlu0 %616
  %618 = vrot.lane.b32.xlu0 %v475, 127
  %v619 = vpop.permute.xlu0 %618
  %v620 = vsel %vm154, %v613, %v617
  %v621 = vsel %vm154, %v615, %v619
  %v622 = vsel %vm154, %v609, %v613
  %v623 = vsel %vm154, %v611, %v615
  %v624 = vsel %vm154, %v605, %v609
  %v625 = vsel %vm154, %v607, %v611
  %v626 = vsel %vm154, %v617, %v605
  %v627 = vsel %vm154, %v619, %v607
  %v628 = vmul.f32 %v624, %v162
  %v629 = vmul.f32 %v622, %v163
  %v630 = vmul.f32 %v620, %v164
  %v631 = vmul.f32 %v626, %v165
  %v632 = vmul.f32 %v625, %v162
  %v633 = vmul.f32 %v623, %v163
  %v634 = vmul.f32 %v621, %v164
  %v635 = vmul.f32 %v627, %v165
  %636 = vrot.lane.b32.xlu0 %v468, 113
  %v637 = vpop.permute.xlu0 %636
  %638 = vrot.lane.b32.xlu0 %v472, 113
  %v639 = vpop.permute.xlu0 %638
  %640 = vrot.lane.b32.xlu0 %v469, 113
  %v641 = vpop.permute.xlu0 %640
  %642 = vrot.lane.b32.xlu0 %v473, 113
  %v643 = vpop.permute.xlu0 %642
  %644 = vrot.lane.b32.xlu0 %v470, 113
  %v645 = vpop.permute.xlu0 %644
  %646 = vrot.lane.b32.xlu0 %v474, 113
  %v647 = vpop.permute.xlu0 %646
  %648 = vrot.lane.b32.xlu0 %v471, 113
  %v649 = vpop.permute.xlu0 %648
  %650 = vrot.lane.b32.xlu0 %v475, 113
  %v651 = vpop.permute.xlu0 %650
  %v652 = vsel %vm182, %v645, %v649
  %v653 = vsel %vm182, %v647, %v651
  %v654 = vsel %vm182, %v641, %v645
  %v655 = vsel %vm182, %v643, %v647
  %v656 = vsel %vm182, %v637, %v641
  %v657 = vsel %vm182, %v639, %v643
  %v658 = vsel %vm182, %v649, %v637
  %v659 = vsel %vm182, %v651, %v639
  %v660 = vmul.f32 %v656, %v190
  %v661 = vmul.f32 %v654, %v191
  %v662 = vmul.f32 %v652, %v192
  %v663 = vmul.f32 %v658, %v193
  %v664 = vmul.f32 %v657, %v190
  %v665 = vmul.f32 %v655, %v191
  %v666 = vmul.f32 %v653, %v192
  %v667 = vmul.f32 %v659, %v193
  %668 = vrot.lane.b32.xlu0 %v468, 112
  %v669 = vpop.permute.xlu0 %668
  %670 = vrot.lane.b32.xlu0 %v472, 112
  %v671 = vpop.permute.xlu0 %670
  %672 = vrot.lane.b32.xlu0 %v469, 112
  %v673 = vpop.permute.xlu0 %672
  %674 = vrot.lane.b32.xlu0 %v473, 112
  %v675 = vpop.permute.xlu0 %674
  %676 = vrot.lane.b32.xlu0 %v470, 112
  %v677 = vpop.permute.xlu0 %676
  %678 = vrot.lane.b32.xlu0 %v474, 112
  %v679 = vpop.permute.xlu0 %678
  %680 = vrot.lane.b32.xlu0 %v471, 112
  %v681 = vpop.permute.xlu0 %680
  %682 = vrot.lane.b32.xlu0 %v475, 112
  %v683 = vpop.permute.xlu0 %682
  %v684 = vsel %vm210, %v677, %v681
  %v685 = vsel %vm210, %v679, %v683
  %v686 = vsel %vm210, %v673, %v677
  %v687 = vsel %vm210, %v675, %v679
  %v688 = vsel %vm210, %v669, %v673
  %v689 = vsel %vm210, %v671, %v675
  %v690 = vsel %vm210, %v681, %v669
  %v691 = vsel %vm210, %v683, %v671
  %v692 = vmul.f32 %v688, %v218
  %v693 = vmul.f32 %v686, %v219
  %v694 = vmul.f32 %v684, %v220
  %v695 = vmul.f32 %v690, %v221
  %v696 = vmul.f32 %v689, %v218
  %v697 = vmul.f32 %v687, %v219
  %v698 = vmul.f32 %v685, %v220
  %v699 = vmul.f32 %v691, %v221
  %700 = vrot.lane.b32.xlu0 %v468, 111
  %v701 = vpop.permute.xlu0 %700
  %702 = vrot.lane.b32.xlu0 %v472, 111
  %v703 = vpop.permute.xlu0 %702
  %704 = vrot.lane.b32.xlu0 %v469, 111
  %v705 = vpop.permute.xlu0 %704
  %706 = vrot.lane.b32.xlu0 %v473, 111
  %v707 = vpop.permute.xlu0 %706
  %708 = vrot.lane.b32.xlu0 %v470, 111
  %v709 = vpop.permute.xlu0 %708
  %710 = vrot.lane.b32.xlu0 %v474, 111
  %v711 = vpop.permute.xlu0 %710
  %712 = vrot.lane.b32.xlu0 %v471, 111
  %v713 = vpop.permute.xlu0 %712
  %714 = vrot.lane.b32.xlu0 %v475, 111
  %v715 = vpop.permute.xlu0 %714
  %v716 = vsel %vm238, %v709, %v713
  %v717 = vsel %vm238, %v711, %v715
  %v718 = vsel %vm238, %v705, %v709
  %v719 = vsel %vm238, %v707, %v711
  %v720 = vsel %vm238, %v701, %v705
  %v721 = vsel %vm238, %v703, %v707
  %v722 = vsel %vm238, %v713, %v701
  %v723 = vsel %vm238, %v715, %v703
  %v724 = vmul.f32 %v720, %v246
  %v725 = vmul.f32 %v718, %v247
  %v726 = vmul.f32 %v716, %v248
  %v727 = vmul.f32 %v722, %v249
  %v728 = vmul.f32 %v721, %v246
  %v729 = vmul.f32 %v719, %v247
  %v730 = vmul.f32 %v717, %v248
  %v731 = vmul.f32 %v723, %v249
  %v732 = vld [vmem:[%s1 + $0x30] sm:$0xff]
  %v733 = vld [vmem:[%s1 + $0x38] sm:$0xff]
  %v734 = vld [vmem:[%s1 + $0x48] sm:$0xff]
  %v735 = vld [vmem:[%s1 + $0x50] sm:$0xff]
  %v736 = vld [vmem:[%s1 + $0x60] sm:$0xff]
  %v737 = vld [vmem:[%s1 + $0x68] sm:$0xff]
  %v738 = vld [vmem:[%s1 + $0x78] sm:$0xff]
  %v739 = vld [vmem:[%s1 + $0x80] sm:$0xff]
  %vm740 = vcmask 130048
  %v742 = vsel %vm740, %v733, 0
  %v745 = vsel %vm740, %v735, 0
  %v748 = vsel %vm740, %v737, 0
  %v751 = vsel %vm740, %v739, 0
  %753 = vmatpush.msra.mxu0 %v696
  %754 = vmatpush.msra.mxu0 %v692
  %755 = vmatpush.msra.mxu0 %v664
  %756 = vmatpush.msra.mxu0 %v660
  %757 = vmatpush.msra.mxu0 %v632
  %758 = vmatpush.msra.mxu0 %v628
  %759 = vmatpush.msra.mxu0 %v472
  %760 = vmatpush.msra.mxu0 %v468
  %761 = vmatpush.msra.mxu0 %v600
  %762 = vmatpush.msra.mxu0 %v596
  %763 = vmatpush.msra.mxu0 %v568
  %764 = vmatpush.msra.mxu0 %v564
  %765 = vmatpush.msra.mxu0 %v536
  %766 = vmatpush.msra.mxu0 %v532
  %767 = vmatpush.msra.mxu0 %v504
  %768 = vmatpush.msra.mxu0 %v500
  %769 = vmatmul.f32.gmra.mxu0 %v732
  %v770 = vpop.f32.mrf.mxu0
  %v771 = vadd.f32 0.0, %v770
  %772 = vmatmul.f32.gmra.mxu0 %v734
  %v773 = vpop.f32.mrf.mxu0
  %v774 = vadd.f32 0.0, %v773
  %775 = vmatmul.f32.gmra.mxu0 %v736
  %v776 = vpop.f32.mrf.mxu0
  %v777 = vadd.f32 0.0, %v776
  %778 = vmatmul.f32.gmra.mxu0 %v738
  %v779 = vpop.f32.mrf.mxu0
  %v780 = vadd.f32 0.0, %v779
  %781 = vdwg.mxu0
  %782 = vmatpush.msra.mxu0 0.0
  %783 = vmatpush.msra.mxu0 0.0
  %784 = vmatpush.msra.mxu0 0.0
  %785 = vmatpush.msra.mxu0 0.0
  %786 = vmatpush.msra.mxu0 0.0
  %787 = vmatpush.msra.mxu0 0.0
  %788 = vmatpush.msra.mxu0 0.0
  %789 = vmatpush.msra.mxu0 0.0
  %790 = vmatpush.msra.mxu0 0.0
  %791 = vmatpush.msra.mxu0 0.0
  %792 = vmatpush.msra.mxu0 0.0
  %793 = vmatpush.msra.mxu0 0.0
  %794 = vmatpush.msra.mxu0 0.0
  %795 = vmatpush.msra.mxu0 0.0
  %796 = vmatpush.msra.mxu0 %v728
  %797 = vmatpush.msra.mxu0 %v724
  %798 = vmatmul.f32.gmra.mxu0 %v742
  %v799 = vpop.f32.mrf.mxu0
  %v800 = vadd.f32 %v771, %v799
  %801 = vmatmul.f32.gmra.mxu0 %v745
  %v802 = vpop.f32.mrf.mxu0
  %v803 = vadd.f32 %v774, %v802
  %804 = vmatmul.f32.gmra.mxu0 %v748
  %v805 = vpop.f32.mrf.mxu0
  %v806 = vadd.f32 %v777, %v805
  %807 = vmatmul.f32.gmra.mxu0 %v751
  %v808 = vpop.f32.mrf.mxu0
  %v809 = vadd.f32 %v780, %v808
  %810 = vdwg.mxu0
  %811 = vmatpush.msra.mxu0 %v697
  %812 = vmatpush.msra.mxu0 %v693
  %813 = vmatpush.msra.mxu0 %v665
  %814 = vmatpush.msra.mxu0 %v661
  %815 = vmatpush.msra.mxu0 %v633
  %816 = vmatpush.msra.mxu0 %v629
  %817 = vmatpush.msra.mxu0 %v473
  %818 = vmatpush.msra.mxu0 %v469
  %819 = vmatpush.msra.mxu0 %v601
  %820 = vmatpush.msra.mxu0 %v597
  %821 = vmatpush.msra.mxu0 %v569
  %822 = vmatpush.msra.mxu0 %v565
  %823 = vmatpush.msra.mxu0 %v537
  %824 = vmatpush.msra.mxu0 %v533
  %825 = vmatpush.msra.mxu0 %v505
  %826 = vmatpush.msra.mxu0 %v501
  %827 = vmatmul.f32.gmra.mxu0 %v732
  %v828 = vpop.f32.mrf.mxu0
  %v829 = vadd.f32 0.0, %v828
  %830 = vmatmul.f32.gmra.mxu0 %v734
  %v831 = vpop.f32.mrf.mxu0
  %v832 = vadd.f32 0.0, %v831
  %833 = vmatmul.f32.gmra.mxu0 %v736
  %v834 = vpop.f32.mrf.mxu0
  %v835 = vadd.f32 0.0, %v834
  %836 = vmatmul.f32.gmra.mxu0 %v738
  %v837 = vpop.f32.mrf.mxu0
  %v838 = vadd.f32 0.0, %v837
  %839 = vdwg.mxu0
  %840 = vmatpush.msra.mxu0 0.0
  %841 = vmatpush.msra.mxu0 0.0
  %842 = vmatpush.msra.mxu0 0.0
  %843 = vmatpush.msra.mxu0 0.0
  %844 = vmatpush.msra.mxu0 0.0
  %845 = vmatpush.msra.mxu0 0.0
  %846 = vmatpush.msra.mxu0 0.0
  %847 = vmatpush.msra.mxu0 0.0
  %848 = vmatpush.msra.mxu0 0.0
  %849 = vmatpush.msra.mxu0 0.0
  %850 = vmatpush.msra.mxu0 0.0
  %851 = vmatpush.msra.mxu0 0.0
  %852 = vmatpush.msra.mxu0 0.0
  %853 = vmatpush.msra.mxu0 0.0
  %854 = vmatpush.msra.mxu0 %v729
  %855 = vmatpush.msra.mxu0 %v725
  %856 = vmatmul.f32.gmra.mxu0 %v742
  %v857 = vpop.f32.mrf.mxu0
  %v858 = vadd.f32 %v829, %v857
  %859 = vmatmul.f32.gmra.mxu0 %v745
  %v860 = vpop.f32.mrf.mxu0
  %v861 = vadd.f32 %v832, %v860
  %862 = vmatmul.f32.gmra.mxu0 %v748
  %v863 = vpop.f32.mrf.mxu0
  %v864 = vadd.f32 %v835, %v863
  %865 = vmatmul.f32.gmra.mxu0 %v751
  %v866 = vpop.f32.mrf.mxu0
  %v867 = vadd.f32 %v838, %v866
  %868 = vdwg.mxu0
  %869 = vmatpush.msra.mxu0 %v698
  %870 = vmatpush.msra.mxu0 %v694
  %871 = vmatpush.msra.mxu0 %v666
  %872 = vmatpush.msra.mxu0 %v662
  %873 = vmatpush.msra.mxu0 %v634
  %874 = vmatpush.msra.mxu0 %v630
  %875 = vmatpush.msra.mxu0 %v474
  %876 = vmatpush.msra.mxu0 %v470
  %877 = vmatpush.msra.mxu0 %v602
  %878 = vmatpush.msra.mxu0 %v598
  %879 = vmatpush.msra.mxu0 %v570
  %880 = vmatpush.msra.mxu0 %v566
  %881 = vmatpush.msra.mxu0 %v538
  %882 = vmatpush.msra.mxu0 %v534
  %883 = vmatpush.msra.mxu0 %v506
  %884 = vmatpush.msra.mxu0 %v502
  %885 = vmatmul.f32.gmra.mxu0 %v732
  %v886 = vpop.f32.mrf.mxu0
  %v887 = vadd.f32 0.0, %v886
  %888 = vmatmul.f32.gmra.mxu0 %v734
  %v889 = vpop.f32.mrf.mxu0
  %v890 = vadd.f32 0.0, %v889
  %891 = vmatmul.f32.gmra.mxu0 %v736
  %v892 = vpop.f32.mrf.mxu0
  %v893 = vadd.f32 0.0, %v892
  %894 = vmatmul.f32.gmra.mxu0 %v738
  %v895 = vpop.f32.mrf.mxu0
  %v896 = vadd.f32 0.0, %v895
  %897 = vdwg.mxu0
  %898 = vmatpush.msra.mxu0 0.0
  %899 = vmatpush.msra.mxu0 0.0
  %900 = vmatpush.msra.mxu0 0.0
  %901 = vmatpush.msra.mxu0 0.0
  %902 = vmatpush.msra.mxu0 0.0
  %903 = vmatpush.msra.mxu0 0.0
  %904 = vmatpush.msra.mxu0 0.0
  %905 = vmatpush.msra.mxu0 0.0
  %906 = vmatpush.msra.mxu0 0.0
  %907 = vmatpush.msra.mxu0 0.0
  %908 = vmatpush.msra.mxu0 0.0
  %909 = vmatpush.msra.mxu0 0.0
  %910 = vmatpush.msra.mxu0 0.0
  %911 = vmatpush.msra.mxu0 0.0
  %912 = vmatpush.msra.mxu0 %v730
  %913 = vmatpush.msra.mxu0 %v726
  %914 = vmatmul.f32.gmra.mxu0 %v742
  %v915 = vpop.f32.mrf.mxu0
  %v916 = vadd.f32 %v887, %v915
  %917 = vmatmul.f32.gmra.mxu0 %v745
  %v918 = vpop.f32.mrf.mxu0
  %v919 = vadd.f32 %v890, %v918
  %920 = vmatmul.f32.gmra.mxu0 %v748
  %v921 = vpop.f32.mrf.mxu0
  %v922 = vadd.f32 %v893, %v921
  %923 = vmatmul.f32.gmra.mxu0 %v751
  %v924 = vpop.f32.mrf.mxu0
  %v925 = vadd.f32 %v896, %v924
  %926 = vdwg.mxu0
  %927 = vmatpush.msra.mxu0 %v699
  %928 = vmatpush.msra.mxu0 %v695
  %929 = vmatpush.msra.mxu0 %v667
  %930 = vmatpush.msra.mxu0 %v663
  %931 = vmatpush.msra.mxu0 %v635
  %932 = vmatpush.msra.mxu0 %v631
  %933 = vmatpush.msra.mxu0 %v475
  %934 = vmatpush.msra.mxu0 %v471
  %935 = vmatpush.msra.mxu0 %v603
  %936 = vmatpush.msra.mxu0 %v599
  %937 = vmatpush.msra.mxu0 %v571
  %938 = vmatpush.msra.mxu0 %v567
  %939 = vmatpush.msra.mxu0 %v539
  %940 = vmatpush.msra.mxu0 %v535
  %941 = vmatpush.msra.mxu0 %v507
  %942 = vmatpush.msra.mxu0 %v503
  %943 = vmatmul.f32.gmra.mxu0 %v732
  %v944 = vpop.f32.mrf.mxu0
  %v945 = vadd.f32 0.0, %v944
  %946 = vmatmul.f32.gmra.mxu0 %v734
  %v947 = vpop.f32.mrf.mxu0
  %v948 = vadd.f32 0.0, %v947
  %949 = vmatmul.f32.gmra.mxu0 %v736
  %v950 = vpop.f32.mrf.mxu0
  %v951 = vadd.f32 0.0, %v950
  %952 = vmatmul.f32.gmra.mxu0 %v738
  %v953 = vpop.f32.mrf.mxu0
  %v954 = vadd.f32 0.0, %v953
  %955 = vdwg.mxu0
  %956 = vmatpush.msra.mxu0 0.0
  %957 = vmatpush.msra.mxu0 0.0
  %958 = vmatpush.msra.mxu0 0.0
  %959 = vmatpush.msra.mxu0 0.0
  %960 = vmatpush.msra.mxu0 0.0
  %961 = vmatpush.msra.mxu0 0.0
  %962 = vmatpush.msra.mxu0 0.0
  %963 = vmatpush.msra.mxu0 0.0
  %964 = vmatpush.msra.mxu0 0.0
  %965 = vmatpush.msra.mxu0 0.0
  %966 = vmatpush.msra.mxu0 0.0
  %967 = vmatpush.msra.mxu0 0.0
  %968 = vmatpush.msra.mxu0 0.0
  %969 = vmatpush.msra.mxu0 0.0
  %970 = vmatpush.msra.mxu0 %v731
  %971 = vmatpush.msra.mxu0 %v727
  %972 = vmatmul.f32.gmra.mxu0 %v742
  %v973 = vpop.f32.mrf.mxu0
  %v974 = vadd.f32 %v945, %v973
  %975 = vmatmul.f32.gmra.mxu0 %v745
  %v976 = vpop.f32.mrf.mxu0
  %v977 = vadd.f32 %v948, %v976
  %978 = vmatmul.f32.gmra.mxu0 %v748
  %v979 = vpop.f32.mrf.mxu0
  %v980 = vadd.f32 %v951, %v979
  %981 = vmatmul.f32.gmra.mxu0 %v751
  %v982 = vpop.f32.mrf.mxu0
  %v983 = vadd.f32 %v954, %v982
  %984 = vdwg.mxu0
  %v985 = vadd.f32 %v800, %v858
  %v986 = vadd.f32 %v985, %v916
  %v987 = vadd.f32 %v986, %v974
  %988 = vadd.xlane.f32.xlu0 %v987
  %v989 = vpop.xlane.xlu0 %988
  %v990 = vadd.f32 %v803, %v861
  %v991 = vadd.f32 %v990, %v919
  %v992 = vadd.f32 %v991, %v977
  %993 = vadd.xlane.f32.xlu0 %v992
  %v994 = vpop.xlane.xlu0 %993
  %v995 = vadd.f32 %v806, %v864
  %v996 = vadd.f32 %v995, %v922
  %v997 = vadd.f32 %v996, %v980
  %998 = vadd.xlane.f32.xlu0 %v997
  %v999 = vpop.xlane.xlu0 %998
  %v1000 = vadd.f32 %v809, %v867
  %v1001 = vadd.f32 %v1000, %v925
  %v1002 = vadd.f32 %v1001, %v983
  %1003 = vadd.xlane.f32.xlu0 %v1002
  %v1004 = vpop.xlane.xlu0 %1003
  %v1005 = vmul.f32 %v989, %v375
  %v1006 = vmul.f32 %v994, %v375
  %v1007 = vmul.f32 %v999, %v375
  %v1008 = vmul.f32 %v1004, %v375
  %v1009 = vsub.f32 %v800, %v1005
  %v1010 = vsub.f32 %v858, %v1005
  %v1011 = vsub.f32 %v916, %v1005
  %v1012 = vsub.f32 %v974, %v1005
  %v1013 = vsub.f32 %v803, %v1006
  %v1014 = vsub.f32 %v861, %v1006
  %v1015 = vsub.f32 %v919, %v1006
  %v1016 = vsub.f32 %v977, %v1006
  %v1017 = vsub.f32 %v806, %v1007
  %v1018 = vsub.f32 %v864, %v1007
  %v1019 = vsub.f32 %v922, %v1007
  %v1020 = vsub.f32 %v980, %v1007
  %v1021 = vsub.f32 %v809, %v1008
  %v1022 = vsub.f32 %v867, %v1008
  %v1023 = vsub.f32 %v925, %v1008
  %v1024 = vsub.f32 %v983, %v1008
  %v1025 = vmul.f32 %v1009, %v1009
  %v1026 = vmul.f32 %v1010, %v1010
  %v1027 = vmul.f32 %v1011, %v1011
  %v1028 = vmul.f32 %v1012, %v1012
  %v1029 = vmul.f32 %v1013, %v1013
  %v1030 = vmul.f32 %v1014, %v1014
  %v1031 = vmul.f32 %v1015, %v1015
  %v1032 = vmul.f32 %v1016, %v1016
  %v1033 = vmul.f32 %v1017, %v1017
  %v1034 = vmul.f32 %v1018, %v1018
  %v1035 = vmul.f32 %v1019, %v1019
  %v1036 = vmul.f32 %v1020, %v1020
  %v1037 = vmul.f32 %v1021, %v1021
  %v1038 = vmul.f32 %v1022, %v1022
  %v1039 = vmul.f32 %v1023, %v1023
  %v1040 = vmul.f32 %v1024, %v1024
  %v1041 = vadd.f32 %v1025, %v1026
  %v1042 = vadd.f32 %v1041, %v1027
  %v1043 = vadd.f32 %v1042, %v1028
  %1044 = vadd.xlane.f32.xlu0 %v1043
  %v1045 = vpop.xlane.xlu0 %1044
  %v1046 = vadd.f32 %v1029, %v1030
  %v1047 = vadd.f32 %v1046, %v1031
  %v1048 = vadd.f32 %v1047, %v1032
  %1049 = vadd.xlane.f32.xlu0 %v1048
  %v1050 = vpop.xlane.xlu0 %1049
  %v1051 = vadd.f32 %v1033, %v1034
  %v1052 = vadd.f32 %v1051, %v1035
  %v1053 = vadd.f32 %v1052, %v1036
  %1054 = vadd.xlane.f32.xlu0 %v1053
  %v1055 = vpop.xlane.xlu0 %1054
  %v1056 = vadd.f32 %v1037, %v1038
  %v1057 = vadd.f32 %v1056, %v1039
  %v1058 = vadd.f32 %v1057, %v1040
  %1059 = vadd.xlane.f32.xlu0 %v1058
  %v1060 = vpop.xlane.xlu0 %1059
  %v1061 = vmul.f32 %v1045, %v375
  %v1062 = vmul.f32 %v1050, %v375
  %v1063 = vmul.f32 %v1055, %v375
  %v1064 = vmul.f32 %v1060, %v375
  %v1065 = vadd.f32 %v1061, 1e-05
  %v1066 = vadd.f32 %v1062, 1e-05
  %v1067 = vadd.f32 %v1063, 1e-05
  %v1068 = vadd.f32 %v1064, 1e-05
  %v1069 = vrsqrt.pop %v1065
  %v1070 = vmul.f32 %v1069, %v1065
  %v1071 = vmul.f32 %v1070, %v1069
  %v1072 = vmul.f32 0.5, %v1071
  %v1073 = vsub.f32 1.5, %v1072
  %v1074 = vmul.f32 %v1069, %v1073
  %vm1075 = vweird.f32 %v1065
  %vm1076 = vweird.f32 %v1069
  %vm1077 = vmor %vm1075, %vm1076
  %v1078 = vsel %vm1077, %v1069, %v1074
  %v1079 = vrsqrt.pop %v1066
  %v1080 = vmul.f32 %v1079, %v1066
  %v1081 = vmul.f32 %v1080, %v1079
  %v1082 = vmul.f32 0.5, %v1081
  %v1083 = vsub.f32 1.5, %v1082
  %v1084 = vmul.f32 %v1079, %v1083
  %vm1085 = vweird.f32 %v1066
  %vm1086 = vweird.f32 %v1079
  %vm1087 = vmor %vm1085, %vm1086
  %v1088 = vsel %vm1087, %v1079, %v1084
  %v1089 = vrsqrt.pop %v1067
  %v1090 = vmul.f32 %v1089, %v1067
  %v1091 = vmul.f32 %v1090, %v1089
  %v1092 = vmul.f32 0.5, %v1091
  %v1093 = vsub.f32 1.5, %v1092
  %v1094 = vmul.f32 %v1089, %v1093
  %vm1095 = vweird.f32 %v1067
  %vm1096 = vweird.f32 %v1089
  %vm1097 = vmor %vm1095, %vm1096
  %v1098 = vsel %vm1097, %v1089, %v1094
  %v1099 = vrsqrt.pop %v1068
  %v1100 = vmul.f32 %v1099, %v1068
  %v1101 = vmul.f32 %v1100, %v1099
  %v1102 = vmul.f32 0.5, %v1101
  %v1103 = vsub.f32 1.5, %v1102
  %v1104 = vmul.f32 %v1099, %v1103
  %vm1105 = vweird.f32 %v1068
  %vm1106 = vweird.f32 %v1099
  %vm1107 = vmor %vm1105, %vm1106
  %v1108 = vsel %vm1107, %v1099, %v1104
  %v1109 = vld [vmem:[%s3] sm:$0xff]
  %v1110 = vld [vmem:[%s3 + $0x8] sm:$0xff]
  %v1111 = vld [vmem:[%s3 + $0x10] sm:$0xff]
  %v1112 = vld [vmem:[%s3 + $0x18] sm:$0xff]
  %v1113 = vmul.f32 %v1078, %v1109
  %v1114 = vmul.f32 %v1088, %v1110
  %v1115 = vmul.f32 %v1098, %v1111
  %v1116 = vmul.f32 %v1108, %v1112
  %1118 = vset.pattern.permute.xlu0 2
  %1119 = vperm.xlu0 %1118, %v1113
  %v1120 = vpop.permute.xlu0 %1119
  %1123 = vset.pattern.permute.xlu0 2
  %1124 = vperm.xlu0 %1123, %v1114
  %v1125 = vpop.permute.xlu0 %1124
  %1128 = vset.pattern.permute.xlu0 2
  %1129 = vperm.xlu0 %1128, %v1115
  %v1130 = vpop.permute.xlu0 %1129
  %1133 = vset.pattern.permute.xlu0 2
  %1134 = vperm.xlu0 %1133, %v1116
  %v1135 = vpop.permute.xlu0 %1134
  %v1137 = vmul.f32 %v1009, %v1120
  %v1138 = vmul.f32 %v1010, %v1120
  %v1139 = vmul.f32 %v1011, %v1120
  %v1140 = vmul.f32 %v1012, %v1120
  %v1141 = vmul.f32 %v1013, %v1125
  %v1142 = vmul.f32 %v1014, %v1125
  %v1143 = vmul.f32 %v1015, %v1125
  %v1144 = vmul.f32 %v1016, %v1125
  %v1145 = vmul.f32 %v1017, %v1130
  %v1146 = vmul.f32 %v1018, %v1130
  %v1147 = vmul.f32 %v1019, %v1130
  %v1148 = vmul.f32 %v1020, %v1130
  %v1149 = vmul.f32 %v1021, %v1135
  %v1150 = vmul.f32 %v1022, %v1135
  %v1151 = vmul.f32 %v1023, %v1135
  %v1152 = vmul.f32 %v1024, %v1135
  %1154 = vset.pattern.permute.xlu0 3
  %1155 = vperm.xlu0 %1154, %v1109
  %v1156 = vpop.permute.xlu0 %1155
  %1159 = vset.pattern.permute.xlu0 3
  %1160 = vperm.xlu0 %1159, %v1110
  %v1161 = vpop.permute.xlu0 %1160
  %1164 = vset.pattern.permute.xlu0 3
  %1165 = vperm.xlu0 %1164, %v1111
  %v1166 = vpop.permute.xlu0 %1165
  %1169 = vset.pattern.permute.xlu0 3
  %1170 = vperm.xlu0 %1169, %v1112
  %v1171 = vpop.permute.xlu0 %1170
  %v1173 = vadd.f32 %v1137, %v1156
  %v1174 = vadd.f32 %v1138, %v1156
  %v1175 = vadd.f32 %v1139, %v1156
  %v1176 = vadd.f32 %v1140, %v1156
  %v1177 = vadd.f32 %v1141, %v1161
  %v1178 = vadd.f32 %v1142, %v1161
  %v1179 = vadd.f32 %v1143, %v1161
  %v1180 = vadd.f32 %v1144, %v1161
  %v1181 = vadd.f32 %v1145, %v1166
  %v1182 = vadd.f32 %v1146, %v1166
  %v1183 = vadd.f32 %v1147, %v1166
  %v1184 = vadd.f32 %v1148, %v1166
  %v1185 = vadd.f32 %v1149, %v1171
  %v1186 = vadd.f32 %v1150, %v1171
  %v1187 = vadd.f32 %v1151, %v1171
  %v1188 = vadd.f32 %v1152, %v1171
  %v1189 = vmax.f32 %v1173, 0.0
  %v1190 = vmax.f32 %v1174, 0.0
  %v1191 = vmax.f32 %v1175, 0.0
  %v1192 = vmax.f32 %v1176, 0.0
  %v1193 = vmax.f32 %v1177, 0.0
  %v1194 = vmax.f32 %v1178, 0.0
  %v1195 = vmax.f32 %v1179, 0.0
  %v1196 = vmax.f32 %v1180, 0.0
  %v1197 = vmax.f32 %v1181, 0.0
  %v1198 = vmax.f32 %v1182, 0.0
  %v1199 = vmax.f32 %v1183, 0.0
  %v1200 = vmax.f32 %v1184, 0.0
  %v1201 = vmax.f32 %v1185, 0.0
  %v1202 = vmax.f32 %v1186, 0.0
  %v1203 = vmax.f32 %v1187, 0.0
  %v1204 = vmax.f32 %v1188, 0.0
  %v1205 = vld [vmem:[%s2] sm:$0xff]
  %v1206 = vld [vmem:[%s2 + $0x8] sm:$0xff]
  %1207 = vset.pattern.permute.xlu0 16
  %1208 = vperm.xlu0 %1207, %v428
  %v1209 = vpop.permute.xlu0 %1208
  %1211 = vset.pattern.permute.xlu0 16
  %1212 = vperm.xlu0 %1211, %v429
  %v1213 = vpop.permute.xlu0 %1212
  %vm1215 = vcmask 261120
  %v1217 = vsel %vm1215, %v1205, 0
  %v1220 = vsel %vm1215, %v1206, 0
  %1222 = vmatpush.msra.mxu0 0.0
  %1223 = vmatpush.msra.mxu0 0.0
  %1224 = vmatpush.msra.mxu0 0.0
  %1225 = vmatpush.msra.mxu0 0.0
  %1226 = vmatpush.msra.mxu0 0.0
  %1227 = vmatpush.msra.mxu0 0.0
  %1228 = vmatpush.msra.mxu0 0.0
  %1229 = vmatpush.msra.mxu0 0.0
  %1230 = vmatpush.msra.mxu0 0.0
  %1231 = vmatpush.msra.mxu0 0.0
  %1232 = vmatpush.msra.mxu0 0.0
  %1233 = vmatpush.msra.mxu0 0.0
  %1234 = vmatpush.msra.mxu0 %v1201
  %1235 = vmatpush.msra.mxu0 %v1197
  %1236 = vmatpush.msra.mxu0 %v1193
  %1237 = vmatpush.msra.mxu0 %v1189
  %1238 = vmatmul.f32.gmra.mxu0 %v1217
  %v1239 = vpop.f32.mrf.mxu0
  %v1240 = vadd.f32 %v1209, %v1239
  %1241 = vmatmul.f32.gmra.mxu0 %v1220
  %v1242 = vpop.f32.mrf.mxu0
  %v1243 = vadd.f32 %v1213, %v1242
  %1244 = vdwg.mxu0
  %1245 = vmatpush.msra.mxu0 0.0
  %1246 = vmatpush.msra.mxu0 0.0
  %1247 = vmatpush.msra.mxu0 0.0
  %1248 = vmatpush.msra.mxu0 0.0
  %1249 = vmatpush.msra.mxu0 0.0
  %1250 = vmatpush.msra.mxu0 0.0
  %1251 = vmatpush.msra.mxu0 0.0
  %1252 = vmatpush.msra.mxu0 0.0
  %1253 = vmatpush.msra.mxu0 0.0
  %1254 = vmatpush.msra.mxu0 0.0
  %1255 = vmatpush.msra.mxu0 0.0
  %1256 = vmatpush.msra.mxu0 0.0
  %1257 = vmatpush.msra.mxu0 %v1202
  %1258 = vmatpush.msra.mxu0 %v1198
  %1259 = vmatpush.msra.mxu0 %v1194
  %1260 = vmatpush.msra.mxu0 %v1190
  %1261 = vmatmul.f32.gmra.mxu0 %v1217
  %v1262 = vpop.f32.mrf.mxu0
  %v1263 = vadd.f32 %v1209, %v1262
  %1264 = vmatmul.f32.gmra.mxu0 %v1220
  %v1265 = vpop.f32.mrf.mxu0
  %v1266 = vadd.f32 %v1213, %v1265
  %1267 = vdwg.mxu0
  %1268 = vmatpush.msra.mxu0 0.0
  %1269 = vmatpush.msra.mxu0 0.0
  %1270 = vmatpush.msra.mxu0 0.0
  %1271 = vmatpush.msra.mxu0 0.0
  %1272 = vmatpush.msra.mxu0 0.0
  %1273 = vmatpush.msra.mxu0 0.0
  %1274 = vmatpush.msra.mxu0 0.0
  %1275 = vmatpush.msra.mxu0 0.0
  %1276 = vmatpush.msra.mxu0 0.0
  %1277 = vmatpush.msra.mxu0 0.0
  %1278 = vmatpush.msra.mxu0 0.0
  %1279 = vmatpush.msra.mxu0 0.0
  %1280 = vmatpush.msra.mxu0 %v1203
  %1281 = vmatpush.msra.mxu0 %v1199
  %1282 = vmatpush.msra.mxu0 %v1195
  %1283 = vmatpush.msra.mxu0 %v1191
  %1284 = vmatmul.f32.gmra.mxu0 %v1217
  %v1285 = vpop.f32.mrf.mxu0
  %v1286 = vadd.f32 %v1209, %v1285
  %1287 = vmatmul.f32.gmra.mxu0 %v1220
  %v1288 = vpop.f32.mrf.mxu0
  %v1289 = vadd.f32 %v1213, %v1288
  %1290 = vdwg.mxu0
  %1291 = vmatpush.msra.mxu0 0.0
  %1292 = vmatpush.msra.mxu0 0.0
  %1293 = vmatpush.msra.mxu0 0.0
  %1294 = vmatpush.msra.mxu0 0.0
  %1295 = vmatpush.msra.mxu0 0.0
  %1296 = vmatpush.msra.mxu0 0.0
  %1297 = vmatpush.msra.mxu0 0.0
  %1298 = vmatpush.msra.mxu0 0.0
  %1299 = vmatpush.msra.mxu0 0.0
  %1300 = vmatpush.msra.mxu0 0.0
  %1301 = vmatpush.msra.mxu0 0.0
  %1302 = vmatpush.msra.mxu0 0.0
  %1303 = vmatpush.msra.mxu0 %v1204
  %1304 = vmatpush.msra.mxu0 %v1200
  %1305 = vmatpush.msra.mxu0 %v1196
  %1306 = vmatpush.msra.mxu0 %v1192
  %1307 = vmatmul.f32.gmra.mxu0 %v1217
  %v1308 = vpop.f32.mrf.mxu0
  %v1309 = vadd.f32 %v1209, %v1308
  %1310 = vmatmul.f32.gmra.mxu0 %v1220
  %v1311 = vpop.f32.mrf.mxu0
  %v1312 = vadd.f32 %v1213, %v1311
  %1313 = vdwg.mxu0
  %1314 = vrot.lane.b32.xlu0 %v1240, 127
  %v1315 = vpop.permute.xlu0 %1314
  %1316 = vrot.lane.b32.xlu0 %v1243, 127
  %v1317 = vpop.permute.xlu0 %1316
  %1318 = vrot.lane.b32.xlu0 %v1263, 127
  %v1319 = vpop.permute.xlu0 %1318
  %1320 = vrot.lane.b32.xlu0 %v1266, 127
  %v1321 = vpop.permute.xlu0 %1320
  %1322 = vrot.lane.b32.xlu0 %v1286, 127
  %v1323 = vpop.permute.xlu0 %1322
  %1324 = vrot.lane.b32.xlu0 %v1289, 127
  %v1325 = vpop.permute.xlu0 %1324
  %1326 = vrot.lane.b32.xlu0 %v1309, 127
  %v1327 = vpop.permute.xlu0 %1326
  %1328 = vrot.lane.b32.xlu0 %v1312, 127
  %v1329 = vpop.permute.xlu0 %1328
  %v1330 = vsel %vm154, %v1323, %v1327
  %v1331 = vsel %vm154, %v1325, %v1329
  %v1332 = vsel %vm154, %v1319, %v1323
  %v1333 = vsel %vm154, %v1321, %v1325
  %v1334 = vsel %vm154, %v1315, %v1319
  %v1335 = vsel %vm154, %v1317, %v1321
  %v1336 = vsel %vm154, %v1327, %v1315
  %v1337 = vsel %vm154, %v1329, %v1317
  %v1338 = vmax.f32 %v1240, %v1334
  %v1339 = vmax.f32 %v1263, %v1332
  %v1340 = vmax.f32 %v1286, %v1330
  %v1341 = vmax.f32 %v1309, %v1336
  %v1342 = vmax.f32 %v1243, %v1335
  %v1343 = vmax.f32 %v1266, %v1333
  %v1344 = vmax.f32 %v1289, %v1331
  %v1345 = vmax.f32 %v1312, %v1337
  %1346 = vrot.lane.b32.xlu0 %v1240, 112
  %v1347 = vpop.permute.xlu0 %1346
  %1348 = vrot.lane.b32.xlu0 %v1243, 112
  %v1349 = vpop.permute.xlu0 %1348
  %1350 = vrot.lane.b32.xlu0 %v1263, 112
  %v1351 = vpop.permute.xlu0 %1350
  %1352 = vrot.lane.b32.xlu0 %v1266, 112
  %v1353 = vpop.permute.xlu0 %1352
  %1354 = vrot.lane.b32.xlu0 %v1286, 112
  %v1355 = vpop.permute.xlu0 %1354
  %1356 = vrot.lane.b32.xlu0 %v1289, 112
  %v1357 = vpop.permute.xlu0 %1356
  %1358 = vrot.lane.b32.xlu0 %v1309, 112
  %v1359 = vpop.permute.xlu0 %1358
  %1360 = vrot.lane.b32.xlu0 %v1312, 112
  %v1361 = vpop.permute.xlu0 %1360
  %v1362 = vsel %vm210, %v1355, %v1359
  %v1363 = vsel %vm210, %v1357, %v1361
  %v1364 = vsel %vm210, %v1351, %v1355
  %v1365 = vsel %vm210, %v1353, %v1357
  %v1366 = vsel %vm210, %v1347, %v1351
  %v1367 = vsel %vm210, %v1349, %v1353
  %v1368 = vsel %vm210, %v1359, %v1347
  %v1369 = vsel %vm210, %v1361, %v1349
  %1370 = vrot.lane.b32.xlu0 %v1240, 111
  %v1371 = vpop.permute.xlu0 %1370
  %1372 = vrot.lane.b32.xlu0 %v1243, 111
  %v1373 = vpop.permute.xlu0 %1372
  %1374 = vrot.lane.b32.xlu0 %v1263, 111
  %v1375 = vpop.permute.xlu0 %1374
  %1376 = vrot.lane.b32.xlu0 %v1266, 111
  %v1377 = vpop.permute.xlu0 %1376
  %1378 = vrot.lane.b32.xlu0 %v1286, 111
  %v1379 = vpop.permute.xlu0 %1378
  %1380 = vrot.lane.b32.xlu0 %v1289, 111
  %v1381 = vpop.permute.xlu0 %1380
  %1382 = vrot.lane.b32.xlu0 %v1309, 111
  %v1383 = vpop.permute.xlu0 %1382
  %1384 = vrot.lane.b32.xlu0 %v1312, 111
  %v1385 = vpop.permute.xlu0 %1384
  %v1386 = vsel %vm238, %v1379, %v1383
  %v1387 = vsel %vm238, %v1381, %v1385
  %v1388 = vsel %vm238, %v1375, %v1379
  %v1389 = vsel %vm238, %v1377, %v1381
  %v1390 = vsel %vm238, %v1371, %v1375
  %v1391 = vsel %vm238, %v1373, %v1377
  %v1392 = vsel %vm238, %v1383, %v1371
  %v1393 = vsel %vm238, %v1385, %v1373
  %v1394 = vmax.f32 %v1366, %v1390
  %v1395 = vmax.f32 %v1364, %v1388
  %v1396 = vmax.f32 %v1362, %v1386
  %v1397 = vmax.f32 %v1368, %v1392
  %v1398 = vmax.f32 %v1367, %v1391
  %v1399 = vmax.f32 %v1365, %v1389
  %v1400 = vmax.f32 %v1363, %v1387
  %v1401 = vmax.f32 %v1369, %v1393
  %v1402 = vmax.f32 %v1338, %v1394
  %v1403 = vmax.f32 %v1339, %v1395
  %v1404 = vmax.f32 %v1340, %v1396
  %v1405 = vmax.f32 %v1341, %v1397
  %v1406 = vmax.f32 %v1342, %v1398
  %v1407 = vmax.f32 %v1343, %v1399
  %v1408 = vmax.f32 %v1344, %v1400
  %v1409 = vmax.f32 %v1345, %v1401
  %v1410 = vld [vmem:[%s5] sm:$0xff]
  %v1411 = vld [vmem:[%s5 + $0x8] sm:$0xff]
  %v1412 = vld [vmem:[%s5 + $0x10] sm:$0xff]
  %v1413 = vld [vmem:[%s5 + $0x18] sm:$0xff]
  %v1414 = vld [vmem:[%s5 + $0x20] sm:$0xff]
  %v1415 = vld [vmem:[%s5 + $0x28] sm:$0xff]
  %v1416 = vld [vmem:[%s5 + $0x30] sm:$0xff]
  %v1417 = vld [vmem:[%s5 + $0x38] sm:$0xff]
  %v1418 = vld [vmem:[%s5 + $0x40] sm:$0xff]
  %v1419 = vld [vmem:[%s5 + $0x48] sm:$0xff]
  %v1420 = vld [vmem:[%s5 + $0x50] sm:$0xff]
  %v1421 = vld [vmem:[%s5 + $0x58] sm:$0xff]
  %v1422 = vld [vmem:[%s5 + $0x60] sm:$0xff]
  %v1423 = vld [vmem:[%s5 + $0x68] sm:$0xff]
  %v1424 = vld [vmem:[%s5 + $0x70] sm:$0xff]
  %v1425 = vld [vmem:[%s5 + $0x78] sm:$0xff]
  %v1426 = vld [vmem:[%s5 + $0x80] sm:$0xff]
  %v1427 = vld [vmem:[%s5 + $0x88] sm:$0xff]
  %v1428 = vld [vmem:[%s5 + $0x90] sm:$0xff]
  %v1429 = vld [vmem:[%s5 + $0x98] sm:$0xff]
  %v1430 = vld [vmem:[%s5 + $0xa0] sm:$0xff]
  %v1431 = vld [vmem:[%s5 + $0xa8] sm:$0xff]
  %v1432 = vld [vmem:[%s5 + $0xb0] sm:$0xff]
  %v1433 = vld [vmem:[%s5 + $0xb8] sm:$0xff]
  %v1434 = vld [vmem:[%s5 + $0xc0] sm:$0xff]
  %v1435 = vld [vmem:[%s5 + $0xc8] sm:$0xff]
  %v1436 = vld [vmem:[%s5 + $0xd0] sm:$0xff]
  %v1437 = vld [vmem:[%s5 + $0xd8] sm:$0xff]
  %v1438 = vld [vmem:[%s5 + $0xe0] sm:$0xff]
  %v1439 = vld [vmem:[%s5 + $0xe8] sm:$0xff]
  %v1440 = vld [vmem:[%s5 + $0xf0] sm:$0xff]
  %v1441 = vld [vmem:[%s5 + $0xf8] sm:$0xff]
  %v1442 = vld [vmem:[%s5 + $0x100] sm:$0xff]
  %v1443 = vld [vmem:[%s5 + $0x108] sm:$0xff]
  %v1444 = vld [vmem:[%s5 + $0x110] sm:$0xff]
  %v1445 = vld [vmem:[%s5 + $0x118] sm:$0xff]
  %v1446 = vld [vmem:[%s5 + $0x120] sm:$0xff]
  %v1447 = vld [vmem:[%s5 + $0x128] sm:$0xff]
  %v1448 = vld [vmem:[%s5 + $0x130] sm:$0xff]
  %v1449 = vld [vmem:[%s5 + $0x138] sm:$0xff]
  %v1450 = vld [vmem:[%s5 + $0x140] sm:$0xff]
  %v1451 = vld [vmem:[%s5 + $0x148] sm:$0xff]
  %v1452 = vld [vmem:[%s5 + $0x150] sm:$0xff]
  %v1453 = vld [vmem:[%s5 + $0x158] sm:$0xff]
  %v1454 = vld [vmem:[%s5 + $0x160] sm:$0xff]
  %v1455 = vld [vmem:[%s5 + $0x168] sm:$0xff]
  %v1456 = vld [vmem:[%s5 + $0x170] sm:$0xff]
  %v1457 = vld [vmem:[%s5 + $0x178] sm:$0xff]
  %v1458 = vld [vmem:[%s5 + $0x180] sm:$0xff]
  %v1459 = vld [vmem:[%s5 + $0x188] sm:$0xff]
  %v1460 = vld [vmem:[%s5 + $0x190] sm:$0xff]
  %v1461 = vld [vmem:[%s5 + $0x198] sm:$0xff]
  %v1462 = vld [vmem:[%s5 + $0x1a0] sm:$0xff]
  %v1463 = vld [vmem:[%s5 + $0x1a8] sm:$0xff]
  %v1464 = vld [vmem:[%s5 + $0x1b0] sm:$0xff]
  %v1465 = vld [vmem:[%s5 + $0x1b8] sm:$0xff]
  %v1466 = vld [vmem:[%s5 + $0x1c0] sm:$0xff]
  %v1467 = vld [vmem:[%s5 + $0x1c8] sm:$0xff]
  %v1468 = vld [vmem:[%s5 + $0x1d0] sm:$0xff]
  %v1469 = vld [vmem:[%s5 + $0x1d8] sm:$0xff]
  %v1470 = vld [vmem:[%s5 + $0x1e0] sm:$0xff]
  %v1471 = vld [vmem:[%s5 + $0x1e8] sm:$0xff]
  %v1472 = vld [vmem:[%s5 + $0x1f0] sm:$0xff]
  %v1473 = vld [vmem:[%s5 + $0x1f8] sm:$0xff]
  %1474 = vmatpush.msra.mxu0 %v1425
  %1475 = vmatpush.msra.mxu0 %v1424
  %1476 = vmatpush.msra.mxu0 %v1423
  %1477 = vmatpush.msra.mxu0 %v1422
  %1478 = vmatpush.msra.mxu0 %v1421
  %1479 = vmatpush.msra.mxu0 %v1420
  %1480 = vmatpush.msra.mxu0 %v1419
  %1481 = vmatpush.msra.mxu0 %v1418
  %1482 = vmatpush.msra.mxu0 %v1417
  %1483 = vmatpush.msra.mxu0 %v1416
  %1484 = vmatpush.msra.mxu0 %v1415
  %1485 = vmatpush.msra.mxu0 %v1414
  %1486 = vmatpush.msra.mxu0 %v1413
  %1487 = vmatpush.msra.mxu0 %v1412
  %1488 = vmatpush.msra.mxu0 %v1411
  %1489 = vmatpush.msra.mxu0 %v1410
  %1490 = vmatmul.f32.gmra.mxu0 %v1402
  %v1491 = vpop.f32.mrf.mxu0
  %v1492 = vadd.f32 0.0, %v1491
  %1493 = vmatmul.f32.gmra.mxu0 %v1406
  %v1494 = vpop.f32.mrf.mxu0
  %v1495 = vadd.f32 0.0, %v1494
  %1496 = vdwg.mxu0
  %1497 = vmatpush.msra.mxu0 %v1441
  %1498 = vmatpush.msra.mxu0 %v1440
  %1499 = vmatpush.msra.mxu0 %v1439
  %1500 = vmatpush.msra.mxu0 %v1438
  %1501 = vmatpush.msra.mxu0 %v1437
  %1502 = vmatpush.msra.mxu0 %v1436
  %1503 = vmatpush.msra.mxu0 %v1435
  %1504 = vmatpush.msra.mxu0 %v1434
  %1505 = vmatpush.msra.mxu0 %v1433
  %1506 = vmatpush.msra.mxu0 %v1432
  %1507 = vmatpush.msra.mxu0 %v1431
  %1508 = vmatpush.msra.mxu0 %v1430
  %1509 = vmatpush.msra.mxu0 %v1429
  %1510 = vmatpush.msra.mxu0 %v1428
  %1511 = vmatpush.msra.mxu0 %v1427
  %1512 = vmatpush.msra.mxu0 %v1426
  %1513 = vmatmul.f32.gmra.mxu0 %v1403
  %v1514 = vpop.f32.mrf.mxu0
  %v1515 = vadd.f32 %v1492, %v1514
  %1516 = vmatmul.f32.gmra.mxu0 %v1407
  %v1517 = vpop.f32.mrf.mxu0
  %v1518 = vadd.f32 %v1495, %v1517
  %1519 = vdwg.mxu0
  %1520 = vmatpush.msra.mxu0 %v1457
  %1521 = vmatpush.msra.mxu0 %v1456
  %1522 = vmatpush.msra.mxu0 %v1455
  %1523 = vmatpush.msra.mxu0 %v1454
  %1524 = vmatpush.msra.mxu0 %v1453
  %1525 = vmatpush.msra.mxu0 %v1452
  %1526 = vmatpush.msra.mxu0 %v1451
  %1527 = vmatpush.msra.mxu0 %v1450
  %1528 = vmatpush.msra.mxu0 %v1449
  %1529 = vmatpush.msra.mxu0 %v1448
  %1530 = vmatpush.msra.mxu0 %v1447
  %1531 = vmatpush.msra.mxu0 %v1446
  %1532 = vmatpush.msra.mxu0 %v1445
  %1533 = vmatpush.msra.mxu0 %v1444
  %1534 = vmatpush.msra.mxu0 %v1443
  %1535 = vmatpush.msra.mxu0 %v1442
  %1536 = vmatmul.f32.gmra.mxu0 %v1404
  %v1537 = vpop.f32.mrf.mxu0
  %v1538 = vadd.f32 %v1515, %v1537
  %1539 = vmatmul.f32.gmra.mxu0 %v1408
  %v1540 = vpop.f32.mrf.mxu0
  %v1541 = vadd.f32 %v1518, %v1540
  %1542 = vdwg.mxu0
  %1543 = vmatpush.msra.mxu0 %v1473
  %1544 = vmatpush.msra.mxu0 %v1472
  %1545 = vmatpush.msra.mxu0 %v1471
  %1546 = vmatpush.msra.mxu0 %v1470
  %1547 = vmatpush.msra.mxu0 %v1469
  %1548 = vmatpush.msra.mxu0 %v1468
  %1549 = vmatpush.msra.mxu0 %v1467
  %1550 = vmatpush.msra.mxu0 %v1466
  %1551 = vmatpush.msra.mxu0 %v1465
  %1552 = vmatpush.msra.mxu0 %v1464
  %1553 = vmatpush.msra.mxu0 %v1463
  %1554 = vmatpush.msra.mxu0 %v1462
  %1555 = vmatpush.msra.mxu0 %v1461
  %1556 = vmatpush.msra.mxu0 %v1460
  %1557 = vmatpush.msra.mxu0 %v1459
  %1558 = vmatpush.msra.mxu0 %v1458
  %1559 = vmatmul.f32.gmra.mxu0 %v1405
  %v1560 = vpop.f32.mrf.mxu0
  %v1561 = vadd.f32 %v1538, %v1560
  %1562 = vmatmul.f32.gmra.mxu0 %v1409
  %v1563 = vpop.f32.mrf.mxu0
  %v1564 = vadd.f32 %v1541, %v1563
  %1565 = vdwg.mxu0
  %1566 = vrot.lane.b32.xlu0 %v1561, 9
  %v1567 = vpop.permute.xlu0 %1566
  %1568 = vrot.lane.b32.xlu0 %v1564, 9
  %v1569 = vpop.permute.xlu0 %1568
  %v1570 = vld [vmem:[%s4 + $0x20] ss:$0 sm:$0xff]
  %v1571 = vmul.f32 %v1567, %v1570
  %v1572 = vmul.f32 %v1569, %v1570
  %1573 = vrot.lane.b32.xlu0 %v1561, 8
  %v1574 = vpop.permute.xlu0 %1573
  %1575 = vrot.lane.b32.xlu0 %v1564, 8
  %v1576 = vpop.permute.xlu0 %1575
  %v1577 = vld [vmem:[%s4 + $0x21] ss:$0 sm:$0xff]
  %v1578 = vmul.f32 %v1574, %v1577
  %v1579 = vmul.f32 %v1576, %v1577
  %1580 = vrot.lane.b32.xlu0 %v1561, 7
  %v1581 = vpop.permute.xlu0 %1580
  %1582 = vrot.lane.b32.xlu0 %v1564, 7
  %v1583 = vpop.permute.xlu0 %1582
  %v1584 = vld [vmem:[%s4 + $0x22] ss:$0 sm:$0xff]
  %v1585 = vmul.f32 %v1581, %v1584
  %v1586 = vmul.f32 %v1583, %v1584
  %1587 = vrot.lane.b32.xlu0 %v1561, 1
  %v1588 = vpop.permute.xlu0 %1587
  %1589 = vrot.lane.b32.xlu0 %v1564, 1
  %v1590 = vpop.permute.xlu0 %1589
  %v1591 = vld [vmem:[%s4 + $0x23] ss:$0 sm:$0xff]
  %v1592 = vmul.f32 %v1588, %v1591
  %v1593 = vmul.f32 %v1590, %v1591
  %1594 = vrot.lane.b32.xlu0 %v1561, 127
  %v1595 = vpop.permute.xlu0 %1594
  %1596 = vrot.lane.b32.xlu0 %v1564, 127
  %v1597 = vpop.permute.xlu0 %1596
  %v1598 = vld [vmem:[%s4 + $0x25] ss:$0 sm:$0xff]
  %v1599 = vmul.f32 %v1595, %v1598
  %v1600 = vmul.f32 %v1597, %v1598
  %1601 = vrot.lane.b32.xlu0 %v1561, 121
  %v1602 = vpop.permute.xlu0 %1601
  %1603 = vrot.lane.b32.xlu0 %v1564, 121
  %v1604 = vpop.permute.xlu0 %1603
  %v1605 = vld [vmem:[%s4 + $0x26] ss:$0 sm:$0xff]
  %v1606 = vmul.f32 %v1602, %v1605
  %v1607 = vmul.f32 %v1604, %v1605
  %1608 = vrot.lane.b32.xlu0 %v1561, 120
  %v1609 = vpop.permute.xlu0 %1608
  %1610 = vrot.lane.b32.xlu0 %v1564, 120
  %v1611 = vpop.permute.xlu0 %1610
  %v1612 = vld [vmem:[%s4 + $0x27] ss:$0 sm:$0xff]
  %v1613 = vmul.f32 %v1609, %v1612
  %v1614 = vmul.f32 %v1611, %v1612
  %1615 = vrot.lane.b32.xlu0 %v1561, 119
  %v1616 = vpop.permute.xlu0 %1615
  %1617 = vrot.lane.b32.xlu0 %v1564, 119
  %v1618 = vpop.permute.xlu0 %1617
  %v1619 = vld [vmem:[%s4 + $0x50] ss:$0 sm:$0xff]
  %v1620 = vmul.f32 %v1616, %v1619
  %v1621 = vmul.f32 %v1618, %v1619
  %v1622 = vld [vmem:[%s1 + $0x90] sm:$0xff]
  %v1623 = vld [vmem:[%s1 + $0x98] sm:$0xff]
  %v1624 = vld [vmem:[%s1 + $0xa8] sm:$0xff]
  %v1625 = vld [vmem:[%s1 + $0xb0] sm:$0xff]
  %v1627 = vsel %vm740, %v1623, 0
  %v1630 = vsel %vm740, %v1625, 0
  %1632 = vmatpush.msra.mxu0 %v1614
  %1633 = vmatpush.msra.mxu0 %v1613
  %1634 = vmatpush.msra.mxu0 %v1607
  %1635 = vmatpush.msra.mxu0 %v1606
  %1636 = vmatpush.msra.mxu0 %v1600
  %1637 = vmatpush.msra.mxu0 %v1599
  %1638 = vmatpush.msra.mxu0 %v1564
  %1639 = vmatpush.msra.mxu0 %v1561
  %1640 = vmatpush.msra.mxu0 %v1593
  %1641 = vmatpush.msra.mxu0 %v1592
  %1642 = vmatpush.msra.mxu0 %v1586
  %1643 = vmatpush.msra.mxu0 %v1585
  %1644 = vmatpush.msra.mxu0 %v1579
  %1645 = vmatpush.msra.mxu0 %v1578
  %1646 = vmatpush.msra.mxu0 %v1572
  %1647 = vmatpush.msra.mxu0 %v1571
  %1648 = vmatmul.f32.gmra.mxu0 %v1622
  %v1649 = vpop.f32.mrf.mxu0
  %v1650 = vadd.f32 0.0, %v1649
  %1651 = vmatmul.f32.gmra.mxu0 %v1624
  %v1652 = vpop.f32.mrf.mxu0
  %v1653 = vadd.f32 0.0, %v1652
  %1654 = vdwg.mxu0
  %1655 = vmatpush.msra.mxu0 0.0
  %1656 = vmatpush.msra.mxu0 0.0
  %1657 = vmatpush.msra.mxu0 0.0
  %1658 = vmatpush.msra.mxu0 0.0
  %1659 = vmatpush.msra.mxu0 0.0
  %1660 = vmatpush.msra.mxu0 0.0
  %1661 = vmatpush.msra.mxu0 0.0
  %1662 = vmatpush.msra.mxu0 0.0
  %1663 = vmatpush.msra.mxu0 0.0
  %1664 = vmatpush.msra.mxu0 0.0
  %1665 = vmatpush.msra.mxu0 0.0
  %1666 = vmatpush.msra.mxu0 0.0
  %1667 = vmatpush.msra.mxu0 0.0
  %1668 = vmatpush.msra.mxu0 0.0
  %1669 = vmatpush.msra.mxu0 %v1621
  %1670 = vmatpush.msra.mxu0 %v1620
  %1671 = vmatmul.f32.gmra.mxu0 %v1627
  %v1672 = vpop.f32.mrf.mxu0
  %v1673 = vadd.f32 %v1650, %v1672
  %1674 = vmatmul.f32.gmra.mxu0 %v1630
  %v1675 = vpop.f32.mrf.mxu0
  %v1676 = vadd.f32 %v1653, %v1675
  %1677 = vdwg.mxu0
  %1678 = vadd.xlane.f32.xlu0 %v1673
  %v1679 = vpop.xlane.xlu0 %1678
  %1680 = vadd.xlane.f32.xlu0 %v1676
  %v1681 = vpop.xlane.xlu0 %1680
  %v1682 = vrcp.pop 128.0
  %v1683 = vmul.f32 128.0, %v1682
  %v1684 = vsub.f32 1.0, %v1683
  %v1685 = vmul.f32 %v1682, %v1684
  %v1686 = vadd.f32 %v1682, %v1685
  %vm1687 = vweird.f32 %v1682
  %v1688 = vsel %vm1687, %v1682, %v1686
  %v1689 = vmul.f32 %v1679, %v1688
  %v1690 = vmul.f32 %v1681, %v1688
  %v1691 = vsub.f32 %v1673, %v1689
  %v1692 = vsub.f32 %v1676, %v1690
  %v1693 = vmul.f32 %v1691, %v1691
  %v1694 = vmul.f32 %v1692, %v1692
  %1695 = vadd.xlane.f32.xlu0 %v1693
  %v1696 = vpop.xlane.xlu0 %1695
  %1697 = vadd.xlane.f32.xlu0 %v1694
  %v1698 = vpop.xlane.xlu0 %1697
  %v1699 = vmul.f32 %v1696, %v1688
  %v1700 = vmul.f32 %v1698, %v1688
  %v1701 = vadd.f32 %v1699, 1e-05
  %v1702 = vadd.f32 %v1700, 1e-05
  %v1703 = vrsqrt.pop %v1701
  %v1704 = vmul.f32 %v1703, %v1701
  %v1705 = vmul.f32 %v1704, %v1703
  %v1706 = vmul.f32 0.5, %v1705
  %v1707 = vsub.f32 1.5, %v1706
  %v1708 = vmul.f32 %v1703, %v1707
  %vm1709 = vweird.f32 %v1701
  %vm1710 = vweird.f32 %v1703
  %vm1711 = vmor %vm1709, %vm1710
  %v1712 = vsel %vm1711, %v1703, %v1708
  %v1713 = vrsqrt.pop %v1702
  %v1714 = vmul.f32 %v1713, %v1702
  %v1715 = vmul.f32 %v1714, %v1713
  %v1716 = vmul.f32 0.5, %v1715
  %v1717 = vsub.f32 1.5, %v1716
  %v1718 = vmul.f32 %v1713, %v1717
  %vm1719 = vweird.f32 %v1702
  %vm1720 = vweird.f32 %v1713
  %vm1721 = vmor %vm1719, %vm1720
  %v1722 = vsel %vm1721, %v1713, %v1718
  %v1723 = vmul.f32 %v1712, %v428
  %v1724 = vmul.f32 %v1722, %v429
  %1726 = vset.pattern.permute.xlu0 4
  %1727 = vperm.xlu0 %1726, %v1723
  %v1728 = vpop.permute.xlu0 %1727
  %1731 = vset.pattern.permute.xlu0 4
  %1732 = vperm.xlu0 %1731, %v1724
  %v1733 = vpop.permute.xlu0 %1732
  %v1735 = vmul.f32 %v1691, %v1728
  %v1736 = vmul.f32 %v1692, %v1733
  %1737 = vset.pattern.permute.xlu0 5
  %1738 = vperm.xlu0 %1737, %v428
  %v1739 = vpop.permute.xlu0 %1738
  %1741 = vset.pattern.permute.xlu0 5
  %1742 = vperm.xlu0 %1741, %v429
  %v1743 = vpop.permute.xlu0 %1742
  %v1745 = vadd.f32 %v1735, %v1739
  %v1746 = vadd.f32 %v1736, %v1743
  %v1747 = vmax.f32 %v1745, 0.0
  %v1748 = vmax.f32 %v1746, 0.0
  %1749 = vrot.lane.b32.xlu0 %v1747, 9
  %v1750 = vpop.permute.xlu0 %1749
  %1751 = vrot.lane.b32.xlu0 %v1748, 9
  %v1752 = vpop.permute.xlu0 %1751
  %v1753 = vmul.f32 %v1750, %v1570
  %v1754 = vmul.f32 %v1752, %v1570
  %1755 = vrot.lane.b32.xlu0 %v1747, 8
  %v1756 = vpop.permute.xlu0 %1755
  %1757 = vrot.lane.b32.xlu0 %v1748, 8
  %v1758 = vpop.permute.xlu0 %1757
  %v1759 = vmul.f32 %v1756, %v1577
  %v1760 = vmul.f32 %v1758, %v1577
  %1761 = vrot.lane.b32.xlu0 %v1747, 7
  %v1762 = vpop.permute.xlu0 %1761
  %1763 = vrot.lane.b32.xlu0 %v1748, 7
  %v1764 = vpop.permute.xlu0 %1763
  %v1765 = vmul.f32 %v1762, %v1584
  %v1766 = vmul.f32 %v1764, %v1584
  %1767 = vrot.lane.b32.xlu0 %v1747, 1
  %v1768 = vpop.permute.xlu0 %1767
  %1769 = vrot.lane.b32.xlu0 %v1748, 1
  %v1770 = vpop.permute.xlu0 %1769
  %v1771 = vmul.f32 %v1768, %v1591
  %v1772 = vmul.f32 %v1770, %v1591
  %1773 = vrot.lane.b32.xlu0 %v1747, 127
  %v1774 = vpop.permute.xlu0 %1773
  %1775 = vrot.lane.b32.xlu0 %v1748, 127
  %v1776 = vpop.permute.xlu0 %1775
  %v1777 = vmul.f32 %v1774, %v1598
  %v1778 = vmul.f32 %v1776, %v1598
  %1779 = vrot.lane.b32.xlu0 %v1747, 121
  %v1780 = vpop.permute.xlu0 %1779
  %1781 = vrot.lane.b32.xlu0 %v1748, 121
  %v1782 = vpop.permute.xlu0 %1781
  %v1783 = vmul.f32 %v1780, %v1605
  %v1784 = vmul.f32 %v1782, %v1605
  %1785 = vrot.lane.b32.xlu0 %v1747, 120
  %v1786 = vpop.permute.xlu0 %1785
  %1787 = vrot.lane.b32.xlu0 %v1748, 120
  %v1788 = vpop.permute.xlu0 %1787
  %v1789 = vmul.f32 %v1786, %v1612
  %v1790 = vmul.f32 %v1788, %v1612
  %1791 = vrot.lane.b32.xlu0 %v1747, 119
  %v1792 = vpop.permute.xlu0 %1791
  %1793 = vrot.lane.b32.xlu0 %v1748, 119
  %v1794 = vpop.permute.xlu0 %1793
  %v1795 = vmul.f32 %v1792, %v1619
  %v1796 = vmul.f32 %v1794, %v1619
  %v1797 = vld [vmem:[%s1 + $0xc0] sm:$0xff]
  %v1798 = vld [vmem:[%s1 + $0xc8] sm:$0xff]
  %v1799 = vld [vmem:[%s1 + $0xd8] sm:$0xff]
  %v1800 = vld [vmem:[%s1 + $0xe0] sm:$0xff]
  %v1801 = vld [vmem:[%s1 + $0xf0] sm:$0xff]
  %v1802 = vld [vmem:[%s1 + $0xf8] sm:$0xff]
  %v1803 = vld [vmem:[%s1 + $0x108] sm:$0xff]
  %v1804 = vld [vmem:[%s1 + $0x110] sm:$0xff]
  %v1806 = vsel %vm740, %v1798, 0
  %v1809 = vsel %vm740, %v1800, 0
  %v1812 = vsel %vm740, %v1802, 0
  %v1815 = vsel %vm740, %v1804, 0
  %1817 = vmatpush.msra.mxu0 %v1790
  %1818 = vmatpush.msra.mxu0 %v1789
  %1819 = vmatpush.msra.mxu0 %v1784
  %1820 = vmatpush.msra.mxu0 %v1783
  %1821 = vmatpush.msra.mxu0 %v1778
  %1822 = vmatpush.msra.mxu0 %v1777
  %1823 = vmatpush.msra.mxu0 %v1748
  %1824 = vmatpush.msra.mxu0 %v1747
  %1825 = vmatpush.msra.mxu0 %v1772
  %1826 = vmatpush.msra.mxu0 %v1771
  %1827 = vmatpush.msra.mxu0 %v1766
  %1828 = vmatpush.msra.mxu0 %v1765
  %1829 = vmatpush.msra.mxu0 %v1760
  %1830 = vmatpush.msra.mxu0 %v1759
  %1831 = vmatpush.msra.mxu0 %v1754
  %1832 = vmatpush.msra.mxu0 %v1753
  %1833 = vmatmul.f32.gmra.mxu0 %v1797
  %v1834 = vpop.f32.mrf.mxu0
  %v1835 = vadd.f32 0.0, %v1834
  %1836 = vmatmul.f32.gmra.mxu0 %v1799
  %v1837 = vpop.f32.mrf.mxu0
  %v1838 = vadd.f32 0.0, %v1837
  %1839 = vmatmul.f32.gmra.mxu0 %v1801
  %v1840 = vpop.f32.mrf.mxu0
  %v1841 = vadd.f32 0.0, %v1840
  %1842 = vmatmul.f32.gmra.mxu0 %v1803
  %v1843 = vpop.f32.mrf.mxu0
  %v1844 = vadd.f32 0.0, %v1843
  %1845 = vdwg.mxu0
  %1846 = vmatpush.msra.mxu0 0.0
  %1847 = vmatpush.msra.mxu0 0.0
  %1848 = vmatpush.msra.mxu0 0.0
  %1849 = vmatpush.msra.mxu0 0.0
  %1850 = vmatpush.msra.mxu0 0.0
  %1851 = vmatpush.msra.mxu0 0.0
  %1852 = vmatpush.msra.mxu0 0.0
  %1853 = vmatpush.msra.mxu0 0.0
  %1854 = vmatpush.msra.mxu0 0.0
  %1855 = vmatpush.msra.mxu0 0.0
  %1856 = vmatpush.msra.mxu0 0.0
  %1857 = vmatpush.msra.mxu0 0.0
  %1858 = vmatpush.msra.mxu0 0.0
  %1859 = vmatpush.msra.mxu0 0.0
  %1860 = vmatpush.msra.mxu0 %v1796
  %1861 = vmatpush.msra.mxu0 %v1795
  %1862 = vmatmul.f32.gmra.mxu0 %v1806
  %v1863 = vpop.f32.mrf.mxu0
  %v1864 = vadd.f32 %v1835, %v1863
  %1865 = vmatmul.f32.gmra.mxu0 %v1809
  %v1866 = vpop.f32.mrf.mxu0
  %v1867 = vadd.f32 %v1838, %v1866
  %1868 = vmatmul.f32.gmra.mxu0 %v1812
  %v1869 = vpop.f32.mrf.mxu0
  %v1870 = vadd.f32 %v1841, %v1869
  %1871 = vmatmul.f32.gmra.mxu0 %v1815
  %v1872 = vpop.f32.mrf.mxu0
  %v1873 = vadd.f32 %v1844, %v1872
  %1874 = vdwg.mxu0
  %1875 = vadd.xlane.f32.xlu0 %v1864
  %v1876 = vpop.xlane.xlu0 %1875
  %1877 = vadd.xlane.f32.xlu0 %v1867
  %v1878 = vpop.xlane.xlu0 %1877
  %1879 = vadd.xlane.f32.xlu0 %v1870
  %v1880 = vpop.xlane.xlu0 %1879
  %1881 = vadd.xlane.f32.xlu0 %v1873
  %v1882 = vpop.xlane.xlu0 %1881
  %v1883 = vmul.f32 %v1876, %v1688
  %v1884 = vmul.f32 %v1878, %v1688
  %v1885 = vmul.f32 %v1880, %v1688
  %v1886 = vmul.f32 %v1882, %v1688
  %v1887 = vsub.f32 %v1864, %v1883
  %v1888 = vsub.f32 %v1867, %v1884
  %v1889 = vsub.f32 %v1870, %v1885
  %v1890 = vsub.f32 %v1873, %v1886
  %v1891 = vmul.f32 %v1887, %v1887
  %v1892 = vmul.f32 %v1888, %v1888
  %v1893 = vmul.f32 %v1889, %v1889
  %v1894 = vmul.f32 %v1890, %v1890
  %1895 = vadd.xlane.f32.xlu0 %v1891
  %v1896 = vpop.xlane.xlu0 %1895
  %1897 = vadd.xlane.f32.xlu0 %v1892
  %v1898 = vpop.xlane.xlu0 %1897
  %1899 = vadd.xlane.f32.xlu0 %v1893
  %v1900 = vpop.xlane.xlu0 %1899
  %1901 = vadd.xlane.f32.xlu0 %v1894
  %v1902 = vpop.xlane.xlu0 %1901
  %v1903 = vmul.f32 %v1896, %v1688
  %v1904 = vmul.f32 %v1898, %v1688
  %v1905 = vmul.f32 %v1900, %v1688
  %v1906 = vmul.f32 %v1902, %v1688
  %v1907 = vadd.f32 %v1903, 1e-05
  %v1908 = vadd.f32 %v1904, 1e-05
  %v1909 = vadd.f32 %v1905, 1e-05
  %v1910 = vadd.f32 %v1906, 1e-05
  %v1911 = vrsqrt.pop %v1907
  %v1912 = vmul.f32 %v1911, %v1907
  %v1913 = vmul.f32 %v1912, %v1911
  %v1914 = vmul.f32 0.5, %v1913
  %v1915 = vsub.f32 1.5, %v1914
  %v1916 = vmul.f32 %v1911, %v1915
  %vm1917 = vweird.f32 %v1907
  %vm1918 = vweird.f32 %v1911
  %vm1919 = vmor %vm1917, %vm1918
  %v1920 = vsel %vm1919, %v1911, %v1916
  %v1921 = vrsqrt.pop %v1908
  %v1922 = vmul.f32 %v1921, %v1908
  %v1923 = vmul.f32 %v1922, %v1921
  %v1924 = vmul.f32 0.5, %v1923
  %v1925 = vsub.f32 1.5, %v1924
  %v1926 = vmul.f32 %v1921, %v1925
  %vm1927 = vweird.f32 %v1908
  %vm1928 = vweird.f32 %v1921
  %vm1929 = vmor %vm1927, %vm1928
  %v1930 = vsel %vm1929, %v1921, %v1926
  %v1931 = vrsqrt.pop %v1909
  %v1932 = vmul.f32 %v1931, %v1909
  %v1933 = vmul.f32 %v1932, %v1931
  %v1934 = vmul.f32 0.5, %v1933
  %v1935 = vsub.f32 1.5, %v1934
  %v1936 = vmul.f32 %v1931, %v1935
  %vm1937 = vweird.f32 %v1909
  %vm1938 = vweird.f32 %v1931
  %vm1939 = vmor %vm1937, %vm1938
  %v1940 = vsel %vm1939, %v1931, %v1936
  %v1941 = vrsqrt.pop %v1910
  %v1942 = vmul.f32 %v1941, %v1910
  %v1943 = vmul.f32 %v1942, %v1941
  %v1944 = vmul.f32 0.5, %v1943
  %v1945 = vsub.f32 1.5, %v1944
  %v1946 = vmul.f32 %v1941, %v1945
  %vm1947 = vweird.f32 %v1910
  %vm1948 = vweird.f32 %v1941
  %vm1949 = vmor %vm1947, %vm1948
  %v1950 = vsel %vm1949, %v1941, %v1946
  %v1951 = vmul.f32 %v1920, %v1109
  %v1952 = vmul.f32 %v1930, %v1110
  %v1953 = vmul.f32 %v1940, %v1111
  %v1954 = vmul.f32 %v1950, %v1112
  %1956 = vset.pattern.permute.xlu0 6
  %1957 = vperm.xlu0 %1956, %v1951
  %v1958 = vpop.permute.xlu0 %1957
  %1961 = vset.pattern.permute.xlu0 6
  %1962 = vperm.xlu0 %1961, %v1952
  %v1963 = vpop.permute.xlu0 %1962
  %1966 = vset.pattern.permute.xlu0 6
  %1967 = vperm.xlu0 %1966, %v1953
  %v1968 = vpop.permute.xlu0 %1967
  %1971 = vset.pattern.permute.xlu0 6
  %1972 = vperm.xlu0 %1971, %v1954
  %v1973 = vpop.permute.xlu0 %1972
  %v1975 = vmul.f32 %v1887, %v1958
  %v1976 = vmul.f32 %v1888, %v1963
  %v1977 = vmul.f32 %v1889, %v1968
  %v1978 = vmul.f32 %v1890, %v1973
  %1979 = vset.pattern.permute.xlu0 7
  %1980 = vperm.xlu0 %1979, %v1109
  %v1981 = vpop.permute.xlu0 %1980
  %1983 = vset.pattern.permute.xlu0 7
  %1984 = vperm.xlu0 %1983, %v1110
  %v1985 = vpop.permute.xlu0 %1984
  %1987 = vset.pattern.permute.xlu0 7
  %1988 = vperm.xlu0 %1987, %v1111
  %v1989 = vpop.permute.xlu0 %1988
  %1991 = vset.pattern.permute.xlu0 7
  %1992 = vperm.xlu0 %1991, %v1112
  %v1993 = vpop.permute.xlu0 %1992
  %v1995 = vadd.f32 %v1975, %v1981
  %v1996 = vadd.f32 %v1976, %v1985
  %v1997 = vadd.f32 %v1977, %v1989
  %v1998 = vadd.f32 %v1978, %v1993
  %v1999 = vmax.f32 %v1995, 0.0
  %v2000 = vmax.f32 %v1996, 0.0
  %v2001 = vmax.f32 %v1997, 0.0
  %v2002 = vmax.f32 %v1998, 0.0
  %2003 = vrot.lane.b32.xlu0 %v1999, 9
  %v2004 = vpop.permute.xlu0 %2003
  %2005 = vrot.lane.b32.xlu0 %v2000, 9
  %v2006 = vpop.permute.xlu0 %2005
  %2007 = vrot.lane.b32.xlu0 %v2001, 9
  %v2008 = vpop.permute.xlu0 %2007
  %2009 = vrot.lane.b32.xlu0 %v2002, 9
  %v2010 = vpop.permute.xlu0 %2009
  %v2011 = vmul.f32 %v2004, %v1570
  %v2012 = vmul.f32 %v2006, %v1570
  %v2013 = vmul.f32 %v2008, %v1570
  %v2014 = vmul.f32 %v2010, %v1570
  %2015 = vrot.lane.b32.xlu0 %v1999, 8
  %v2016 = vpop.permute.xlu0 %2015
  %2017 = vrot.lane.b32.xlu0 %v2000, 8
  %v2018 = vpop.permute.xlu0 %2017
  %2019 = vrot.lane.b32.xlu0 %v2001, 8
  %v2020 = vpop.permute.xlu0 %2019
  %2021 = vrot.lane.b32.xlu0 %v2002, 8
  %v2022 = vpop.permute.xlu0 %2021
  %v2023 = vmul.f32 %v2016, %v1577
  %v2024 = vmul.f32 %v2018, %v1577
  %v2025 = vmul.f32 %v2020, %v1577
  %v2026 = vmul.f32 %v2022, %v1577
  %2027 = vrot.lane.b32.xlu0 %v1999, 7
  %v2028 = vpop.permute.xlu0 %2027
  %2029 = vrot.lane.b32.xlu0 %v2000, 7
  %v2030 = vpop.permute.xlu0 %2029
  %2031 = vrot.lane.b32.xlu0 %v2001, 7
  %v2032 = vpop.permute.xlu0 %2031
  %2033 = vrot.lane.b32.xlu0 %v2002, 7
  %v2034 = vpop.permute.xlu0 %2033
  %v2035 = vmul.f32 %v2028, %v1584
  %v2036 = vmul.f32 %v2030, %v1584
  %v2037 = vmul.f32 %v2032, %v1584
  %v2038 = vmul.f32 %v2034, %v1584
  %2039 = vrot.lane.b32.xlu0 %v1999, 1
  %v2040 = vpop.permute.xlu0 %2039
  %2041 = vrot.lane.b32.xlu0 %v2000, 1
  %v2042 = vpop.permute.xlu0 %2041
  %2043 = vrot.lane.b32.xlu0 %v2001, 1
  %v2044 = vpop.permute.xlu0 %2043
  %2045 = vrot.lane.b32.xlu0 %v2002, 1
  %v2046 = vpop.permute.xlu0 %2045
  %v2047 = vmul.f32 %v2040, %v1591
  %v2048 = vmul.f32 %v2042, %v1591
  %v2049 = vmul.f32 %v2044, %v1591
  %v2050 = vmul.f32 %v2046, %v1591
  %2051 = vrot.lane.b32.xlu0 %v1999, 127
  %v2052 = vpop.permute.xlu0 %2051
  %2053 = vrot.lane.b32.xlu0 %v2000, 127
  %v2054 = vpop.permute.xlu0 %2053
  %2055 = vrot.lane.b32.xlu0 %v2001, 127
  %v2056 = vpop.permute.xlu0 %2055
  %2057 = vrot.lane.b32.xlu0 %v2002, 127
  %v2058 = vpop.permute.xlu0 %2057
  %v2059 = vmul.f32 %v2052, %v1598
  %v2060 = vmul.f32 %v2054, %v1598
  %v2061 = vmul.f32 %v2056, %v1598
  %v2062 = vmul.f32 %v2058, %v1598
  %2063 = vrot.lane.b32.xlu0 %v1999, 121
  %v2064 = vpop.permute.xlu0 %2063
  %2065 = vrot.lane.b32.xlu0 %v2000, 121
  %v2066 = vpop.permute.xlu0 %2065
  %2067 = vrot.lane.b32.xlu0 %v2001, 121
  %v2068 = vpop.permute.xlu0 %2067
  %2069 = vrot.lane.b32.xlu0 %v2002, 121
  %v2070 = vpop.permute.xlu0 %2069
  %v2071 = vmul.f32 %v2064, %v1605
  %v2072 = vmul.f32 %v2066, %v1605
  %v2073 = vmul.f32 %v2068, %v1605
  %v2074 = vmul.f32 %v2070, %v1605
  %2075 = vrot.lane.b32.xlu0 %v1999, 120
  %v2076 = vpop.permute.xlu0 %2075
  %2077 = vrot.lane.b32.xlu0 %v2000, 120
  %v2078 = vpop.permute.xlu0 %2077
  %2079 = vrot.lane.b32.xlu0 %v2001, 120
  %v2080 = vpop.permute.xlu0 %2079
  %2081 = vrot.lane.b32.xlu0 %v2002, 120
  %v2082 = vpop.permute.xlu0 %2081
  %v2083 = vmul.f32 %v2076, %v1612
  %v2084 = vmul.f32 %v2078, %v1612
  %v2085 = vmul.f32 %v2080, %v1612
  %v2086 = vmul.f32 %v2082, %v1612
  %2087 = vrot.lane.b32.xlu0 %v1999, 119
  %v2088 = vpop.permute.xlu0 %2087
  %2089 = vrot.lane.b32.xlu0 %v2000, 119
  %v2090 = vpop.permute.xlu0 %2089
  %2091 = vrot.lane.b32.xlu0 %v2001, 119
  %v2092 = vpop.permute.xlu0 %2091
  %2093 = vrot.lane.b32.xlu0 %v2002, 119
  %v2094 = vpop.permute.xlu0 %2093
  %v2095 = vmul.f32 %v2088, %v1619
  %v2096 = vmul.f32 %v2090, %v1619
  %v2097 = vmul.f32 %v2092, %v1619
  %v2098 = vmul.f32 %v2094, %v1619
  %v2099 = vld [vmem:[%s1 + $0x120] sm:$0xff]
  %v2100 = vld [vmem:[%s1 + $0x128] sm:$0xff]
  %v2101 = vld [vmem:[%s1 + $0x130] sm:$0xff]
  %v2102 = vld [vmem:[%s1 + $0x138] sm:$0xff]
  %v2103 = vld [vmem:[%s1 + $0x140] sm:$0xff]
  %v2104 = vld [vmem:[%s1 + $0x148] sm:$0xff]
  %v2105 = vld [vmem:[%s1 + $0x150] sm:$0xff]
  %v2106 = vld [vmem:[%s1 + $0x158] sm:$0xff]
  %v2107 = vld [vmem:[%s1 + $0x160] sm:$0xff]
  %v2108 = vld [vmem:[%s1 + $0x168] sm:$0xff]
  %v2109 = vld [vmem:[%s1 + $0x170] sm:$0xff]
  %v2110 = vld [vmem:[%s1 + $0x178] sm:$0xff]
  %v2111 = vld [vmem:[%s2 + $0x10] sm:$0xff]
  %v2112 = vld [vmem:[%s2 + $0x18] sm:$0xff]
  %v2113 = vld [vmem:[%s2 + $0x20] sm:$0xff]
  %v2114 = vld [vmem:[%s2 + $0x28] sm:$0xff]
  %v2116 = vsel %vm740, %v2111, 0
  %v2119 = vsel %vm740, %v2112, 0
  %v2122 = vsel %vm740, %v2113, 0
  %v2125 = vsel %vm740, %v2114, 0
  %2127 = vmatpush.msra.mxu0 0.0
  %2128 = vmatpush.msra.mxu0 0.0
  %2129 = vmatpush.msra.mxu0 0.0
  %2130 = vmatpush.msra.mxu0 0.0
  %2131 = vmatpush.msra.mxu0 0.0
  %2132 = vmatpush.msra.mxu0 0.0
  %2133 = vmatpush.msra.mxu0 0.0
  %2134 = vmatpush.msra.mxu0 0.0
  %2135 = vmatpush.msra.mxu0 0.0
  %2136 = vmatpush.msra.mxu0 0.0
  %2137 = vmatpush.msra.mxu0 0.0
  %2138 = vmatpush.msra.mxu0 0.0
  %2139 = vmatpush.msra.mxu0 0.0
  %2140 = vmatpush.msra.mxu0 0.0
  %2141 = vmatpush.msra.mxu0 %v1564
  %2142 = vmatpush.msra.mxu0 %v1561
  %2143 = vmatmul.f32.gmra.mxu0 %v2116
  %v2144 = vpop.f32.mrf.mxu0
  %v2145 = vadd.f32 0.0, %v2144
  %2146 = vmatmul.f32.gmra.mxu0 %v2119
  %v2147 = vpop.f32.mrf.mxu0
  %v2148 = vadd.f32 0.0, %v2147
  %2149 = vmatmul.f32.gmra.mxu0 %v2122
  %v2150 = vpop.f32.mrf.mxu0
  %v2151 = vadd.f32 0.0, %v2150
  %2152 = vmatmul.f32.gmra.mxu0 %v2125
  %v2153 = vpop.f32.mrf.mxu0
  %v2154 = vadd.f32 0.0, %v2153
  %2155 = vdwg.mxu0
  %v2157 = vsel %vm1215, %v2101, 0
  %v2160 = vsel %vm1215, %v2104, 0
  %v2163 = vsel %vm1215, %v2107, 0
  %v2166 = vsel %vm1215, %v2110, 0
  %2168 = vmatpush.msra.mxu0 %v2050
  %2169 = vmatpush.msra.mxu0 %v2049
  %2170 = vmatpush.msra.mxu0 %v2048
  %2171 = vmatpush.msra.mxu0 %v2047
  %2172 = vmatpush.msra.mxu0 %v2038
  %2173 = vmatpush.msra.mxu0 %v2037
  %2174 = vmatpush.msra.mxu0 %v2036
  %2175 = vmatpush.msra.mxu0 %v2035
  %2176 = vmatpush.msra.mxu0 %v2026
  %2177 = vmatpush.msra.mxu0 %v2025
  %2178 = vmatpush.msra.mxu0 %v2024
  %2179 = vmatpush.msra.mxu0 %v2023
  %2180 = vmatpush.msra.mxu0 %v2014
  %2181 = vmatpush.msra.mxu0 %v2013
  %2182 = vmatpush.msra.mxu0 %v2012
  %2183 = vmatpush.msra.mxu0 %v2011
  %2184 = vmatmul.f32.gmra.mxu0 %v2099
  %v2185 = vpop.f32.mrf.mxu0
  %v2186 = vadd.f32 %v2145, %v2185
  %2187 = vmatmul.f32.gmra.mxu0 %v2102
  %v2188 = vpop.f32.mrf.mxu0
  %v2189 = vadd.f32 %v2148, %v2188
  %2190 = vmatmul.f32.gmra.mxu0 %v2105
  %v2191 = vpop.f32.mrf.mxu0
  %v2192 = vadd.f32 %v2151, %v2191
  %2193 = vmatmul.f32.gmra.mxu0 %v2108
  %v2194 = vpop.f32.mrf.mxu0
  %v2195 = vadd.f32 %v2154, %v2194
  %2196 = vdwg.mxu0
  %2197 = vmatpush.msra.mxu0 %v2086
  %2198 = vmatpush.msra.mxu0 %v2085
  %2199 = vmatpush.msra.mxu0 %v2084
  %2200 = vmatpush.msra.mxu0 %v2083
  %2201 = vmatpush.msra.mxu0 %v2074
  %2202 = vmatpush.msra.mxu0 %v2073
  %2203 = vmatpush.msra.mxu0 %v2072
  %2204 = vmatpush.msra.mxu0 %v2071
  %2205 = vmatpush.msra.mxu0 %v2062
  %2206 = vmatpush.msra.mxu0 %v2061
  %2207 = vmatpush.msra.mxu0 %v2060
  %2208 = vmatpush.msra.mxu0 %v2059
  %2209 = vmatpush.msra.mxu0 %v2002
  %2210 = vmatpush.msra.mxu0 %v2001
  %2211 = vmatpush.msra.mxu0 %v2000
  %2212 = vmatpush.msra.mxu0 %v1999
  %2213 = vmatmul.f32.gmra.mxu0 %v2100
  %v2214 = vpop.f32.mrf.mxu0
  %v2215 = vadd.f32 %v2186, %v2214
  %2216 = vmatmul.f32.gmra.mxu0 %v2103
  %v2217 = vpop.f32.mrf.mxu0
  %v2218 = vadd.f32 %v2189, %v2217
  %2219 = vmatmul.f32.gmra.mxu0 %v2106
  %v2220 = vpop.f32.mrf.mxu0
  %v2221 = vadd.f32 %v2192, %v2220
  %2222 = vmatmul.f32.gmra.mxu0 %v2109
  %v2223 = vpop.f32.mrf.mxu0
  %v2224 = vadd.f32 %v2195, %v2223
  %2225 = vdwg.mxu0
  %2226 = vmatpush.msra.mxu0 0.0
  %2227 = vmatpush.msra.mxu0 0.0
  %2228 = vmatpush.msra.mxu0 0.0
  %2229 = vmatpush.msra.mxu0 0.0
  %2230 = vmatpush.msra.mxu0 0.0
  %2231 = vmatpush.msra.mxu0 0.0
  %2232 = vmatpush.msra.mxu0 0.0
  %2233 = vmatpush.msra.mxu0 0.0
  %2234 = vmatpush.msra.mxu0 0.0
  %2235 = vmatpush.msra.mxu0 0.0
  %2236 = vmatpush.msra.mxu0 0.0
  %2237 = vmatpush.msra.mxu0 0.0
  %2238 = vmatpush.msra.mxu0 %v2098
  %2239 = vmatpush.msra.mxu0 %v2097
  %2240 = vmatpush.msra.mxu0 %v2096
  %2241 = vmatpush.msra.mxu0 %v2095
  %2242 = vmatmul.f32.gmra.mxu0 %v2157
  %v2243 = vpop.f32.mrf.mxu0
  %v2244 = vadd.f32 %v2215, %v2243
  %2245 = vmatmul.f32.gmra.mxu0 %v2160
  %v2246 = vpop.f32.mrf.mxu0
  %v2247 = vadd.f32 %v2218, %v2246
  %2248 = vmatmul.f32.gmra.mxu0 %v2163
  %v2249 = vpop.f32.mrf.mxu0
  %v2250 = vadd.f32 %v2221, %v2249
  %2251 = vmatmul.f32.gmra.mxu0 %v2166
  %v2252 = vpop.f32.mrf.mxu0
  %v2253 = vadd.f32 %v2224, %v2252
  %2254 = vdwg.mxu0
  %2255 = vadd.xlane.f32.xlu0 %v2244
  %v2256 = vpop.xlane.xlu0 %2255
  %2257 = vadd.xlane.f32.xlu0 %v2247
  %v2258 = vpop.xlane.xlu0 %2257
  %2259 = vadd.xlane.f32.xlu0 %v2250
  %v2260 = vpop.xlane.xlu0 %2259
  %2261 = vadd.xlane.f32.xlu0 %v2253
  %v2262 = vpop.xlane.xlu0 %2261
  %v2263 = vmul.f32 %v2256, %v1688
  %v2264 = vmul.f32 %v2258, %v1688
  %v2265 = vmul.f32 %v2260, %v1688
  %v2266 = vmul.f32 %v2262, %v1688
  %v2267 = vsub.f32 %v2244, %v2263
  %v2268 = vsub.f32 %v2247, %v2264
  %v2269 = vsub.f32 %v2250, %v2265
  %v2270 = vsub.f32 %v2253, %v2266
  %v2271 = vmul.f32 %v2267, %v2267
  %v2272 = vmul.f32 %v2268, %v2268
  %v2273 = vmul.f32 %v2269, %v2269
  %v2274 = vmul.f32 %v2270, %v2270
  %2275 = vadd.xlane.f32.xlu0 %v2271
  %v2276 = vpop.xlane.xlu0 %2275
  %2277 = vadd.xlane.f32.xlu0 %v2272
  %v2278 = vpop.xlane.xlu0 %2277
  %2279 = vadd.xlane.f32.xlu0 %v2273
  %v2280 = vpop.xlane.xlu0 %2279
  %2281 = vadd.xlane.f32.xlu0 %v2274
  %v2282 = vpop.xlane.xlu0 %2281
  %v2283 = vmul.f32 %v2276, %v1688
  %v2284 = vmul.f32 %v2278, %v1688
  %v2285 = vmul.f32 %v2280, %v1688
  %v2286 = vmul.f32 %v2282, %v1688
  %v2287 = vadd.f32 %v2283, 1e-05
  %v2288 = vadd.f32 %v2284, 1e-05
  %v2289 = vadd.f32 %v2285, 1e-05
  %v2290 = vadd.f32 %v2286, 1e-05
  %v2291 = vrsqrt.pop %v2287
  %v2292 = vmul.f32 %v2291, %v2287
  %v2293 = vmul.f32 %v2292, %v2291
  %v2294 = vmul.f32 0.5, %v2293
  %v2295 = vsub.f32 1.5, %v2294
  %v2296 = vmul.f32 %v2291, %v2295
  %vm2297 = vweird.f32 %v2287
  %vm2298 = vweird.f32 %v2291
  %vm2299 = vmor %vm2297, %vm2298
  %v2300 = vsel %vm2299, %v2291, %v2296
  %v2301 = vrsqrt.pop %v2288
  %v2302 = vmul.f32 %v2301, %v2288
  %v2303 = vmul.f32 %v2302, %v2301
  %v2304 = vmul.f32 0.5, %v2303
  %v2305 = vsub.f32 1.5, %v2304
  %v2306 = vmul.f32 %v2301, %v2305
  %vm2307 = vweird.f32 %v2288
  %vm2308 = vweird.f32 %v2301
  %vm2309 = vmor %vm2307, %vm2308
  %v2310 = vsel %vm2309, %v2301, %v2306
  %v2311 = vrsqrt.pop %v2289
  %v2312 = vmul.f32 %v2311, %v2289
  %v2313 = vmul.f32 %v2312, %v2311
  %v2314 = vmul.f32 0.5, %v2313
  %v2315 = vsub.f32 1.5, %v2314
  %v2316 = vmul.f32 %v2311, %v2315
  %vm2317 = vweird.f32 %v2289
  %vm2318 = vweird.f32 %v2311
  %vm2319 = vmor %vm2317, %vm2318
  %v2320 = vsel %vm2319, %v2311, %v2316
  %v2321 = vrsqrt.pop %v2290
  %v2322 = vmul.f32 %v2321, %v2290
  %v2323 = vmul.f32 %v2322, %v2321
  %v2324 = vmul.f32 0.5, %v2323
  %v2325 = vsub.f32 1.5, %v2324
  %v2326 = vmul.f32 %v2321, %v2325
  %vm2327 = vweird.f32 %v2290
  %vm2328 = vweird.f32 %v2321
  %vm2329 = vmor %vm2327, %vm2328
  %v2330 = vsel %vm2329, %v2321, %v2326
  %v2331 = vmul.f32 %v2300, %v1109
  %v2332 = vmul.f32 %v2310, %v1110
  %v2333 = vmul.f32 %v2320, %v1111
  %v2334 = vmul.f32 %v2330, %v1112
  %2336 = vset.pattern.permute.xlu0 8
  %2337 = vperm.xlu0 %2336, %v2331
  %v2338 = vpop.permute.xlu0 %2337
  %2341 = vset.pattern.permute.xlu0 8
  %2342 = vperm.xlu0 %2341, %v2332
  %v2343 = vpop.permute.xlu0 %2342
  %2346 = vset.pattern.permute.xlu0 8
  %2347 = vperm.xlu0 %2346, %v2333
  %v2348 = vpop.permute.xlu0 %2347
  %2351 = vset.pattern.permute.xlu0 8
  %2352 = vperm.xlu0 %2351, %v2334
  %v2353 = vpop.permute.xlu0 %2352
  %v2355 = vmul.f32 %v2267, %v2338
  %v2356 = vmul.f32 %v2268, %v2343
  %v2357 = vmul.f32 %v2269, %v2348
  %v2358 = vmul.f32 %v2270, %v2353
  %2359 = vset.pattern.permute.xlu0 9
  %2360 = vperm.xlu0 %2359, %v1109
  %v2361 = vpop.permute.xlu0 %2360
  %2363 = vset.pattern.permute.xlu0 9
  %2364 = vperm.xlu0 %2363, %v1110
  %v2365 = vpop.permute.xlu0 %2364
  %2367 = vset.pattern.permute.xlu0 9
  %2368 = vperm.xlu0 %2367, %v1111
  %v2369 = vpop.permute.xlu0 %2368
  %2371 = vset.pattern.permute.xlu0 9
  %2372 = vperm.xlu0 %2371, %v1112
  %v2373 = vpop.permute.xlu0 %2372
  %v2375 = vadd.f32 %v2355, %v2361
  %v2376 = vadd.f32 %v2356, %v2365
  %v2377 = vadd.f32 %v2357, %v2369
  %v2378 = vadd.f32 %v2358, %v2373
  %v2379 = vmax.f32 %v2375, 0.0
  %v2380 = vmax.f32 %v2376, 0.0
  %v2381 = vmax.f32 %v2377, 0.0
  %v2382 = vmax.f32 %v2378, 0.0
  %v2383 = vld [vmem:[%s2 + $0x30] sm:$0xff]
  %v2384 = vld [vmem:[%s2 + $0x38] sm:$0xff]
  %2385 = vset.pattern.permute.xlu0 17
  %2386 = vperm.xlu0 %2385, %v428
  %v2387 = vpop.permute.xlu0 %2386
  %2389 = vset.pattern.permute.xlu0 17
  %2390 = vperm.xlu0 %2389, %v429
  %v2391 = vpop.permute.xlu0 %2390
  %v2394 = vsel %vm1215, %v2383, 0
  %v2397 = vsel %vm1215, %v2384, 0
  %2399 = vmatpush.msra.mxu0 0.0
  %2400 = vmatpush.msra.mxu0 0.0
  %2401 = vmatpush.msra.mxu0 0.0
  %2402 = vmatpush.msra.mxu0 0.0
  %2403 = vmatpush.msra.mxu0 0.0
  %2404 = vmatpush.msra.mxu0 0.0
  %2405 = vmatpush.msra.mxu0 0.0
  %2406 = vmatpush.msra.mxu0 0.0
  %2407 = vmatpush.msra.mxu0 0.0
  %2408 = vmatpush.msra.mxu0 0.0
  %2409 = vmatpush.msra.mxu0 0.0
  %2410 = vmatpush.msra.mxu0 0.0
  %2411 = vmatpush.msra.mxu0 %v2382
  %2412 = vmatpush.msra.mxu0 %v2381
  %2413 = vmatpush.msra.mxu0 %v2380
  %2414 = vmatpush.msra.mxu0 %v2379
  %2415 = vmatmul.f32.gmra.mxu0 %v2394
  %v2416 = vpop.f32.mrf.mxu0
  %v2417 = vadd.f32 %v2387, %v2416
  %2418 = vmatmul.f32.gmra.mxu0 %v2397
  %v2419 = vpop.f32.mrf.mxu0
  %v2420 = vadd.f32 %v2391, %v2419
  %2421 = vdwg.mxu0
  %2422 = vrot.lane.b32.xlu0 %v2417, 127
  %v2423 = vpop.permute.xlu0 %2422
  %2424 = vrot.lane.b32.xlu0 %v2420, 127
  %v2425 = vpop.permute.xlu0 %2424
  %v2426 = vmax.f32 %v2417, %v2423
  %v2427 = vmax.f32 %v2420, %v2425
  %2428 = vrot.lane.b32.xlu0 %v2417, 120
  %v2429 = vpop.permute.xlu0 %2428
  %2430 = vrot.lane.b32.xlu0 %v2420, 120
  %v2431 = vpop.permute.xlu0 %2430
  %2432 = vrot.lane.b32.xlu0 %v2417, 119
  %v2433 = vpop.permute.xlu0 %2432
  %2434 = vrot.lane.b32.xlu0 %v2420, 119
  %v2435 = vpop.permute.xlu0 %2434
  %v2436 = vmax.f32 %v2429, %v2433
  %v2437 = vmax.f32 %v2431, %v2435
  %v2438 = vmax.f32 %v2426, %v2436
  %v2439 = vmax.f32 %v2427, %v2437
  %v2440 = vld [vmem:[%s6] sm:$0xff]
  %v2441 = vld [vmem:[%s6 + $0x8] sm:$0xff]
  %v2442 = vld [vmem:[%s6 + $0x10] sm:$0xff]
  %v2443 = vld [vmem:[%s6 + $0x18] sm:$0xff]
  %v2444 = vld [vmem:[%s6 + $0x20] sm:$0xff]
  %v2445 = vld [vmem:[%s6 + $0x28] sm:$0xff]
  %v2446 = vld [vmem:[%s6 + $0x30] sm:$0xff]
  %v2447 = vld [vmem:[%s6 + $0x38] sm:$0xff]
  %v2448 = vld [vmem:[%s6 + $0x40] sm:$0xff]
  %v2449 = vld [vmem:[%s6 + $0x48] sm:$0xff]
  %v2450 = vld [vmem:[%s6 + $0x50] sm:$0xff]
  %v2451 = vld [vmem:[%s6 + $0x58] sm:$0xff]
  %v2452 = vld [vmem:[%s6 + $0x60] sm:$0xff]
  %v2453 = vld [vmem:[%s6 + $0x68] sm:$0xff]
  %v2454 = vld [vmem:[%s6 + $0x70] sm:$0xff]
  %v2455 = vld [vmem:[%s6 + $0x78] sm:$0xff]
  %2456 = vmatpush.msra.mxu0 %v2455
  %2457 = vmatpush.msra.mxu0 %v2454
  %2458 = vmatpush.msra.mxu0 %v2453
  %2459 = vmatpush.msra.mxu0 %v2452
  %2460 = vmatpush.msra.mxu0 %v2451
  %2461 = vmatpush.msra.mxu0 %v2450
  %2462 = vmatpush.msra.mxu0 %v2449
  %2463 = vmatpush.msra.mxu0 %v2448
  %2464 = vmatpush.msra.mxu0 %v2447
  %2465 = vmatpush.msra.mxu0 %v2446
  %2466 = vmatpush.msra.mxu0 %v2445
  %2467 = vmatpush.msra.mxu0 %v2444
  %2468 = vmatpush.msra.mxu0 %v2443
  %2469 = vmatpush.msra.mxu0 %v2442
  %2470 = vmatpush.msra.mxu0 %v2441
  %2471 = vmatpush.msra.mxu0 %v2440
  %2472 = vmatmul.f32.gmra.mxu0 %v2438
  %v2473 = vpop.f32.mrf.mxu0
  %v2474 = vadd.f32 0.0, %v2473
  %2475 = vmatmul.f32.gmra.mxu0 %v2439
  %v2476 = vpop.f32.mrf.mxu0
  %v2477 = vadd.f32 0.0, %v2476
  %2478 = vdwg.mxu0
  %2481 = vrot.lane.b32.xlu0 %v2474, 101
  %v2482 = vpop.permute.xlu0 %2481
  %2483 = vrot.lane.b32.xlu0 %v2477, 101
  %v2484 = vpop.permute.xlu0 %2483
  %2487 = vrot.lane.b32.xlu0 %v2474, 5
  %v2488 = vpop.permute.xlu0 %2487
  %2489 = vrot.lane.b32.xlu0 %v2477, 5
  %v2490 = vpop.permute.xlu0 %2489
  %vm2493 = vcmask 39936
  %v2494 = vsel %vm2493, %v2482, %v2488
  %v2495 = vsel %vm2493, %v2484, %v2490
  %v2496 = vld [vmem:[%s4 + $0x28] ss:$0 sm:$0xff]
  %v2497 = vmul.f32 %v2494, %v2496
  %v2498 = vmul.f32 %v2495, %v2496
  %2499 = vrot.lane.b32.xlu0 %v2474, 100
  %v2500 = vpop.permute.xlu0 %2499
  %2501 = vrot.lane.b32.xlu0 %v2477, 100
  %v2502 = vpop.permute.xlu0 %2501
  %2505 = vrot.lane.b32.xlu0 %v2474, 4
  %v2506 = vpop.permute.xlu0 %2505
  %2507 = vrot.lane.b32.xlu0 %v2477, 4
  %v2508 = vpop.permute.xlu0 %2507
  %vm2511 = vcmask 31744
  %v2512 = vsel %vm2511, %v2500, %v2506
  %v2513 = vsel %vm2511, %v2502, %v2508
  %v2514 = vld [vmem:[%s4 + $0x29] ss:$0 sm:$0xff]
  %v2515 = vmul.f32 %v2512, %v2514
  %v2516 = vmul.f32 %v2513, %v2514
  %2517 = vrot.lane.b32.xlu0 %v2474, 99
  %v2518 = vpop.permute.xlu0 %2517
  %2519 = vrot.lane.b32.xlu0 %v2477, 99
  %v2520 = vpop.permute.xlu0 %2519
  %2523 = vrot.lane.b32.xlu0 %v2474, 3
  %v2524 = vpop.permute.xlu0 %2523
  %2525 = vrot.lane.b32.xlu0 %v2477, 3
  %v2526 = vpop.permute.xlu0 %2525
  %vm2529 = vcmask 23552
  %v2530 = vsel %vm2529, %v2518, %v2524
  %v2531 = vsel %vm2529, %v2520, %v2526
  %v2532 = vld [vmem:[%s4 + $0x2a] ss:$0 sm:$0xff]
  %v2533 = vmul.f32 %v2530, %v2532
  %v2534 = vmul.f32 %v2531, %v2532
  %2535 = vrot.lane.b32.xlu0 %v2474, 97
  %v2536 = vpop.permute.xlu0 %2535
  %2537 = vrot.lane.b32.xlu0 %v2477, 97
  %v2538 = vpop.permute.xlu0 %2537
  %2541 = vrot.lane.b32.xlu0 %v2474, 1
  %v2542 = vpop.permute.xlu0 %2541
  %2543 = vrot.lane.b32.xlu0 %v2477, 1
  %v2544 = vpop.permute.xlu0 %2543
  %vm2547 = vcmask 7168
  %v2548 = vsel %vm2547, %v2536, %v2542
  %v2549 = vsel %vm2547, %v2538, %v2544
  %v2550 = vld [vmem:[%s4 + $0x2b] ss:$0 sm:$0xff]
  %v2551 = vmul.f32 %v2548, %v2550
  %v2552 = vmul.f32 %v2549, %v2550
  %2553 = vrot.lane.b32.xlu0 %v2474, 127
  %v2554 = vpop.permute.xlu0 %2553
  %2555 = vrot.lane.b32.xlu0 %v2477, 127
  %v2556 = vpop.permute.xlu0 %2555
  %2559 = vrot.lane.b32.xlu0 %v2474, 31
  %v2560 = vpop.permute.xlu0 %2559
  %2561 = vrot.lane.b32.xlu0 %v2477, 31
  %v2562 = vpop.permute.xlu0 %2561
  %vm2565 = vcmask 252928
  %v2566 = vsel %vm2565, %v2554, %v2560
  %v2567 = vsel %vm2565, %v2556, %v2562
  %v2568 = vld [vmem:[%s4 + $0x2d] ss:$0 sm:$0xff]
  %v2569 = vmul.f32 %v2566, %v2568
  %v2570 = vmul.f32 %v2567, %v2568
  %2571 = vrot.lane.b32.xlu0 %v2474, 125
  %v2572 = vpop.permute.xlu0 %2571
  %2573 = vrot.lane.b32.xlu0 %v2477, 125
  %v2574 = vpop.permute.xlu0 %2573
  %2577 = vrot.lane.b32.xlu0 %v2474, 29
  %v2578 = vpop.permute.xlu0 %2577
  %2579 = vrot.lane.b32.xlu0 %v2477, 29
  %v2580 = vpop.permute.xlu0 %2579
  %vm2583 = vcmask 236544
  %v2584 = vsel %vm2583, %v2572, %v2578
  %v2585 = vsel %vm2583, %v2574, %v2580
  %v2586 = vld [vmem:[%s4 + $0x2e] ss:$0 sm:$0xff]
  %v2587 = vmul.f32 %v2584, %v2586
  %v2588 = vmul.f32 %v2585, %v2586
  %2589 = vrot.lane.b32.xlu0 %v2474, 124
  %v2590 = vpop.permute.xlu0 %2589
  %2591 = vrot.lane.b32.xlu0 %v2477, 124
  %v2592 = vpop.permute.xlu0 %2591
  %2595 = vrot.lane.b32.xlu0 %v2474, 28
  %v2596 = vpop.permute.xlu0 %2595
  %2597 = vrot.lane.b32.xlu0 %v2477, 28
  %v2598 = vpop.permute.xlu0 %2597
  %vm2601 = vcmask 228352
  %v2602 = vsel %vm2601, %v2590, %v2596
  %v2603 = vsel %vm2601, %v2592, %v2598
  %v2604 = vld [vmem:[%s4 + $0x2f] ss:$0 sm:$0xff]
  %v2605 = vmul.f32 %v2602, %v2604
  %v2606 = vmul.f32 %v2603, %v2604
  %2607 = vrot.lane.b32.xlu0 %v2474, 123
  %v2608 = vpop.permute.xlu0 %2607
  %2609 = vrot.lane.b32.xlu0 %v2477, 123
  %v2610 = vpop.permute.xlu0 %2609
  %2613 = vrot.lane.b32.xlu0 %v2474, 27
  %v2614 = vpop.permute.xlu0 %2613
  %2615 = vrot.lane.b32.xlu0 %v2477, 27
  %v2616 = vpop.permute.xlu0 %2615
  %vm2619 = vcmask 220160
  %v2620 = vsel %vm2619, %v2608, %v2614
  %v2621 = vsel %vm2619, %v2610, %v2616
  %v2622 = vld [vmem:[%s4 + $0x58] ss:$0 sm:$0xff]
  %v2623 = vmul.f32 %v2620, %v2622
  %v2624 = vmul.f32 %v2621, %v2622
  %v2625 = vld [vmem:[%s1 + $0x180] sm:$0xff]
  %v2626 = vld [vmem:[%s1 + $0x188] sm:$0xff]
  %v2627 = vld [vmem:[%s1 + $0x198] sm:$0xff]
  %v2628 = vld [vmem:[%s1 + $0x1a0] sm:$0xff]
  %v2630 = vsel %vm740, %v2626, 0
  %v2633 = vsel %vm740, %v2628, 0
  %2635 = vmatpush.msra.mxu0 %v2606
  %2636 = vmatpush.msra.mxu0 %v2605
  %2637 = vmatpush.msra.mxu0 %v2588
  %2638 = vmatpush.msra.mxu0 %v2587
  %2639 = vmatpush.msra.mxu0 %v2570
  %2640 = vmatpush.msra.mxu0 %v2569
  %2641 = vmatpush.msra.mxu0 %v2477
  %2642 = vmatpush.msra.mxu0 %v2474
  %2643 = vmatpush.msra.mxu0 %v2552
  %2644 = vmatpush.msra.mxu0 %v2551
  %2645 = vmatpush.msra.mxu0 %v2534
  %2646 = vmatpush.msra.mxu0 %v2533
  %2647 = vmatpush.msra.mxu0 %v2516
  %2648 = vmatpush.msra.mxu0 %v2515
  %2649 = vmatpush.msra.mxu0 %v2498
  %2650 = vmatpush.msra.mxu0 %v2497
  %2651 = vmatmul.f32.gmra.mxu0 %v2625
  %v2652 = vpop.f32.mrf.mxu0
  %v2653 = vadd.f32 0.0, %v2652
  %2654 = vmatmul.f32.gmra.mxu0 %v2627
  %v2655 = vpop.f32.mrf.mxu0
  %v2656 = vadd.f32 0.0, %v2655
  %2657 = vdwg.mxu0
  %2658 = vmatpush.msra.mxu0 0.0
  %2659 = vmatpush.msra.mxu0 0.0
  %2660 = vmatpush.msra.mxu0 0.0
  %2661 = vmatpush.msra.mxu0 0.0
  %2662 = vmatpush.msra.mxu0 0.0
  %2663 = vmatpush.msra.mxu0 0.0
  %2664 = vmatpush.msra.mxu0 0.0
  %2665 = vmatpush.msra.mxu0 0.0
  %2666 = vmatpush.msra.mxu0 0.0
  %2667 = vmatpush.msra.mxu0 0.0
  %2668 = vmatpush.msra.mxu0 0.0
  %2669 = vmatpush.msra.mxu0 0.0
  %2670 = vmatpush.msra.mxu0 0.0
  %2671 = vmatpush.msra.mxu0 0.0
  %2672 = vmatpush.msra.mxu0 %v2624
  %2673 = vmatpush.msra.mxu0 %v2623
  %2674 = vmatmul.f32.gmra.mxu0 %v2630
  %v2675 = vpop.f32.mrf.mxu0
  %v2676 = vadd.f32 %v2653, %v2675
  %2677 = vmatmul.f32.gmra.mxu0 %v2633
  %v2678 = vpop.f32.mrf.mxu0
  %v2679 = vadd.f32 %v2656, %v2678
  %2680 = vdwg.mxu0
  %v2681 = vsel %vm1215, %v2676, 0.0
  %2682 = vadd.xlane.f32.xlu0 %v2681
  %v2683 = vpop.xlane.xlu0 %2682
  %v2684 = vsel %vm1215, %v2679, 0.0
  %2685 = vadd.xlane.f32.xlu0 %v2684
  %v2686 = vpop.xlane.xlu0 %2685
  %v2687 = vrcp.pop 32.0
  %v2688 = vmul.f32 32.0, %v2687
  %v2689 = vsub.f32 1.0, %v2688
  %v2690 = vmul.f32 %v2687, %v2689
  %v2691 = vadd.f32 %v2687, %v2690
  %vm2692 = vweird.f32 %v2687
  %v2693 = vsel %vm2692, %v2687, %v2691
  %v2694 = vmul.f32 %v2683, %v2693
  %v2695 = vmul.f32 %v2686, %v2693
  %v2696 = vsub.f32 %v2676, %v2694
  %v2697 = vsub.f32 %v2679, %v2695
  %v2698 = vmul.f32 %v2696, %v2696
  %v2699 = vmul.f32 %v2697, %v2697
  %v2700 = vsel %vm1215, %v2698, 0.0
  %2701 = vadd.xlane.f32.xlu0 %v2700
  %v2702 = vpop.xlane.xlu0 %2701
  %v2703 = vsel %vm1215, %v2699, 0.0
  %2704 = vadd.xlane.f32.xlu0 %v2703
  %v2705 = vpop.xlane.xlu0 %2704
  %v2706 = vmul.f32 %v2702, %v2693
  %v2707 = vmul.f32 %v2705, %v2693
  %v2708 = vadd.f32 %v2706, 1e-05
  %v2709 = vadd.f32 %v2707, 1e-05
  %v2710 = vrsqrt.pop %v2708
  %v2711 = vmul.f32 %v2710, %v2708
  %v2712 = vmul.f32 %v2711, %v2710
  %v2713 = vmul.f32 0.5, %v2712
  %v2714 = vsub.f32 1.5, %v2713
  %v2715 = vmul.f32 %v2710, %v2714
  %vm2716 = vweird.f32 %v2708
  %vm2717 = vweird.f32 %v2710
  %vm2718 = vmor %vm2716, %vm2717
  %v2719 = vsel %vm2718, %v2710, %v2715
  %v2720 = vrsqrt.pop %v2709
  %v2721 = vmul.f32 %v2720, %v2709
  %v2722 = vmul.f32 %v2721, %v2720
  %v2723 = vmul.f32 0.5, %v2722
  %v2724 = vsub.f32 1.5, %v2723
  %v2725 = vmul.f32 %v2720, %v2724
  %vm2726 = vweird.f32 %v2709
  %vm2727 = vweird.f32 %v2720
  %vm2728 = vmor %vm2726, %vm2727
  %v2729 = vsel %vm2728, %v2720, %v2725
  %v2730 = vmul.f32 %v2719, %v428
  %v2731 = vmul.f32 %v2729, %v429
  %2733 = vset.pattern.permute.xlu0 10
  %2734 = vperm.xlu0 %2733, %v2730
  %v2735 = vpop.permute.xlu0 %2734
  %2738 = vset.pattern.permute.xlu0 10
  %2739 = vperm.xlu0 %2738, %v2731
  %v2740 = vpop.permute.xlu0 %2739
  %v2742 = vmul.f32 %v2696, %v2735
  %v2743 = vmul.f32 %v2697, %v2740
  %2744 = vset.pattern.permute.xlu0 11
  %2745 = vperm.xlu0 %2744, %v428
  %v2746 = vpop.permute.xlu0 %2745
  %2748 = vset.pattern.permute.xlu0 11
  %2749 = vperm.xlu0 %2748, %v429
  %v2750 = vpop.permute.xlu0 %2749
  %v2752 = vadd.f32 %v2742, %v2746
  %v2753 = vadd.f32 %v2743, %v2750
  %v2754 = vmax.f32 %v2752, 0.0
  %v2755 = vmax.f32 %v2753, 0.0
  %2758 = vrot.lane.b32.xlu0 %v2754, 101
  %v2759 = vpop.permute.xlu0 %2758
  %2760 = vrot.lane.b32.xlu0 %v2755, 101
  %v2761 = vpop.permute.xlu0 %2760
  %2764 = vrot.lane.b32.xlu0 %v2754, 5
  %v2765 = vpop.permute.xlu0 %2764
  %2766 = vrot.lane.b32.xlu0 %v2755, 5
  %v2767 = vpop.permute.xlu0 %2766
  %v2770 = vsel %vm2493, %v2759, %v2765
  %v2771 = vsel %vm2493, %v2761, %v2767
  %v2772 = vmul.f32 %v2770, %v2496
  %v2773 = vmul.f32 %v2771, %v2496
  %2774 = vrot.lane.b32.xlu0 %v2754, 100
  %v2775 = vpop.permute.xlu0 %2774
  %2776 = vrot.lane.b32.xlu0 %v2755, 100
  %v2777 = vpop.permute.xlu0 %2776
  %2780 = vrot.lane.b32.xlu0 %v2754, 4
  %v2781 = vpop.permute.xlu0 %2780
  %2782 = vrot.lane.b32.xlu0 %v2755, 4
  %v2783 = vpop.permute.xlu0 %2782
  %v2786 = vsel %vm2511, %v2775, %v2781
  %v2787 = vsel %vm2511, %v2777, %v2783
  %v2788 = vmul.f32 %v2786, %v2514
  %v2789 = vmul.f32 %v2787, %v2514
  %2790 = vrot.lane.b32.xlu0 %v2754, 99
  %v2791 = vpop.permute.xlu0 %2790
  %2792 = vrot.lane.b32.xlu0 %v2755, 99
  %v2793 = vpop.permute.xlu0 %2792
  %2796 = vrot.lane.b32.xlu0 %v2754, 3
  %v2797 = vpop.permute.xlu0 %2796
  %2798 = vrot.lane.b32.xlu0 %v2755, 3
  %v2799 = vpop.permute.xlu0 %2798
  %v2802 = vsel %vm2529, %v2791, %v2797
  %v2803 = vsel %vm2529, %v2793, %v2799
  %v2804 = vmul.f32 %v2802, %v2532
  %v2805 = vmul.f32 %v2803, %v2532
  %2806 = vrot.lane.b32.xlu0 %v2754, 97
  %v2807 = vpop.permute.xlu0 %2806
  %2808 = vrot.lane.b32.xlu0 %v2755, 97
  %v2809 = vpop.permute.xlu0 %2808
  %2812 = vrot.lane.b32.xlu0 %v2754, 1
  %v2813 = vpop.permute.xlu0 %2812
  %2814 = vrot.lane.b32.xlu0 %v2755, 1
  %v2815 = vpop.permute.xlu0 %2814
  %v2818 = vsel %vm2547, %v2807, %v2813
  %v2819 = vsel %vm2547, %v2809, %v2815
  %v2820 = vmul.f32 %v2818, %v2550
  %v2821 = vmul.f32 %v2819, %v2550
  %2822 = vrot.lane.b32.xlu0 %v2754, 127
  %v2823 = vpop.permute.xlu0 %2822
  %2824 = vrot.lane.b32.xlu0 %v2755, 127
  %v2825 = vpop.permute.xlu0 %2824
  %2828 = vrot.lane.b32.xlu0 %v2754, 31
  %v2829 = vpop.permute.xlu0 %2828
  %2830 = vrot.lane.b32.xlu0 %v2755, 31
  %v2831 = vpop.permute.xlu0 %2830
  %v2834 = vsel %vm2565, %v2823, %v2829
  %v2835 = vsel %vm2565, %v2825, %v2831
  %v2836 = vmul.f32 %v2834, %v2568
  %v2837 = vmul.f32 %v2835, %v2568
  %2838 = vrot.lane.b32.xlu0 %v2754, 125
  %v2839 = vpop.permute.xlu0 %2838
  %2840 = vrot.lane.b32.xlu0 %v2755, 125
  %v2841 = vpop.permute.xlu0 %2840
  %2844 = vrot.lane.b32.xlu0 %v2754, 29
  %v2845 = vpop.permute.xlu0 %2844
  %2846 = vrot.lane.b32.xlu0 %v2755, 29
  %v2847 = vpop.permute.xlu0 %2846
  %v2850 = vsel %vm2583, %v2839, %v2845
  %v2851 = vsel %vm2583, %v2841, %v2847
  %v2852 = vmul.f32 %v2850, %v2586
  %v2853 = vmul.f32 %v2851, %v2586
  %2854 = vrot.lane.b32.xlu0 %v2754, 124
  %v2855 = vpop.permute.xlu0 %2854
  %2856 = vrot.lane.b32.xlu0 %v2755, 124
  %v2857 = vpop.permute.xlu0 %2856
  %2860 = vrot.lane.b32.xlu0 %v2754, 28
  %v2861 = vpop.permute.xlu0 %2860
  %2862 = vrot.lane.b32.xlu0 %v2755, 28
  %v2863 = vpop.permute.xlu0 %2862
  %v2866 = vsel %vm2601, %v2855, %v2861
  %v2867 = vsel %vm2601, %v2857, %v2863
  %v2868 = vmul.f32 %v2866, %v2604
  %v2869 = vmul.f32 %v2867, %v2604
  %2870 = vrot.lane.b32.xlu0 %v2754, 123
  %v2871 = vpop.permute.xlu0 %2870
  %2872 = vrot.lane.b32.xlu0 %v2755, 123
  %v2873 = vpop.permute.xlu0 %2872
  %2876 = vrot.lane.b32.xlu0 %v2754, 27
  %v2877 = vpop.permute.xlu0 %2876
  %2878 = vrot.lane.b32.xlu0 %v2755, 27
  %v2879 = vpop.permute.xlu0 %2878
  %v2882 = vsel %vm2619, %v2871, %v2877
  %v2883 = vsel %vm2619, %v2873, %v2879
  %v2884 = vmul.f32 %v2882, %v2622
  %v2885 = vmul.f32 %v2883, %v2622
  %v2886 = vld [vmem:[%s1 + $0x1b0] sm:$0xff]
  %v2887 = vld [vmem:[%s1 + $0x1b8] sm:$0xff]
  %v2888 = vld [vmem:[%s1 + $0x1c8] sm:$0xff]
  %v2889 = vld [vmem:[%s1 + $0x1d0] sm:$0xff]
  %v2890 = vld [vmem:[%s1 + $0x1e0] sm:$0xff]
  %v2891 = vld [vmem:[%s1 + $0x1e8] sm:$0xff]
  %v2892 = vld [vmem:[%s1 + $0x1f8] sm:$0xff]
  %v2893 = vld [vmem:[%s1 + $0x200] sm:$0xff]
  %v2895 = vsel %vm740, %v2887, 0
  %v2898 = vsel %vm740, %v2889, 0
  %v2901 = vsel %vm740, %v2891, 0
  %v2904 = vsel %vm740, %v2893, 0
  %2906 = vmatpush.msra.mxu0 %v2869
  %2907 = vmatpush.msra.mxu0 %v2868
  %2908 = vmatpush.msra.mxu0 %v2853
  %2909 = vmatpush.msra.mxu0 %v2852
  %2910 = vmatpush.msra.mxu0 %v2837
  %2911 = vmatpush.msra.mxu0 %v2836
  %2912 = vmatpush.msra.mxu0 %v2755
  %2913 = vmatpush.msra.mxu0 %v2754
  %2914 = vmatpush.msra.mxu0 %v2821
  %2915 = vmatpush.msra.mxu0 %v2820
  %2916 = vmatpush.msra.mxu0 %v2805
  %2917 = vmatpush.msra.mxu0 %v2804
  %2918 = vmatpush.msra.mxu0 %v2789
  %2919 = vmatpush.msra.mxu0 %v2788
  %2920 = vmatpush.msra.mxu0 %v2773
  %2921 = vmatpush.msra.mxu0 %v2772
  %2922 = vmatmul.f32.gmra.mxu0 %v2886
  %v2923 = vpop.f32.mrf.mxu0
  %v2924 = vadd.f32 0.0, %v2923
  %2925 = vmatmul.f32.gmra.mxu0 %v2888
  %v2926 = vpop.f32.mrf.mxu0
  %v2927 = vadd.f32 0.0, %v2926
  %2928 = vmatmul.f32.gmra.mxu0 %v2890
  %v2929 = vpop.f32.mrf.mxu0
  %v2930 = vadd.f32 0.0, %v2929
  %2931 = vmatmul.f32.gmra.mxu0 %v2892
  %v2932 = vpop.f32.mrf.mxu0
  %v2933 = vadd.f32 0.0, %v2932
  %2934 = vdwg.mxu0
  %2935 = vmatpush.msra.mxu0 0.0
  %2936 = vmatpush.msra.mxu0 0.0
  %2937 = vmatpush.msra.mxu0 0.0
  %2938 = vmatpush.msra.mxu0 0.0
  %2939 = vmatpush.msra.mxu0 0.0
  %2940 = vmatpush.msra.mxu0 0.0
  %2941 = vmatpush.msra.mxu0 0.0
  %2942 = vmatpush.msra.mxu0 0.0
  %2943 = vmatpush.msra.mxu0 0.0
  %2944 = vmatpush.msra.mxu0 0.0
  %2945 = vmatpush.msra.mxu0 0.0
  %2946 = vmatpush.msra.mxu0 0.0
  %2947 = vmatpush.msra.mxu0 0.0
  %2948 = vmatpush.msra.mxu0 0.0
  %2949 = vmatpush.msra.mxu0 %v2885
  %2950 = vmatpush.msra.mxu0 %v2884
  %2951 = vmatmul.f32.gmra.mxu0 %v2895
  %v2952 = vpop.f32.mrf.mxu0
  %v2953 = vadd.f32 %v2924, %v2952
  %2954 = vmatmul.f32.gmra.mxu0 %v2898
  %v2955 = vpop.f32.mrf.mxu0
  %v2956 = vadd.f32 %v2927, %v2955
  %2957 = vmatmul.f32.gmra.mxu0 %v2901
  %v2958 = vpop.f32.mrf.mxu0
  %v2959 = vadd.f32 %v2930, %v2958
  %2960 = vmatmul.f32.gmra.mxu0 %v2904
  %v2961 = vpop.f32.mrf.mxu0
  %v2962 = vadd.f32 %v2933, %v2961
  %2963 = vdwg.mxu0
  %v2964 = vsel %vm1215, %v2953, 0.0
  %2965 = vadd.xlane.f32.xlu0 %v2964
  %v2966 = vpop.xlane.xlu0 %2965
  %v2967 = vsel %vm1215, %v2956, 0.0
  %2968 = vadd.xlane.f32.xlu0 %v2967
  %v2969 = vpop.xlane.xlu0 %2968
  %v2970 = vsel %vm1215, %v2959, 0.0
  %2971 = vadd.xlane.f32.xlu0 %v2970
  %v2972 = vpop.xlane.xlu0 %2971
  %v2973 = vsel %vm1215, %v2962, 0.0
  %2974 = vadd.xlane.f32.xlu0 %v2973
  %v2975 = vpop.xlane.xlu0 %2974
  %v2976 = vmul.f32 %v2966, %v2693
  %v2977 = vmul.f32 %v2969, %v2693
  %v2978 = vmul.f32 %v2972, %v2693
  %v2979 = vmul.f32 %v2975, %v2693
  %v2980 = vsub.f32 %v2953, %v2976
  %v2981 = vsub.f32 %v2956, %v2977
  %v2982 = vsub.f32 %v2959, %v2978
  %v2983 = vsub.f32 %v2962, %v2979
  %v2984 = vmul.f32 %v2980, %v2980
  %v2985 = vmul.f32 %v2981, %v2981
  %v2986 = vmul.f32 %v2982, %v2982
  %v2987 = vmul.f32 %v2983, %v2983
  %v2988 = vsel %vm1215, %v2984, 0.0
  %2989 = vadd.xlane.f32.xlu0 %v2988
  %v2990 = vpop.xlane.xlu0 %2989
  %v2991 = vsel %vm1215, %v2985, 0.0
  %2992 = vadd.xlane.f32.xlu0 %v2991
  %v2993 = vpop.xlane.xlu0 %2992
  %v2994 = vsel %vm1215, %v2986, 0.0
  %2995 = vadd.xlane.f32.xlu0 %v2994
  %v2996 = vpop.xlane.xlu0 %2995
  %v2997 = vsel %vm1215, %v2987, 0.0
  %2998 = vadd.xlane.f32.xlu0 %v2997
  %v2999 = vpop.xlane.xlu0 %2998
  %v3000 = vmul.f32 %v2990, %v2693
  %v3001 = vmul.f32 %v2993, %v2693
  %v3002 = vmul.f32 %v2996, %v2693
  %v3003 = vmul.f32 %v2999, %v2693
  %v3004 = vadd.f32 %v3000, 1e-05
  %v3005 = vadd.f32 %v3001, 1e-05
  %v3006 = vadd.f32 %v3002, 1e-05
  %v3007 = vadd.f32 %v3003, 1e-05
  %v3008 = vrsqrt.pop %v3004
  %v3009 = vmul.f32 %v3008, %v3004
  %v3010 = vmul.f32 %v3009, %v3008
  %v3011 = vmul.f32 0.5, %v3010
  %v3012 = vsub.f32 1.5, %v3011
  %v3013 = vmul.f32 %v3008, %v3012
  %vm3014 = vweird.f32 %v3004
  %vm3015 = vweird.f32 %v3008
  %vm3016 = vmor %vm3014, %vm3015
  %v3017 = vsel %vm3016, %v3008, %v3013
  %v3018 = vrsqrt.pop %v3005
  %v3019 = vmul.f32 %v3018, %v3005
  %v3020 = vmul.f32 %v3019, %v3018
  %v3021 = vmul.f32 0.5, %v3020
  %v3022 = vsub.f32 1.5, %v3021
  %v3023 = vmul.f32 %v3018, %v3022
  %vm3024 = vweird.f32 %v3005
  %vm3025 = vweird.f32 %v3018
  %vm3026 = vmor %vm3024, %vm3025
  %v3027 = vsel %vm3026, %v3018, %v3023
  %v3028 = vrsqrt.pop %v3006
  %v3029 = vmul.f32 %v3028, %v3006
  %v3030 = vmul.f32 %v3029, %v3028
  %v3031 = vmul.f32 0.5, %v3030
  %v3032 = vsub.f32 1.5, %v3031
  %v3033 = vmul.f32 %v3028, %v3032
  %vm3034 = vweird.f32 %v3006
  %vm3035 = vweird.f32 %v3028
  %vm3036 = vmor %vm3034, %vm3035
  %v3037 = vsel %vm3036, %v3028, %v3033
  %v3038 = vrsqrt.pop %v3007
  %v3039 = vmul.f32 %v3038, %v3007
  %v3040 = vmul.f32 %v3039, %v3038
  %v3041 = vmul.f32 0.5, %v3040
  %v3042 = vsub.f32 1.5, %v3041
  %v3043 = vmul.f32 %v3038, %v3042
  %vm3044 = vweird.f32 %v3007
  %vm3045 = vweird.f32 %v3038
  %vm3046 = vmor %vm3044, %vm3045
  %v3047 = vsel %vm3046, %v3038, %v3043
  %v3048 = vmul.f32 %v3017, %v1109
  %v3049 = vmul.f32 %v3027, %v1110
  %v3050 = vmul.f32 %v3037, %v1111
  %v3051 = vmul.f32 %v3047, %v1112
  %3053 = vset.pattern.permute.xlu0 12
  %3054 = vperm.xlu0 %3053, %v3048
  %v3055 = vpop.permute.xlu0 %3054
  %3058 = vset.pattern.permute.xlu0 12
  %3059 = vperm.xlu0 %3058, %v3049
  %v3060 = vpop.permute.xlu0 %3059
  %3063 = vset.pattern.permute.xlu0 12
  %3064 = vperm.xlu0 %3063, %v3050
  %v3065 = vpop.permute.xlu0 %3064
  %3068 = vset.pattern.permute.xlu0 12
  %3069 = vperm.xlu0 %3068, %v3051
  %v3070 = vpop.permute.xlu0 %3069
  %v3072 = vmul.f32 %v2980, %v3055
  %v3073 = vmul.f32 %v2981, %v3060
  %v3074 = vmul.f32 %v2982, %v3065
  %v3075 = vmul.f32 %v2983, %v3070
  %3076 = vset.pattern.permute.xlu0 13
  %3077 = vperm.xlu0 %3076, %v1109
  %v3078 = vpop.permute.xlu0 %3077
  %3080 = vset.pattern.permute.xlu0 13
  %3081 = vperm.xlu0 %3080, %v1110
  %v3082 = vpop.permute.xlu0 %3081
  %3084 = vset.pattern.permute.xlu0 13
  %3085 = vperm.xlu0 %3084, %v1111
  %v3086 = vpop.permute.xlu0 %3085
  %3088 = vset.pattern.permute.xlu0 13
  %3089 = vperm.xlu0 %3088, %v1112
  %v3090 = vpop.permute.xlu0 %3089
  %v3092 = vadd.f32 %v3072, %v3078
  %v3093 = vadd.f32 %v3073, %v3082
  %v3094 = vadd.f32 %v3074, %v3086
  %v3095 = vadd.f32 %v3075, %v3090
  %v3096 = vmax.f32 %v3092, 0.0
  %v3097 = vmax.f32 %v3093, 0.0
  %v3098 = vmax.f32 %v3094, 0.0
  %v3099 = vmax.f32 %v3095, 0.0
  %3104 = vrot.lane.b32.xlu0 %v3096, 101
  %v3105 = vpop.permute.xlu0 %3104
  %3106 = vrot.lane.b32.xlu0 %v3097, 101
  %v3107 = vpop.permute.xlu0 %3106
  %3108 = vrot.lane.b32.xlu0 %v3098, 101
  %v3109 = vpop.permute.xlu0 %3108
  %3110 = vrot.lane.b32.xlu0 %v3099, 101
  %v3111 = vpop.permute.xlu0 %3110
  %3116 = vrot.lane.b32.xlu0 %v3096, 5
  %v3117 = vpop.permute.xlu0 %3116
  %3118 = vrot.lane.b32.xlu0 %v3097, 5
  %v3119 = vpop.permute.xlu0 %3118
  %3120 = vrot.lane.b32.xlu0 %v3098, 5
  %v3121 = vpop.permute.xlu0 %3120
  %3122 = vrot.lane.b32.xlu0 %v3099, 5
  %v3123 = vpop.permute.xlu0 %3122
  %v3128 = vsel %vm2493, %v3105, %v3117
  %v3129 = vsel %vm2493, %v3107, %v3119
  %v3130 = vsel %vm2493, %v3109, %v3121
  %v3131 = vsel %vm2493, %v3111, %v3123
  %v3132 = vmul.f32 %v3128, %v2496
  %v3133 = vmul.f32 %v3129, %v2496
  %v3134 = vmul.f32 %v3130, %v2496
  %v3135 = vmul.f32 %v3131, %v2496
  %3136 = vrot.lane.b32.xlu0 %v3096, 100
  %v3137 = vpop.permute.xlu0 %3136
  %3138 = vrot.lane.b32.xlu0 %v3097, 100
  %v3139 = vpop.permute.xlu0 %3138
  %3140 = vrot.lane.b32.xlu0 %v3098, 100
  %v3141 = vpop.permute.xlu0 %3140
  %3142 = vrot.lane.b32.xlu0 %v3099, 100
  %v3143 = vpop.permute.xlu0 %3142
  %3148 = vrot.lane.b32.xlu0 %v3096, 4
  %v3149 = vpop.permute.xlu0 %3148
  %3150 = vrot.lane.b32.xlu0 %v3097, 4
  %v3151 = vpop.permute.xlu0 %3150
  %3152 = vrot.lane.b32.xlu0 %v3098, 4
  %v3153 = vpop.permute.xlu0 %3152
  %3154 = vrot.lane.b32.xlu0 %v3099, 4
  %v3155 = vpop.permute.xlu0 %3154
  %v3160 = vsel %vm2511, %v3137, %v3149
  %v3161 = vsel %vm2511, %v3139, %v3151
  %v3162 = vsel %vm2511, %v3141, %v3153
  %v3163 = vsel %vm2511, %v3143, %v3155
  %v3164 = vmul.f32 %v3160, %v2514
  %v3165 = vmul.f32 %v3161, %v2514
  %v3166 = vmul.f32 %v3162, %v2514
  %v3167 = vmul.f32 %v3163, %v2514
  %3168 = vrot.lane.b32.xlu0 %v3096, 99
  %v3169 = vpop.permute.xlu0 %3168
  %3170 = vrot.lane.b32.xlu0 %v3097, 99
  %v3171 = vpop.permute.xlu0 %3170
  %3172 = vrot.lane.b32.xlu0 %v3098, 99
  %v3173 = vpop.permute.xlu0 %3172
  %3174 = vrot.lane.b32.xlu0 %v3099, 99
  %v3175 = vpop.permute.xlu0 %3174
  %3180 = vrot.lane.b32.xlu0 %v3096, 3
  %v3181 = vpop.permute.xlu0 %3180
  %3182 = vrot.lane.b32.xlu0 %v3097, 3
  %v3183 = vpop.permute.xlu0 %3182
  %3184 = vrot.lane.b32.xlu0 %v3098, 3
  %v3185 = vpop.permute.xlu0 %3184
  %3186 = vrot.lane.b32.xlu0 %v3099, 3
  %v3187 = vpop.permute.xlu0 %3186
  %v3192 = vsel %vm2529, %v3169, %v3181
  %v3193 = vsel %vm2529, %v3171, %v3183
  %v3194 = vsel %vm2529, %v3173, %v3185
  %v3195 = vsel %vm2529, %v3175, %v3187
  %v3196 = vmul.f32 %v3192, %v2532
  %v3197 = vmul.f32 %v3193, %v2532
  %v3198 = vmul.f32 %v3194, %v2532
  %v3199 = vmul.f32 %v3195, %v2532
  %3200 = vrot.lane.b32.xlu0 %v3096, 97
  %v3201 = vpop.permute.xlu0 %3200
  %3202 = vrot.lane.b32.xlu0 %v3097, 97
  %v3203 = vpop.permute.xlu0 %3202
  %3204 = vrot.lane.b32.xlu0 %v3098, 97
  %v3205 = vpop.permute.xlu0 %3204
  %3206 = vrot.lane.b32.xlu0 %v3099, 97
  %v3207 = vpop.permute.xlu0 %3206
  %3212 = vrot.lane.b32.xlu0 %v3096, 1
  %v3213 = vpop.permute.xlu0 %3212
  %3214 = vrot.lane.b32.xlu0 %v3097, 1
  %v3215 = vpop.permute.xlu0 %3214
  %3216 = vrot.lane.b32.xlu0 %v3098, 1
  %v3217 = vpop.permute.xlu0 %3216
  %3218 = vrot.lane.b32.xlu0 %v3099, 1
  %v3219 = vpop.permute.xlu0 %3218
  %v3224 = vsel %vm2547, %v3201, %v3213
  %v3225 = vsel %vm2547, %v3203, %v3215
  %v3226 = vsel %vm2547, %v3205, %v3217
  %v3227 = vsel %vm2547, %v3207, %v3219
  %v3228 = vmul.f32 %v3224, %v2550
  %v3229 = vmul.f32 %v3225, %v2550
  %v3230 = vmul.f32 %v3226, %v2550
  %v3231 = vmul.f32 %v3227, %v2550
  %3232 = vrot.lane.b32.xlu0 %v3096, 127
  %v3233 = vpop.permute.xlu0 %3232
  %3234 = vrot.lane.b32.xlu0 %v3097, 127
  %v3235 = vpop.permute.xlu0 %3234
  %3236 = vrot.lane.b32.xlu0 %v3098, 127
  %v3237 = vpop.permute.xlu0 %3236
  %3238 = vrot.lane.b32.xlu0 %v3099, 127
  %v3239 = vpop.permute.xlu0 %3238
  %3244 = vrot.lane.b32.xlu0 %v3096, 31
  %v3245 = vpop.permute.xlu0 %3244
  %3246 = vrot.lane.b32.xlu0 %v3097, 31
  %v3247 = vpop.permute.xlu0 %3246
  %3248 = vrot.lane.b32.xlu0 %v3098, 31
  %v3249 = vpop.permute.xlu0 %3248
  %3250 = vrot.lane.b32.xlu0 %v3099, 31
  %v3251 = vpop.permute.xlu0 %3250
  %v3256 = vsel %vm2565, %v3233, %v3245
  %v3257 = vsel %vm2565, %v3235, %v3247
  %v3258 = vsel %vm2565, %v3237, %v3249
  %v3259 = vsel %vm2565, %v3239, %v3251
  %v3260 = vmul.f32 %v3256, %v2568
  %v3261 = vmul.f32 %v3257, %v2568
  %v3262 = vmul.f32 %v3258, %v2568
  %v3263 = vmul.f32 %v3259, %v2568
  %3264 = vrot.lane.b32.xlu0 %v3096, 125
  %v3265 = vpop.permute.xlu0 %3264
  %3266 = vrot.lane.b32.xlu0 %v3097, 125
  %v3267 = vpop.permute.xlu0 %3266
  %3268 = vrot.lane.b32.xlu0 %v3098, 125
  %v3269 = vpop.permute.xlu0 %3268
  %3270 = vrot.lane.b32.xlu0 %v3099, 125
  %v3271 = vpop.permute.xlu0 %3270
  %3276 = vrot.lane.b32.xlu0 %v3096, 29
  %v3277 = vpop.permute.xlu0 %3276
  %3278 = vrot.lane.b32.xlu0 %v3097, 29
  %v3279 = vpop.permute.xlu0 %3278
  %3280 = vrot.lane.b32.xlu0 %v3098, 29
  %v3281 = vpop.permute.xlu0 %3280
  %3282 = vrot.lane.b32.xlu0 %v3099, 29
  %v3283 = vpop.permute.xlu0 %3282
  %v3288 = vsel %vm2583, %v3265, %v3277
  %v3289 = vsel %vm2583, %v3267, %v3279
  %v3290 = vsel %vm2583, %v3269, %v3281
  %v3291 = vsel %vm2583, %v3271, %v3283
  %v3292 = vmul.f32 %v3288, %v2586
  %v3293 = vmul.f32 %v3289, %v2586
  %v3294 = vmul.f32 %v3290, %v2586
  %v3295 = vmul.f32 %v3291, %v2586
  %3296 = vrot.lane.b32.xlu0 %v3096, 124
  %v3297 = vpop.permute.xlu0 %3296
  %3298 = vrot.lane.b32.xlu0 %v3097, 124
  %v3299 = vpop.permute.xlu0 %3298
  %3300 = vrot.lane.b32.xlu0 %v3098, 124
  %v3301 = vpop.permute.xlu0 %3300
  %3302 = vrot.lane.b32.xlu0 %v3099, 124
  %v3303 = vpop.permute.xlu0 %3302
  %3308 = vrot.lane.b32.xlu0 %v3096, 28
  %v3309 = vpop.permute.xlu0 %3308
  %3310 = vrot.lane.b32.xlu0 %v3097, 28
  %v3311 = vpop.permute.xlu0 %3310
  %3312 = vrot.lane.b32.xlu0 %v3098, 28
  %v3313 = vpop.permute.xlu0 %3312
  %3314 = vrot.lane.b32.xlu0 %v3099, 28
  %v3315 = vpop.permute.xlu0 %3314
  %v3320 = vsel %vm2601, %v3297, %v3309
  %v3321 = vsel %vm2601, %v3299, %v3311
  %v3322 = vsel %vm2601, %v3301, %v3313
  %v3323 = vsel %vm2601, %v3303, %v3315
  %v3324 = vmul.f32 %v3320, %v2604
  %v3325 = vmul.f32 %v3321, %v2604
  %v3326 = vmul.f32 %v3322, %v2604
  %v3327 = vmul.f32 %v3323, %v2604
  %3328 = vrot.lane.b32.xlu0 %v3096, 123
  %v3329 = vpop.permute.xlu0 %3328
  %3330 = vrot.lane.b32.xlu0 %v3097, 123
  %v3331 = vpop.permute.xlu0 %3330
  %3332 = vrot.lane.b32.xlu0 %v3098, 123
  %v3333 = vpop.permute.xlu0 %3332
  %3334 = vrot.lane.b32.xlu0 %v3099, 123
  %v3335 = vpop.permute.xlu0 %3334
  %3340 = vrot.lane.b32.xlu0 %v3096, 27
  %v3341 = vpop.permute.xlu0 %3340
  %3342 = vrot.lane.b32.xlu0 %v3097, 27
  %v3343 = vpop.permute.xlu0 %3342
  %3344 = vrot.lane.b32.xlu0 %v3098, 27
  %v3345 = vpop.permute.xlu0 %3344
  %3346 = vrot.lane.b32.xlu0 %v3099, 27
  %v3347 = vpop.permute.xlu0 %3346
  %v3352 = vsel %vm2619, %v3329, %v3341
  %v3353 = vsel %vm2619, %v3331, %v3343
  %v3354 = vsel %vm2619, %v3333, %v3345
  %v3355 = vsel %vm2619, %v3335, %v3347
  %v3356 = vmul.f32 %v3352, %v2622
  %v3357 = vmul.f32 %v3353, %v2622
  %v3358 = vmul.f32 %v3354, %v2622
  %v3359 = vmul.f32 %v3355, %v2622
  %v3360 = vld [vmem:[%s1 + $0x210] sm:$0xff]
  %v3361 = vld [vmem:[%s1 + $0x218] sm:$0xff]
  %v3362 = vld [vmem:[%s1 + $0x220] sm:$0xff]
  %v3363 = vld [vmem:[%s1 + $0x228] sm:$0xff]
  %v3364 = vld [vmem:[%s1 + $0x230] sm:$0xff]
  %v3365 = vld [vmem:[%s1 + $0x238] sm:$0xff]
  %v3366 = vld [vmem:[%s1 + $0x240] sm:$0xff]
  %v3367 = vld [vmem:[%s1 + $0x248] sm:$0xff]
  %v3368 = vld [vmem:[%s1 + $0x250] sm:$0xff]
  %v3369 = vld [vmem:[%s1 + $0x258] sm:$0xff]
  %v3370 = vld [vmem:[%s1 + $0x260] sm:$0xff]
  %v3371 = vld [vmem:[%s1 + $0x268] sm:$0xff]
  %v3372 = vld [vmem:[%s2 + $0x40] sm:$0xff]
  %v3373 = vld [vmem:[%s2 + $0x48] sm:$0xff]
  %v3374 = vld [vmem:[%s2 + $0x50] sm:$0xff]
  %v3375 = vld [vmem:[%s2 + $0x58] sm:$0xff]
  %v3377 = vsel %vm740, %v3372, 0
  %v3380 = vsel %vm740, %v3373, 0
  %v3383 = vsel %vm740, %v3374, 0
  %v3386 = vsel %vm740, %v3375, 0
  %3388 = vmatpush.msra.mxu0 0.0
  %3389 = vmatpush.msra.mxu0 0.0
  %3390 = vmatpush.msra.mxu0 0.0
  %3391 = vmatpush.msra.mxu0 0.0
  %3392 = vmatpush.msra.mxu0 0.0
  %3393 = vmatpush.msra.mxu0 0.0
  %3394 = vmatpush.msra.mxu0 0.0
  %3395 = vmatpush.msra.mxu0 0.0
  %3396 = vmatpush.msra.mxu0 0.0
  %3397 = vmatpush.msra.mxu0 0.0
  %3398 = vmatpush.msra.mxu0 0.0
  %3399 = vmatpush.msra.mxu0 0.0
  %3400 = vmatpush.msra.mxu0 0.0
  %3401 = vmatpush.msra.mxu0 0.0
  %3402 = vmatpush.msra.mxu0 %v2477
  %3403 = vmatpush.msra.mxu0 %v2474
  %3404 = vmatmul.f32.gmra.mxu0 %v3377
  %v3405 = vpop.f32.mrf.mxu0
  %v3406 = vadd.f32 0.0, %v3405
  %3407 = vmatmul.f32.gmra.mxu0 %v3380
  %v3408 = vpop.f32.mrf.mxu0
  %v3409 = vadd.f32 0.0, %v3408
  %3410 = vmatmul.f32.gmra.mxu0 %v3383
  %v3411 = vpop.f32.mrf.mxu0
  %v3412 = vadd.f32 0.0, %v3411
  %3413 = vmatmul.f32.gmra.mxu0 %v3386
  %v3414 = vpop.f32.mrf.mxu0
  %v3415 = vadd.f32 0.0, %v3414
  %3416 = vdwg.mxu0
  %v3418 = vsel %vm1215, %v3362, 0
  %v3421 = vsel %vm1215, %v3365, 0
  %v3424 = vsel %vm1215, %v3368, 0
  %v3427 = vsel %vm1215, %v3371, 0
  %3429 = vmatpush.msra.mxu0 %v3231
  %3430 = vmatpush.msra.mxu0 %v3230
  %3431 = vmatpush.msra.mxu0 %v3229
  %3432 = vmatpush.msra.mxu0 %v3228
  %3433 = vmatpush.msra.mxu0 %v3199
  %3434 = vmatpush.msra.mxu0 %v3198
  %3435 = vmatpush.msra.mxu0 %v3197
  %3436 = vmatpush.msra.mxu0 %v3196
  %3437 = vmatpush.msra.mxu0 %v3167
  %3438 = vmatpush.msra.mxu0 %v3166
  %3439 = vmatpush.msra.mxu0 %v3165
  %3440 = vmatpush.msra.mxu0 %v3164
  %3441 = vmatpush.msra.mxu0 %v3135
  %3442 = vmatpush.msra.mxu0 %v3134
  %3443 = vmatpush.msra.mxu0 %v3133
  %3444 = vmatpush.msra.mxu0 %v3132
  %3445 = vmatmul.f32.gmra.mxu0 %v3360
  %v3446 = vpop.f32.mrf.mxu0
  %v3447 = vadd.f32 %v3406, %v3446
  %3448 = vmatmul.f32.gmra.mxu0 %v3363
  %v3449 = vpop.f32.mrf.mxu0
  %v3450 = vadd.f32 %v3409, %v3449
  %3451 = vmatmul.f32.gmra.mxu0 %v3366
  %v3452 = vpop.f32.mrf.mxu0
  %v3453 = vadd.f32 %v3412, %v3452
  %3454 = vmatmul.f32.gmra.mxu0 %v3369
  %v3455 = vpop.f32.mrf.mxu0
  %v3456 = vadd.f32 %v3415, %v3455
  %3457 = vdwg.mxu0
  %3458 = vmatpush.msra.mxu0 %v3327
  %3459 = vmatpush.msra.mxu0 %v3326
  %3460 = vmatpush.msra.mxu0 %v3325
  %3461 = vmatpush.msra.mxu0 %v3324
  %3462 = vmatpush.msra.mxu0 %v3295
  %3463 = vmatpush.msra.mxu0 %v3294
  %3464 = vmatpush.msra.mxu0 %v3293
  %3465 = vmatpush.msra.mxu0 %v3292
  %3466 = vmatpush.msra.mxu0 %v3263
  %3467 = vmatpush.msra.mxu0 %v3262
  %3468 = vmatpush.msra.mxu0 %v3261
  %3469 = vmatpush.msra.mxu0 %v3260
  %3470 = vmatpush.msra.mxu0 %v3099
  %3471 = vmatpush.msra.mxu0 %v3098
  %3472 = vmatpush.msra.mxu0 %v3097
  %3473 = vmatpush.msra.mxu0 %v3096
  %3474 = vmatmul.f32.gmra.mxu0 %v3361
  %v3475 = vpop.f32.mrf.mxu0
  %v3476 = vadd.f32 %v3447, %v3475
  %3477 = vmatmul.f32.gmra.mxu0 %v3364
  %v3478 = vpop.f32.mrf.mxu0
  %v3479 = vadd.f32 %v3450, %v3478
  %3480 = vmatmul.f32.gmra.mxu0 %v3367
  %v3481 = vpop.f32.mrf.mxu0
  %v3482 = vadd.f32 %v3453, %v3481
  %3483 = vmatmul.f32.gmra.mxu0 %v3370
  %v3484 = vpop.f32.mrf.mxu0
  %v3485 = vadd.f32 %v3456, %v3484
  %3486 = vdwg.mxu0
  %3487 = vmatpush.msra.mxu0 0.0
  %3488 = vmatpush.msra.mxu0 0.0
  %3489 = vmatpush.msra.mxu0 0.0
  %3490 = vmatpush.msra.mxu0 0.0
  %3491 = vmatpush.msra.mxu0 0.0
  %3492 = vmatpush.msra.mxu0 0.0
  %3493 = vmatpush.msra.mxu0 0.0
  %3494 = vmatpush.msra.mxu0 0.0
  %3495 = vmatpush.msra.mxu0 0.0
  %3496 = vmatpush.msra.mxu0 0.0
  %3497 = vmatpush.msra.mxu0 0.0
  %3498 = vmatpush.msra.mxu0 0.0
  %3499 = vmatpush.msra.mxu0 %v3359
  %3500 = vmatpush.msra.mxu0 %v3358
  %3501 = vmatpush.msra.mxu0 %v3357
  %3502 = vmatpush.msra.mxu0 %v3356
  %3503 = vmatmul.f32.gmra.mxu0 %v3418
  %v3504 = vpop.f32.mrf.mxu0
  %v3505 = vadd.f32 %v3476, %v3504
  %3506 = vmatmul.f32.gmra.mxu0 %v3421
  %v3507 = vpop.f32.mrf.mxu0
  %v3508 = vadd.f32 %v3479, %v3507
  %3509 = vmatmul.f32.gmra.mxu0 %v3424
  %v3510 = vpop.f32.mrf.mxu0
  %v3511 = vadd.f32 %v3482, %v3510
  %3512 = vmatmul.f32.gmra.mxu0 %v3427
  %v3513 = vpop.f32.mrf.mxu0
  %v3514 = vadd.f32 %v3485, %v3513
  %3515 = vdwg.mxu0
  %v3516 = vsel %vm1215, %v3505, 0.0
  %3517 = vadd.xlane.f32.xlu0 %v3516
  %v3518 = vpop.xlane.xlu0 %3517
  %v3519 = vsel %vm1215, %v3508, 0.0
  %3520 = vadd.xlane.f32.xlu0 %v3519
  %v3521 = vpop.xlane.xlu0 %3520
  %v3522 = vsel %vm1215, %v3511, 0.0
  %3523 = vadd.xlane.f32.xlu0 %v3522
  %v3524 = vpop.xlane.xlu0 %3523
  %v3525 = vsel %vm1215, %v3514, 0.0
  %3526 = vadd.xlane.f32.xlu0 %v3525
  %v3527 = vpop.xlane.xlu0 %3526
  %v3528 = vmul.f32 %v3518, %v2693
  %v3529 = vmul.f32 %v3521, %v2693
  %v3530 = vmul.f32 %v3524, %v2693
  %v3531 = vmul.f32 %v3527, %v2693
  %v3532 = vsub.f32 %v3505, %v3528
  %v3533 = vsub.f32 %v3508, %v3529
  %v3534 = vsub.f32 %v3511, %v3530
  %v3535 = vsub.f32 %v3514, %v3531
  %v3536 = vmul.f32 %v3532, %v3532
  %v3537 = vmul.f32 %v3533, %v3533
  %v3538 = vmul.f32 %v3534, %v3534
  %v3539 = vmul.f32 %v3535, %v3535
  %v3540 = vsel %vm1215, %v3536, 0.0
  %3541 = vadd.xlane.f32.xlu0 %v3540
  %v3542 = vpop.xlane.xlu0 %3541
  %v3543 = vsel %vm1215, %v3537, 0.0
  %3544 = vadd.xlane.f32.xlu0 %v3543
  %v3545 = vpop.xlane.xlu0 %3544
  %v3546 = vsel %vm1215, %v3538, 0.0
  %3547 = vadd.xlane.f32.xlu0 %v3546
  %v3548 = vpop.xlane.xlu0 %3547
  %v3549 = vsel %vm1215, %v3539, 0.0
  %3550 = vadd.xlane.f32.xlu0 %v3549
  %v3551 = vpop.xlane.xlu0 %3550
  %v3552 = vmul.f32 %v3542, %v2693
  %v3553 = vmul.f32 %v3545, %v2693
  %v3554 = vmul.f32 %v3548, %v2693
  %v3555 = vmul.f32 %v3551, %v2693
  %v3556 = vadd.f32 %v3552, 1e-05
  %v3557 = vadd.f32 %v3553, 1e-05
  %v3558 = vadd.f32 %v3554, 1e-05
  %v3559 = vadd.f32 %v3555, 1e-05
  %v3560 = vrsqrt.pop %v3556
  %v3561 = vmul.f32 %v3560, %v3556
  %v3562 = vmul.f32 %v3561, %v3560
  %v3563 = vmul.f32 0.5, %v3562
  %v3564 = vsub.f32 1.5, %v3563
  %v3565 = vmul.f32 %v3560, %v3564
  %vm3566 = vweird.f32 %v3556
  %vm3567 = vweird.f32 %v3560
  %vm3568 = vmor %vm3566, %vm3567
  %v3569 = vsel %vm3568, %v3560, %v3565
  %v3570 = vrsqrt.pop %v3557
  %v3571 = vmul.f32 %v3570, %v3557
  %v3572 = vmul.f32 %v3571, %v3570
  %v3573 = vmul.f32 0.5, %v3572
  %v3574 = vsub.f32 1.5, %v3573
  %v3575 = vmul.f32 %v3570, %v3574
  %vm3576 = vweird.f32 %v3557
  %vm3577 = vweird.f32 %v3570
  %vm3578 = vmor %vm3576, %vm3577
  %v3579 = vsel %vm3578, %v3570, %v3575
  %v3580 = vrsqrt.pop %v3558
  %v3581 = vmul.f32 %v3580, %v3558
  %v3582 = vmul.f32 %v3581, %v3580
  %v3583 = vmul.f32 0.5, %v3582
  %v3584 = vsub.f32 1.5, %v3583
  %v3585 = vmul.f32 %v3580, %v3584
  %vm3586 = vweird.f32 %v3558
  %vm3587 = vweird.f32 %v3580
  %vm3588 = vmor %vm3586, %vm3587
  %v3589 = vsel %vm3588, %v3580, %v3585
  %v3590 = vrsqrt.pop %v3559
  %v3591 = vmul.f32 %v3590, %v3559
  %v3592 = vmul.f32 %v3591, %v3590
  %v3593 = vmul.f32 0.5, %v3592
  %v3594 = vsub.f32 1.5, %v3593
  %v3595 = vmul.f32 %v3590, %v3594
  %vm3596 = vweird.f32 %v3559
  %vm3597 = vweird.f32 %v3590
  %vm3598 = vmor %vm3596, %vm3597
  %v3599 = vsel %vm3598, %v3590, %v3595
  %v3600 = vmul.f32 %v3569, %v1109
  %v3601 = vmul.f32 %v3579, %v1110
  %v3602 = vmul.f32 %v3589, %v1111
  %v3603 = vmul.f32 %v3599, %v1112
  %3605 = vset.pattern.permute.xlu0 14
  %3606 = vperm.xlu0 %3605, %v3600
  %v3607 = vpop.permute.xlu0 %3606
  %3610 = vset.pattern.permute.xlu0 14
  %3611 = vperm.xlu0 %3610, %v3601
  %v3612 = vpop.permute.xlu0 %3611
  %3615 = vset.pattern.permute.xlu0 14
  %3616 = vperm.xlu0 %3615, %v3602
  %v3617 = vpop.permute.xlu0 %3616
  %3620 = vset.pattern.permute.xlu0 14
  %3621 = vperm.xlu0 %3620, %v3603
  %v3622 = vpop.permute.xlu0 %3621
  %v3624 = vmul.f32 %v3532, %v3607
  %v3625 = vmul.f32 %v3533, %v3612
  %v3626 = vmul.f32 %v3534, %v3617
  %v3627 = vmul.f32 %v3535, %v3622
  %3628 = vset.pattern.permute.xlu0 15
  %3629 = vperm.xlu0 %3628, %v1109
  %v3630 = vpop.permute.xlu0 %3629
  %3632 = vset.pattern.permute.xlu0 15
  %3633 = vperm.xlu0 %3632, %v1110
  %v3634 = vpop.permute.xlu0 %3633
  %3636 = vset.pattern.permute.xlu0 15
  %3637 = vperm.xlu0 %3636, %v1111
  %v3638 = vpop.permute.xlu0 %3637
  %3640 = vset.pattern.permute.xlu0 15
  %3641 = vperm.xlu0 %3640, %v1112
  %v3642 = vpop.permute.xlu0 %3641
  %v3644 = vadd.f32 %v3624, %v3630
  %v3645 = vadd.f32 %v3625, %v3634
  %v3646 = vadd.f32 %v3626, %v3638
  %v3647 = vadd.f32 %v3627, %v3642
  %v3648 = vmax.f32 %v3644, 0.0
  %v3649 = vmax.f32 %v3645, 0.0
  %v3650 = vmax.f32 %v3646, 0.0
  %v3651 = vmax.f32 %v3647, 0.0
  %v3652 = vld [vmem:[%s7] sm:$0xff]
  %v3653 = vld [vmem:[%s7 + $0x8] sm:$0xff]
  %v3654 = vld [vmem:[%s7 + $0x10] sm:$0xff]
  %v3655 = vld [vmem:[%s7 + $0x18] sm:$0xff]
  %v3657 = vsel %vm1215, %v3648, 0
  %v3660 = vsel %vm1215, %v3649, 0
  %v3663 = vsel %vm1215, %v3650, 0
  %v3666 = vsel %vm1215, %v3651, 0
  %3668 = vmatpush.msra.mxu0 0.0
  %3669 = vmatpush.msra.mxu0 0.0
  %3670 = vmatpush.msra.mxu0 0.0
  %3671 = vmatpush.msra.mxu0 0.0
  %3672 = vmatpush.msra.mxu0 0.0
  %3673 = vmatpush.msra.mxu0 0.0
  %3674 = vmatpush.msra.mxu0 0.0
  %3675 = vmatpush.msra.mxu0 0.0
  %3676 = vmatpush.msra.mxu0 0.0
  %3677 = vmatpush.msra.mxu0 0.0
  %3678 = vmatpush.msra.mxu0 0.0
  %3679 = vmatpush.msra.mxu0 0.0
  %3680 = vmatpush.msra.mxu0 %v3655
  %3681 = vmatpush.msra.mxu0 %v3654
  %3682 = vmatpush.msra.mxu0 %v3653
  %3683 = vmatpush.msra.mxu0 %v3652
  %3684 = vmatmul.f32.gmra.mxu0 %v3657
  %v3685 = vpop.f32.mrf.mxu0
  %v3686 = vadd.f32 0.0, %v3685
  %3687 = vmatmul.f32.gmra.mxu0 %v3660
  %v3688 = vpop.f32.mrf.mxu0
  %v3689 = vadd.f32 0.0, %v3688
  %3690 = vmatmul.f32.gmra.mxu0 %v3663
  %v3691 = vpop.f32.mrf.mxu0
  %v3692 = vadd.f32 0.0, %v3691
  %3693 = vmatmul.f32.gmra.mxu0 %v3666
  %v3694 = vpop.f32.mrf.mxu0
  %v3695 = vadd.f32 0.0, %v3694
  %3696 = vdwg.mxu0
  %v3697 = vld [vmem:[%s2 + $0x60] sm:$0xff]
  %v3698 = vld [vmem:[%s2 + $0x68] sm:$0x3]
  %v3699 = vld [vmem:[%s3] sm:$0xff]
  %v3700 = vld [vmem:[%s3 + $0x8] sm:$0x3]
  %3702 = vset.pattern.permute.xlu0 18
  %3703 = vperm.xlu0 %3702, %v3699
  %v3704 = vpop.permute.xlu0 %3703
  %3707 = vset.pattern.permute.xlu0 18
  %3708 = vperm.xlu0 %3707, %v3700
  %v3709 = vpop.permute.xlu0 %3708
  %v3712 = vsel %vm1215, %v3697, 0
  %v3715 = vsel %vm1215, %v3698, 0
  %3717 = vmatpush.msra.mxu0 0.0
  %3718 = vmatpush.msra.mxu0 0.0
  %3719 = vmatpush.msra.mxu0 0.0
  %3720 = vmatpush.msra.mxu0 0.0
  %3721 = vmatpush.msra.mxu0 0.0
  %3722 = vmatpush.msra.mxu0 0.0
  %3723 = vmatpush.msra.mxu0 0.0
  %3724 = vmatpush.msra.mxu0 0.0
  %3725 = vmatpush.msra.mxu0 0.0
  %3726 = vmatpush.msra.mxu0 0.0
  %3727 = vmatpush.msra.mxu0 0.0
  %3728 = vmatpush.msra.mxu0 0.0
  %3729 = vmatpush.msra.mxu0 %v3695
  %3730 = vmatpush.msra.mxu0 %v3692
  %3731 = vmatpush.msra.mxu0 %v3689
  %3732 = vmatpush.msra.mxu0 %v3686
  %3733 = vmatmul.f32.gmra.mxu0 %v3712
  %v3734 = vpop.f32.mrf.mxu0
  %v3735 = vadd.f32 %v3704, %v3734
  %3736 = vmatmul.f32.gmra.mxu0 %v3715
  %v3737 = vpop.f32.mrf.mxu0
  %v3738 = vadd.f32 %v3709, %v3737
  %3739 = vdwg.mxu0
  %vm3740 = vcmask 15360
  %v3741 = vsel %vm3740, %v3735, -inf
  %vm3742 = vcmask 9216
  %v3743 = vsel %vm3742, %v3738, -inf
  %v3744 = vmax.f32 %v3741, %v3743
  %v3745 = vrot.slane %v3744, 4
  %v3746 = vmax.f32 %v3744, %v3745
  %v3747 = vrot.slane %v3746, 2
  %v3748 = vmax.f32 %v3746, %v3747
  %v3749 = vrot.slane %v3748, 1
  %v3750 = vmax.f32 %v3748, %v3749
  %v3751 = vsub.f32 %v3735, %v3750
  %v3752 = vsub.f32 %v3738, %v3750
  %v3753 = vmul.f32 %v3751, 1.442695
  %v3754 = vpow.pop %v3753
  %v3755 = vmul.f32 %v3752, 1.442695
  %v3756 = vpow.pop %v3755
  %v3757 = vsel %vm3740, %v3754, 0.0
  %v3758 = vsel %vm3742, %v3756, 0.0
  %v3759 = vadd.f32 %v3757, %v3758
  %v3760 = vrot.slane %v3759, 4
  %v3761 = vadd.f32 %v3759, %v3760
  %v3762 = vrot.slane %v3761, 2
  %v3763 = vadd.f32 %v3761, %v3762
  %v3764 = vrot.slane %v3763, 1
  %v3765 = vadd.f32 %v3763, %v3764
  %v3766 = vlog2.pop %v3765
  %v3767 = vmul.f32 %v3766, 0.6931472
  %v3768 = vadd.f32 %v3767, %v3750
  %v3769 = vsub.f32 %v3735, %v3768
  %v3770 = vsub.f32 %v3738, %v3768
  %3771 = vst.msk [vmem:[%s8] sm:$0xff] %vm3740, %v3769
  %3772 = vst.msk [vmem:[%s8 + $0x8] sm:$0x3] %vm3742, %v3770
  // Predicated region
  $region34: #{net1_forward.1} parent=0 // pred_check
    _
  $region35: #{net1_forward.1} parent=0 // pred_check_branch
    %3774 = sbr.rel (0) target = $region37
  $region36: #{net1_forward.1} parent=0 // pred_region
    _
  $region37: #{net1_forward.1} parent=0 // pred_fallthru
    _
  // Predicated region
  $region38: #{net1_forward.1} parent=0 // pred_check
    _
  $region39: #{net1_forward.1} parent=0 // pred_check_branch
    %3776 = sbr.rel (0) target = $region41
  $region40: #{net1_forward.1} parent=0 // pred_region
    _
  $region41: #{net1_forward.1} parent=0 // pred_fallthru
    _

</llo_original>
